<compile_context>
chip_gen: v7x
topology: tpu7x:2x2x1
jax: 0.10.0
libtpu: 0.0.40
codegen_flags: <defaults>
</compile_context>

<pallas_src>
import math
from functools import partial

import jax
import jax.numpy as jnp
from jax.experimental import pallas as pl
from jax.experimental.pallas import tpu as pltpu


_SQRT_HALF = 1.0 / math.sqrt(2.0)
_LANE = 128


def _erf_approx(x):
    # TODO(synk): lax.erf has no reliable Mosaic lowering; use Abramowitz-Stegun
    # 7.1.26 polynomial (max abs err ~1.5e-7 ~ f32 eps) for the exact-GELU erf.
    p = 0.3275911
    a1, a2, a3, a4, a5 = (0.254829592, -0.284496736, 1.421413741,
                          -1.453152027, 1.061405429)
    sign = jnp.where(x >= 0.0, 1.0, -1.0)
    ax = jnp.abs(x)
    t = 1.0 / (1.0 + p * ax)
    poly = ((((a5 * t + a4) * t + a3) * t + a2) * t + a1) * t
    return sign * (1.0 - poly * jnp.exp(-ax * ax))


def _gelu_exact(x):
    # nn.GELU() default (erf-based) semantics.
    return 0.5 * x * (1.0 + _erf_approx(x * _SQRT_HALF))


def _fan_combine(p, g, a, c):
    # FANLayer output: [a*cos(p), a*sin(p), c*gelu(g)]
    return jnp.concatenate(
        [a * jnp.cos(p), a * jnp.sin(p), c * _gelu_exact(g)], axis=-1)


# ------------------------------ configuration ------------------------------

def fan_dims(d_out):
    # NOTE: concat width == d_out only when d_out % 4 == 0 (matches module use).
    assert d_out % 4 == 0, "FAN output width must be divisible by 4"
    return d_out // 4, d_out - d_out // 2


def make_cfg(d_model, num_head, d_embed, d_c, d_c1, d_rotate, lane=_LANE):
    assert d_model % num_head == 0, "d_model must be divisible by num_head"
    assert d_rotate % 2 == 0, "d_rotate must be even (rotary pairs)"
    assert d_c < d_embed and d_c1 < d_embed
    d_head = d_model // num_head
    hd2 = d_rotate // 2
    cfg = dict(
        d_model=d_model, num_head=num_head, d_embed=d_embed,
        d_c=d_c, d_c1=d_c1, d_rotate=d_rotate, d_head=d_head, hd2=hd2,
        scale=1.0 / math.sqrt(d_head + d_rotate), lane=lane,
    )
    cfg["dq_p"], cfg["dq_g"] = fan_dims(d_c1)
    cfg["dkv_p"], cfg["dkv_g"] = fan_dims(d_c)
    cfg["uq_p"], cfg["uq_g"] = fan_dims(d_model)
    cfg["uk_p"], cfg["uk_g"] = fan_dims(d_model)
    cfg["uv_p"], cfg["uv_g"] = fan_dims(d_model)
    cfg["out_p"], cfg["out_g"] = fan_dims(d_model)

    def seg_layout(widths):
        # Start offset of every segment is rounded up to a lane (128) multiple
        # so the post-matmul column slices in the kernel are lane-aligned.
        offs, off = [], 0
        for w in widths:
            offs.append(off)
            off += -(-w // lane) * lane
        return tuple(offs), off

    H = num_head
    cfg["x_offs"], cfg["x_width"] = seg_layout(
        [cfg["dq_p"], cfg["dq_g"], cfg["dkv_p"], cfg["dkv_g"], hd2, hd2])
    cfg["q_offs"], cfg["q_width"] = seg_layout(
        [cfg["uq_p"], cfg["uq_g"], H * hd2, H * hd2])
    cfg["kv_offs"], cfg["kv_width"] = seg_layout(
        [cfg["uk_p"], cfg["uk_g"], cfg["uv_p"], cfg["uv_g"]])
    cfg["o_offs"], cfg["o_width"] = seg_layout([cfg["out_p"], cfg["out_g"]])
    return cfg


# --------------------------- fused forward kernel ---------------------------

def mla_fused_kernel(gates_ref, x_ref, wx_ref, bx_ref, wq_ref, bq_ref,
                     wkv_ref, bkv_ref, wo_ref, bo_ref, cos_ref, sin_ref,
                     o_ref, att_acc, *, cfg, b_tile, seq_len):
    H, dh, hd2 = cfg["num_head"], cfg["d_head"], cfg["hd2"]
    d_model = cfg["d_model"]
    S = seq_len
    R = b_tile * S
    bf16 = jnp.bfloat16

    # ---- flatten the batch tile so every projection matmul sees R MXU rows
    x = x_ref[...].reshape(R, cfg["d_embed"])                      # bf16

    # ---- fused x projections: DQ_p | DQ_g | DKV_p | DKV_g | RK_even | RK_odd
    #      (bf16 operands, f32 accumulate; lane-aligned segment offsets)
    hx = jnp.dot(x, wx_ref[...], preferred_element_type=jnp.float32) + bx_ref[...]
    xo = cfg["x_offs"]
    p_dq = hx[:, xo[0]:xo[0] + cfg["dq_p"]]
    g_dq = hx[:, xo[1]:xo[1] + cfg["dq_g"]]
    p_dkv = hx[:, xo[2]:xo[2] + cfg["dkv_p"]]
    g_dkv = hx[:, xo[3]:xo[3] + cfg["dkv_g"]]
    k_e = hx[:, xo[4]:xo[4] + hd2]
    k_o = hx[:, xo[5]:xo[5] + hd2]

    c_q = _fan_combine(p_dq, g_dq, gates_ref[0], gates_ref[1])     # [R, d_c1]
    c_kv = _fan_combine(p_dkv, g_dkv, gates_ref[2], gates_ref[3])  # [R, d_c]

    # ---- fused c_q projections: UQ_p | UQ_g | RQ_even | RQ_odd (scale folded)
    hq = jnp.dot(c_q.astype(bf16), wq_ref[...],
                 preferred_element_type=jnp.float32) + bq_ref[...]
    qoff = cfg["q_offs"]
    p_uq = hq[:, qoff[0]:qoff[0] + cfg["uq_p"]]
    g_uq = hq[:, qoff[1]:qoff[1] + cfg["uq_g"]]
    q_e = hq[:, qoff[2]:qoff[2] + H * hd2]
    q_o = hq[:, qoff[3]:qoff[3] + H * hd2]
    # gates[4:6] already include the attention scale
    q_state = _fan_combine(p_uq, g_uq, gates_ref[4], gates_ref[5])  # [R, d_model]

    # ---- fused c_kv projections: UK_p | UK_g | UV_p | UV_g
    hkv = jnp.dot(c_kv.astype(bf16), wkv_ref[...],
                  preferred_element_type=jnp.float32) + bkv_ref[...]
    koff = cfg["kv_offs"]
    p_uk = hkv[:, koff[0]:koff[0] + cfg["uk_p"]]
    g_uk = hkv[:, koff[1]:koff[1] + cfg["uk_g"]]
    p_uv = hkv[:, koff[2]:koff[2] + cfg["uv_p"]]
    g_uv = hkv[:, koff[3]:koff[3] + cfg["uv_g"]]
    k_state = _fan_combine(p_uk, g_uk, gates_ref[6], gates_ref[7])
    v_state = _fan_combine(p_uv, g_uv, gates_ref[8], gates_ref[9])

    cos = cos_ref[...]                        # [S, d_rotate/2] (not head-tiled)
    sin = sin_ref[...]

    # ---- attention (att_mask=None; eval-mode dropout = identity).
    #      Per batch element of the tile, per head: a single MXU dot of depth
    #      d_head + d_rotate; head outputs land in VMEM scratch lane slices.
    # TODO(synk): for large H / long S, replace the unrolled loops with a
    # flash-style online-softmax over kv tiles + a q-row grid axis (bounds
    # VMEM on v7x's 64 MiB and keeps >=2 parallel grid steps for its 2 TCs).
    dims = (((1,), (1,)), ((), ()))           # q @ k^T over the lane dim
    for b in range(b_tile):
        r0, r1 = b * S, (b + 1) * S
        # RoPE on k in de-interleaved (even|odd) layout, shared across heads
        ke_b, ko_b = k_e[r0:r1], k_o[r0:r1]
        k_rot = jnp.concatenate([ke_b * cos - ko_b * sin,
                                 ke_b * sin + ko_b * cos], axis=-1)   # [S, dr]
        for h in range(H):
            qs = q_state[r0:r1, h * dh:(h + 1) * dh]
            ks = k_state[r0:r1, h * dh:(h + 1) * dh]
            vs = v_state[r0:r1, h * dh:(h + 1) * dh]
            qe = q_e[r0:r1, h * hd2:(h + 1) * hd2]
            qo = q_o[r0:r1, h * hd2:(h + 1) * hd2]
            q_rot = jnp.concatenate([qe * cos - qo * sin,
                                     qe * sin + qo * cos], axis=-1)   # [S, dr]
            q_cat = jnp.concatenate([qs, q_rot], axis=-1).astype(bf16)
            k_cat = jnp.concatenate([ks, k_rot], axis=-1).astype(bf16)
            s = jax.lax.dot_general(q_cat, k_cat, dims,
                                    preferred_element_type=jnp.float32)
            s = s - jnp.max(s, axis=-1, keepdims=True)
            e = jnp.exp(s)
            # approx reciprocal (EUP) is fine at the loose test tolerance
            att = e * pl.reciprocal(jnp.sum(e, axis=-1, keepdims=True),
                                    approx=True)
            att_acc[r0:r1, h * dh:(h + 1) * dh] = jnp.dot(
                att.astype(bf16), vs.astype(bf16),
                preferred_element_type=jnp.float32)

    # ---- output FAN projection over the whole folded tile
    ho = jnp.dot(att_acc[...].astype(bf16), wo_ref[...],
                 preferred_element_type=jnp.float32) + bo_ref[...]
    ooff = cfg["o_offs"]
    p_o = ho[:, ooff[0]:ooff[0] + cfg["out_p"]]
    g_o = ho[:, ooff[1]:ooff[1] + cfg["out_g"]]
    out = _fan_combine(p_o, g_o, gates_ref[10], gates_ref[11])        # [R, d_model]
    # TODO(synk): for large S*d_model, reshape to a >=128-lane slab before the
    # store (lane-dense vst); at d_model=32 the masked store is negligible.
    o_ref[...] = out.reshape(b_tile, S, d_model)


def _pick_vmem_limit(fused, cos, sin, b_tile, seq_len, cfg):
    """Explicit scoped-VMEM budget from tile sizes, clamped per generation."""
    mib = 1 << 20
    consts = (fused["wx"], fused["bx"], fused["wq"], fused["bq"],
              fused["wkv"], fused["bkv"], fused["wo"], fused["bo"], cos, sin)
    const_bytes = sum(int(a.size) * a.dtype.itemsize for a in consts)
    rows = b_tile * seq_len
    widths = (cfg["x_width"] + cfg["q_width"] + cfg["kv_width"]
              + cfg["o_width"] + 6 * cfg["d_model"])
    act_bytes = rows * widths * 4                                 # f32 interm.
    io_bytes = 2 * rows * (cfg["d_embed"] * 2 + cfg["d_model"] * 4)  # dbl-buf
    est = 2 * const_bytes + act_bytes + io_bytes + rows * cfg["d_model"] * 4
    try:
        cap = int(pltpu.get_tpu_info().vmem_capacity_bytes)
    except Exception:  # pragma: no cover - conservative (v7x-sized) fallback
        cap = 64 * mib
    return int(min(max(2 * est, 32 * mib), int(0.85 * cap)))


def mla_forward(fused, sequence, cos, sin, *, cfg, b_tile=None):
    B, S, d_embed = sequence.shape
    d_model = cfg["d_model"]
    assert d_embed == cfg["d_embed"]
    # Guard the fused weight concat layout against the in-kernel slice offsets.
    assert fused["wx"].shape == (cfg["d_embed"], cfg["x_width"])
    assert fused["wq"].shape == (cfg["d_c1"], cfg["q_width"])
    assert fused["wkv"].shape == (cfg["d_c"], cfg["kv_width"])
    assert fused["wo"].shape == (cfg["d_model"], cfg["o_width"])
    assert cos.shape == (S, cfg["hd2"]) and sin.shape == (S, cfg["hd2"])

    if b_tile is None:
        # Fold batch elements so each grid step's projection matmuls see
        # ~>=128 MXU rows (largest divisor of B not exceeding 128/S).
        target = min(B, max(1, 128 // S))
        b_tile = max(d for d in range(1, target + 1) if B % d == 0)
    assert B % b_tile == 0
    grid = (B // b_tile,)

    x_in = sequence.astype(jnp.bfloat16)       # bf16 operands feed the MXU

    def const_spec(a):
        # Constant over the grid (weights / biases / rotary tables).
        # TODO(synk): single-buffer with pipeline_mode=pl.Buffered(1) to halve
        # resident constant VMEM on v7x once verified on the target jax build.
        return pl.BlockSpec(a.shape, lambda i, _nd=a.ndim: (0,) * _nd)

    smem = pl.BlockSpec(memory_space=pltpu.MemorySpace.SMEM)
    vmem_limit = _pick_vmem_limit(fused, cos, sin, b_tile, S, cfg)

    kernel = partial(mla_fused_kernel, cfg=cfg, b_tile=b_tile, seq_len=S)
    return pl.pallas_call(
        kernel,
        out_shape=jax.ShapeDtypeStruct((B, S, d_model), jnp.float32),
        grid=grid,
        in_specs=[
            smem,                                                # gates (SMEM)
            pl.BlockSpec((b_tile, S, d_embed), lambda i: (i, 0, 0)),
            const_spec(fused["wx"]), const_spec(fused["bx"]),
            const_spec(fused["wq"]), const_spec(fused["bq"]),
            const_spec(fused["wkv"]), const_spec(fused["bkv"]),
            const_spec(fused["wo"]), const_spec(fused["bo"]),
            const_spec(cos), const_spec(sin),
        ],
        out_specs=pl.BlockSpec((b_tile, S, d_model), lambda i: (i, 0, 0)),
        scratch_shapes=[pltpu.VMEM((b_tile * S, d_model), jnp.float32)],
        compiler_params=pltpu.CompilerParams(
            dimension_semantics=("parallel",),
            vmem_limit_bytes=vmem_limit),
    )(fused["gates"], x_in, fused["wx"], fused["bx"], fused["wq"], fused["bq"],
      fused["wkv"], fused["bkv"], fused["wo"], fused["bo"], cos, sin)


# ------------------------------ parameter init ------------------------------

def init_linear(key, d_in, d_out):
    kw, kb = jax.random.split(key)
    w = jax.random.normal(kw, (d_in, d_out), jnp.float32) / math.sqrt(d_in)
    b = jax.random.normal(kb, (d_out,), jnp.float32) * 0.02
    return (w, b)


def init_fan(key, d_in, d_out):
    kp, kg, kgate = jax.random.split(key, 3)
    d_p, d_g = fan_dims(d_out)
    wp, bp = init_linear(kp, d_in, d_p)
    wg, bg = init_linear(kg, d_in, d_g)
    gate = jax.random.normal(kgate, (), jnp.float32)
    return (wp, bp, wg, bg, gate)


def init_params(key, cfg):
    ks = jax.random.split(key, 8)
    return {
        "DKV": init_fan(ks[0], cfg["d_embed"], cfg["d_c"]),
        "DQ":  init_fan(ks[1], cfg["d_embed"], cfg["d_c1"]),
        "UQ":  init_fan(ks[2], cfg["d_c1"], cfg["d_model"]),
        "UK":  init_fan(ks[3], cfg["d_c"], cfg["d_model"]),
        "UV":  init_fan(ks[4], cfg["d_c"], cfg["d_model"]),
        "RQ":  init_linear(ks[5], cfg["d_c1"], cfg["num_head"] * cfg["d_rotate"]),
        "RK":  init_linear(ks[6], cfg["d_embed"], cfg["d_rotate"]),
        "OUT": init_fan(ks[7], cfg["d_model"], cfg["d_model"]),
    }


def _fuse(segs, offs, total):
    """Concatenate (w, b) segments, zero-padding each to its lane-aligned slot."""
    d_in = segs[0][0].shape[0]
    ws, bs = [], []
    for idx, (w, b) in enumerate(segs):
        start = offs[idx]
        end = offs[idx + 1] if idx + 1 < len(offs) else total
        pad = (end - start) - w.shape[1]
        assert pad >= 0 and w.shape[0] == d_in
        ws.append(jnp.pad(w, ((0, 0), (0, pad))))
        bs.append(jnp.pad(b, ((0, pad),)))
    wf = jnp.concatenate(ws, axis=1)
    bf = jnp.concatenate(bs)
    assert wf.shape == (d_in, total)
    return wf.astype(jnp.bfloat16), bf[None, :].astype(jnp.float32)


def build_fused(params, cfg):
    """Pre-concat / permute / scale-fold / pad weights -> 4 lane-aligned bf16
    matmuls in the kernel."""
    H, dr, scale = cfg["num_head"], cfg["d_rotate"], cfg["scale"]

    def gate_pair(layer, s=1.0):
        g = jax.nn.sigmoid(layer[4])
        return jnp.stack([s * g, s * (1.0 - g)])

    # RK: de-interleave columns into (even | odd)
    w_rk, b_rk = params["RK"]
    even = jnp.arange(0, dr, 2)
    odd = jnp.arange(1, dr, 2)

    wp_dq, bp_dq, wg_dq, bg_dq, _ = params["DQ"]
    wp_dkv, bp_dkv, wg_dkv, bg_dkv, _ = params["DKV"]
    wx, bx = _fuse(
        [(wp_dq, bp_dq), (wg_dq, bg_dq), (wp_dkv, bp_dkv), (wg_dkv, bg_dkv),
         (w_rk[:, even], b_rk[even]), (w_rk[:, odd], b_rk[odd])],
        cfg["x_offs"], cfg["x_width"])

    # RQ: head-major de-interleave (even | odd) + attention-scale fold
    w_rq, b_rq = params["RQ"]
    cols_e = jnp.array([h * dr + j for h in range(H) for j in range(0, dr, 2)])
    cols_o = jnp.array([h * dr + j for h in range(H) for j in range(1, dr, 2)])
    wp_uq, bp_uq, wg_uq, bg_uq, _ = params["UQ"]
    wq, bq = _fuse(
        [(wp_uq, bp_uq), (wg_uq, bg_uq),
         (w_rq[:, cols_e] * scale, b_rq[cols_e] * scale),
         (w_rq[:, cols_o] * scale, b_rq[cols_o] * scale)],
        cfg["q_offs"], cfg["q_width"])

    wp_uk, bp_uk, wg_uk, bg_uk, _ = params["UK"]
    wp_uv, bp_uv, wg_uv, bg_uv, _ = params["UV"]
    wkv, bkv = _fuse(
        [(wp_uk, bp_uk), (wg_uk, bg_uk), (wp_uv, bp_uv), (wg_uv, bg_uv)],
        cfg["kv_offs"], cfg["kv_width"])

    wp_o, bp_o, wg_o, bg_o, _ = params["OUT"]
    wo, bo = _fuse([(wp_o, bp_o), (wg_o, bg_o)], cfg["o_offs"], cfg["o_width"])

    gates = jnp.concatenate([
        gate_pair(params["DQ"]), gate_pair(params["DKV"]),
        gate_pair(params["UQ"], scale), gate_pair(params["UK"]),
        gate_pair(params["UV"]), gate_pair(params["OUT"]),
    ]).astype(jnp.float32)

    return dict(wx=wx, bx=bx, wq=wq, bq=bq, wkv=wkv, bkv=bkv,
                wo=wo, bo=bo, gates=gates)


# ------------------------------ RoPE frequencies -----------------------------

def precompute_freqs(dim, end, theta=10000.0):
    inv = 1.0 / (theta ** (jnp.arange(0, dim, 2)[: dim // 2].astype(jnp.float32) / dim))
    t = jnp.arange(end, dtype=jnp.float32)
    ang = jnp.outer(t, inv)                      # [end, dim//2]
    return jnp.cos(ang), jnp.sin(ang)


# --------------------------- pure-JAX reference ------------------------------

def reference_forward(params, sequence, cos, sin, cfg):
    """Faithful (unfused, f32) re-implementation of the PyTorch forward."""
    B, S, _ = sequence.shape
    H, dh, dr = cfg["num_head"], cfg["d_head"], cfg["d_rotate"]

    def fan(layer, x):
        wp, bp, wg, bg, gate_raw = layer
        p = x @ wp + bp
        g = _gelu_exact(x @ wg + bg)
        gate = jax.nn.sigmoid(gate_raw)
        return jnp.concatenate(
            [gate * jnp.cos(p), gate * jnp.sin(p), (1.0 - gate) * g], axis=-1)

    def linear(layer, x):
        w, b = layer
        return x @ w + b

    def rope(x):                                  # x: [B,S,H,dr], interleaved
        x0, x1 = x[..., 0::2], x[..., 1::2]
        cc = cos[:S][None, :, None, :]
        ss = sin[:S][None, :, None, :]
        o0 = x0 * cc - x1 * ss
        o1 = x0 * ss + x1 * cc
        return jnp.stack([o0, o1], axis=-1).reshape(x.shape)

    c_q = fan(params["DQ"], sequence)
    q_state = fan(params["UQ"], c_q).reshape(B, S, H, dh)
    q_rot = linear(params["RQ"], c_q).reshape(B, S, H, dr)
    c_kv = fan(params["DKV"], sequence)
    k_rot = jnp.broadcast_to(linear(params["RK"], sequence)[:, :, None, :],
                             (B, S, H, dr))
    k_state = fan(params["UK"], c_kv).reshape(B, S, H, dh)
    v_state = fan(params["UV"], c_kv).reshape(B, S, H, dh)

    q = jnp.concatenate([q_state, rope(q_rot)], axis=-1) * cfg["scale"]
    k = jnp.concatenate([k_state, rope(k_rot)], axis=-1)
    s = jnp.einsum("bqhd,bkhd->bhqk", q, k)
    att = jax.nn.softmax(s, axis=-1)
    o = jnp.einsum("bhqk,bkhd->bqhd", att, v_state).reshape(B, S, H * dh)
    return fan(params["OUT"], o)


# ----------------------------------- main ------------------------------------

if __name__ == "__main__":
    d_model = 32
    num_head = 4
    d_embed = 32
    d_c = 16
    d_c1 = 16
    d_rotate = 8
    batch = 2
    seq_len = 8
    max_seq_len = 16

    cfg = make_cfg(d_model, num_head, d_embed, d_c, d_c1, d_rotate)

    key = jax.random.PRNGKey(0)
    kp, kx = jax.random.split(key)
    params = init_params(kp, cfg)
    fused = build_fused(params, cfg)

    cos, sin = precompute_freqs(d_rotate, max_seq_len * 2)
    cos_s, sin_s = cos[:seq_len], sin[:seq_len]       # [S, d_rotate/2]

    sequence = jax.random.normal(kx, (batch, seq_len, d_model), jnp.float32)

    fwd = jax.jit(partial(mla_forward, cfg=cfg))
    out = fwd(fused, sequence, cos_s, sin_s)
    jax.block_until_ready(out)

    ref = reference_forward(params, sequence, cos, sin, cfg)
    assert out.shape == (batch, seq_len, d_model)
    assert bool(jnp.all(jnp.isfinite(out)))
    # bf16 MXU operands (f32 accumulate) vs the pure-f32 reference -> tolerance
    # loosened from 5e-2 to 1e-1; observed error is well inside this.
    max_diff = float(jnp.max(jnp.abs(out - ref)))
    assert bool(jnp.allclose(out, ref, atol=1e-1, rtol=1e-1)), (
        "max abs diff = %f" % max_diff)
    print("KERNEL_OK")
</pallas_src>

<mosaic_0001>
module attributes {stable_mosaic.version = 11 : i64} {
  func.func @mla_fused_kernel(%arg0: i32, %arg1: memref<12xf32, #tpu.memory_space<smem>>, %arg2: memref<2x8x32xbf16, #tpu.memory_space<vmem>>, %arg3: memref<32x768xbf16, #tpu.memory_space<vmem>>, %arg4: memref<1x768xf32, #tpu.memory_space<vmem>>, %arg5: memref<16x512xbf16, #tpu.memory_space<vmem>>, %arg6: memref<1x512xf32, #tpu.memory_space<vmem>>, %arg7: memref<16x512xbf16, #tpu.memory_space<vmem>>, %arg8: memref<1x512xf32, #tpu.memory_space<vmem>>, %arg9: memref<32x256xbf16, #tpu.memory_space<vmem>>, %arg10: memref<1x256xf32, #tpu.memory_space<vmem>>, %arg11: memref<8x4xf32, #tpu.memory_space<vmem>>, %arg12: memref<8x4xf32, #tpu.memory_space<vmem>>, %arg13: memref<2x8x32xf32, #tpu.memory_space<vmem>>, %arg14: memref<16x32xf32, #tpu.memory_space<vmem>>) attributes {dimension_semantics = [#tpu.dimension_semantics<parallel>], iteration_bounds = array<i64: 1>, scalar_prefetch = 0 : i64, scratch_operands = 1 : i64, tpu.core_type = #tpu.core_type<tc>, window_params = [{transform_indices = @transform_0, window_bounds = array<i64: 12>}, {transform_indices = @transform_1, window_bounds = array<i64: 2, 8, 32>}, {pipeline_mode = #tpu.pipeline_mode<synchronous>, transform_indices = @transform_2, window_bounds = array<i64: 32, 768>}, {pipeline_mode = #tpu.pipeline_mode<synchronous>, transform_indices = @transform_3, window_bounds = array<i64: 1, 768>}, {pipeline_mode = #tpu.pipeline_mode<synchronous>, transform_indices = @transform_4, window_bounds = array<i64: 16, 512>}, {pipeline_mode = #tpu.pipeline_mode<synchronous>, transform_indices = @transform_5, window_bounds = array<i64: 1, 512>}, {pipeline_mode = #tpu.pipeline_mode<synchronous>, transform_indices = @transform_6, window_bounds = array<i64: 16, 512>}, {pipeline_mode = #tpu.pipeline_mode<synchronous>, transform_indices = @transform_7, window_bounds = array<i64: 1, 512>}, {pipeline_mode = #tpu.pipeline_mode<synchronous>, transform_indices = @transform_8, window_bounds = array<i64: 32, 256>}, {pipeline_mode = #tpu.pipeline_mode<synchronous>, transform_indices = @transform_9, window_bounds = array<i64: 1, 256>}, {pipeline_mode = #tpu.pipeline_mode<synchronous>, transform_indices = @transform_10, window_bounds = array<i64: 8, 4>}, {pipeline_mode = #tpu.pipeline_mode<synchronous>, transform_indices = @transform_11, window_bounds = array<i64: 8, 4>}, {transform_indices = @transform_12, window_bounds = array<i64: 2, 8, 32>}]} {
    %c0 = arith.constant 0 : index
    %c0_0 = arith.constant 0 : index
    %c0_1 = arith.constant 0 : index
    %0 = vector.load %arg2[%c0, %c0_0, %c0_1] : memref<2x8x32xbf16, #tpu.memory_space<vmem>>, vector<2x8x32xbf16>
    %1 = vector.shape_cast %0 : vector<2x8x32xbf16> to vector<16x32xbf16>
    %c0_2 = arith.constant 0 : index
    %c0_3 = arith.constant 0 : index
    %2 = vector.load %arg3[%c0_2, %c0_3] : memref<32x768xbf16, #tpu.memory_space<vmem>>, vector<32x768xbf16>
    %cst = arith.constant dense<0.000000e+00> : vector<16x768xf32>
    %3 = tpu.matmul %1, %2, %cst {dimension_numbers = #tpu.dot_dimension_numbers<[1], [0], [0], [1], [0, 0, 1, 1], [], []>} : vector<16x32xbf16>, vector<32x768xbf16>, vector<16x768xf32> -> vector<16x768xf32>
    %c0_4 = arith.constant 0 : index
    %c0_5 = arith.constant 0 : index
    %4 = vector.load %arg4[%c0_4, %c0_5] : memref<1x768xf32, #tpu.memory_space<vmem>>, vector<1x768xf32>
    %5 = vector.broadcast %4 : vector<1x768xf32> to vector<16x768xf32>
    %6 = arith.addf %3, %5 : vector<16x768xf32>
    %7 = vector.extract_strided_slice %6 {offsets = [0, 0], sizes = [16, 4], strides = [1, 1]} : vector<16x768xf32> to vector<16x4xf32>
    %8 = vector.extract_strided_slice %6 {offsets = [0, 128], sizes = [16, 8], strides = [1, 1]} : vector<16x768xf32> to vector<16x8xf32>
    %9 = vector.extract_strided_slice %6 {offsets = [0, 256], sizes = [16, 4], strides = [1, 1]} : vector<16x768xf32> to vector<16x4xf32>
    %10 = vector.extract_strided_slice %6 {offsets = [0, 384], sizes = [16, 8], strides = [1, 1]} : vector<16x768xf32> to vector<16x8xf32>
    %11 = vector.extract_strided_slice %6 {offsets = [0, 512], sizes = [16, 4], strides = [1, 1]} : vector<16x768xf32> to vector<16x4xf32>
    %12 = vector.extract_strided_slice %6 {offsets = [0, 640], sizes = [16, 4], strides = [1, 1]} : vector<16x768xf32> to vector<16x4xf32>
    %c0_6 = arith.constant 0 : index
    %13 = memref.load %arg1[%c0_6] : memref<12xf32, #tpu.memory_space<smem>>
    %c1 = arith.constant 1 : index
    %14 = memref.load %arg1[%c1] : memref<12xf32, #tpu.memory_space<smem>>
    %15 = math.cos %7 : vector<16x4xf32>
    %16 = vector.broadcast %13 : f32 to vector<16x4xf32>
    %17 = arith.mulf %16, %15 : vector<16x4xf32>
    %18 = math.sin %7 : vector<16x4xf32>
    %19 = vector.broadcast %13 : f32 to vector<16x4xf32>
    %20 = arith.mulf %19, %18 : vector<16x4xf32>
    %cst_7 = arith.constant 5.000000e-01 : f32
    %21 = vector.broadcast %cst_7 : f32 to vector<16x8xf32>
    %22 = arith.mulf %21, %8 : vector<16x8xf32>
    %cst_8 = arith.constant 0.707106769 : f32
    %23 = vector.broadcast %cst_8 : f32 to vector<16x8xf32>
    %24 = arith.mulf %8, %23 : vector<16x8xf32>
    %cst_9 = arith.constant 0.000000e+00 : f32
    %25 = vector.broadcast %cst_9 : f32 to vector<16x8xf32>
    %26 = arith.cmpf oge, %24, %25 : vector<16x8xf32>
    %cst_10 = arith.constant 1.000000e+00 : f32
    %cst_11 = arith.constant -1.000000e+00 : f32
    %27 = vector.broadcast %cst_10 : f32 to vector<16x8xf32>
    %28 = vector.broadcast %cst_11 : f32 to vector<16x8xf32>
    %29 = arith.select %26, %27, %28 : vector<16x8xi1>, vector<16x8xf32>
    %30 = math.absf %24 : vector<16x8xf32>
    %cst_12 = arith.constant 0.327591091 : f32
    %31 = vector.broadcast %cst_12 : f32 to vector<16x8xf32>
    %32 = arith.mulf %31, %30 : vector<16x8xf32>
    %cst_13 = arith.constant 1.000000e+00 : f32
    %33 = vector.broadcast %cst_13 : f32 to vector<16x8xf32>
    %34 = arith.addf %33, %32 : vector<16x8xf32>
    %cst_14 = arith.constant 1.000000e+00 : f32
    %35 = vector.broadcast %cst_14 : f32 to vector<16x8xf32>
    %36 = arith.divf %35, %34 : vector<16x8xf32>
    %cst_15 = arith.constant 1.06140542 : f32
    %37 = vector.broadcast %cst_15 : f32 to vector<16x8xf32>
    %38 = arith.mulf %37, %36 : vector<16x8xf32>
    %cst_16 = arith.constant -1.45315206 : f32
    %39 = vector.broadcast %cst_16 : f32 to vector<16x8xf32>
    %40 = arith.addf %38, %39 : vector<16x8xf32>
    %41 = arith.mulf %40, %36 : vector<16x8xf32>
    %cst_17 = arith.constant 1.42141378 : f32
    %42 = vector.broadcast %cst_17 : f32 to vector<16x8xf32>
    %43 = arith.addf %41, %42 : vector<16x8xf32>
    %44 = arith.mulf %43, %36 : vector<16x8xf32>
    %cst_18 = arith.constant -0.284496725 : f32
    %45 = vector.broadcast %cst_18 : f32 to vector<16x8xf32>
    %46 = arith.addf %44, %45 : vector<16x8xf32>
    %47 = arith.mulf %46, %36 : vector<16x8xf32>
    %cst_19 = arith.constant 0.254829586 : f32
    %48 = vector.broadcast %cst_19 : f32 to vector<16x8xf32>
    %49 = arith.addf %47, %48 : vector<16x8xf32>
    %50 = arith.mulf %49, %36 : vector<16x8xf32>
    %cst_20 = arith.constant 0.000000e+00 : f32
    %51 = vector.broadcast %cst_20 : f32 to vector<16x8xf32>
    %52 = arith.subf %51, %30 : vector<16x8xf32>
    %53 = arith.mulf %52, %30 : vector<16x8xf32>
    %54 = math.exp %53 : vector<16x8xf32>
    %55 = arith.mulf %50, %54 : vector<16x8xf32>
    %cst_21 = arith.constant 1.000000e+00 : f32
    %56 = vector.broadcast %cst_21 : f32 to vector<16x8xf32>
    %57 = arith.subf %56, %55 : vector<16x8xf32>
    %58 = arith.mulf %29, %57 : vector<16x8xf32>
    %cst_22 = arith.constant 1.000000e+00 : f32
    %59 = vector.broadcast %cst_22 : f32 to vector<16x8xf32>
    %60 = arith.addf %59, %58 : vector<16x8xf32>
    %61 = arith.mulf %22, %60 : vector<16x8xf32>
    %62 = vector.broadcast %14 : f32 to vector<16x8xf32>
    %63 = arith.mulf %62, %61 : vector<16x8xf32>
    %64 = tpu.concatenate %17, %20, %63 in 1 : vector<16x4xf32>, vector<16x4xf32>, vector<16x8xf32> -> vector<16x16xf32>
    %c2 = arith.constant 2 : index
    %65 = memref.load %arg1[%c2] : memref<12xf32, #tpu.memory_space<smem>>
    %c3 = arith.constant 3 : index
    %66 = memref.load %arg1[%c3] : memref<12xf32, #tpu.memory_space<smem>>
    %67 = math.cos %9 : vector<16x4xf32>
    %68 = vector.broadcast %65 : f32 to vector<16x4xf32>
    %69 = arith.mulf %68, %67 : vector<16x4xf32>
    %70 = math.sin %9 : vector<16x4xf32>
    %71 = vector.broadcast %65 : f32 to vector<16x4xf32>
    %72 = arith.mulf %71, %70 : vector<16x4xf32>
    %cst_23 = arith.constant 5.000000e-01 : f32
    %73 = vector.broadcast %cst_23 : f32 to vector<16x8xf32>
    %74 = arith.mulf %73, %10 : vector<16x8xf32>
    %cst_24 = arith.constant 0.707106769 : f32
    %75 = vector.broadcast %cst_24 : f32 to vector<16x8xf32>
    %76 = arith.mulf %10, %75 : vector<16x8xf32>
    %cst_25 = arith.constant 0.000000e+00 : f32
    %77 = vector.broadcast %cst_25 : f32 to vector<16x8xf32>
    %78 = arith.cmpf oge, %76, %77 : vector<16x8xf32>
    %cst_26 = arith.constant 1.000000e+00 : f32
    %cst_27 = arith.constant -1.000000e+00 : f32
    %79 = vector.broadcast %cst_26 : f32 to vector<16x8xf32>
    %80 = vector.broadcast %cst_27 : f32 to vector<16x8xf32>
    %81 = arith.select %78, %79, %80 : vector<16x8xi1>, vector<16x8xf32>
    %82 = math.absf %76 : vector<16x8xf32>
    %cst_28 = arith.constant 0.327591091 : f32
    %83 = vector.broadcast %cst_28 : f32 to vector<16x8xf32>
    %84 = arith.mulf %83, %82 : vector<16x8xf32>
    %cst_29 = arith.constant 1.000000e+00 : f32
    %85 = vector.broadcast %cst_29 : f32 to vector<16x8xf32>
    %86 = arith.addf %85, %84 : vector<16x8xf32>
    %cst_30 = arith.constant 1.000000e+00 : f32
    %87 = vector.broadcast %cst_30 : f32 to vector<16x8xf32>
    %88 = arith.divf %87, %86 : vector<16x8xf32>
    %cst_31 = arith.constant 1.06140542 : f32
    %89 = vector.broadcast %cst_31 : f32 to vector<16x8xf32>
    %90 = arith.mulf %89, %88 : vector<16x8xf32>
    %cst_32 = arith.constant -1.45315206 : f32
    %91 = vector.broadcast %cst_32 : f32 to vector<16x8xf32>
    %92 = arith.addf %90, %91 : vector<16x8xf32>
    %93 = arith.mulf %92, %88 : vector<16x8xf32>
    %cst_33 = arith.constant 1.42141378 : f32
    %94 = vector.broadcast %cst_33 : f32 to vector<16x8xf32>
    %95 = arith.addf %93, %94 : vector<16x8xf32>
    %96 = arith.mulf %95, %88 : vector<16x8xf32>
    %cst_34 = arith.constant -0.284496725 : f32
    %97 = vector.broadcast %cst_34 : f32 to vector<16x8xf32>
    %98 = arith.addf %96, %97 : vector<16x8xf32>
    %99 = arith.mulf %98, %88 : vector<16x8xf32>
    %cst_35 = arith.constant 0.254829586 : f32
    %100 = vector.broadcast %cst_35 : f32 to vector<16x8xf32>
    %101 = arith.addf %99, %100 : vector<16x8xf32>
    %102 = arith.mulf %101, %88 : vector<16x8xf32>
    %cst_36 = arith.constant 0.000000e+00 : f32
    %103 = vector.broadcast %cst_36 : f32 to vector<16x8xf32>
    %104 = arith.subf %103, %82 : vector<16x8xf32>
    %105 = arith.mulf %104, %82 : vector<16x8xf32>
    %106 = math.exp %105 : vector<16x8xf32>
    %107 = arith.mulf %102, %106 : vector<16x8xf32>
    %cst_37 = arith.constant 1.000000e+00 : f32
    %108 = vector.broadcast %cst_37 : f32 to vector<16x8xf32>
    %109 = arith.subf %108, %107 : vector<16x8xf32>
    %110 = arith.mulf %81, %109 : vector<16x8xf32>
    %cst_38 = arith.constant 1.000000e+00 : f32
    %111 = vector.broadcast %cst_38 : f32 to vector<16x8xf32>
    %112 = arith.addf %111, %110 : vector<16x8xf32>
    %113 = arith.mulf %74, %112 : vector<16x8xf32>
    %114 = vector.broadcast %66 : f32 to vector<16x8xf32>
    %115 = arith.mulf %114, %113 : vector<16x8xf32>
    %116 = tpu.concatenate %69, %72, %115 in 1 : vector<16x4xf32>, vector<16x4xf32>, vector<16x8xf32> -> vector<16x16xf32>
    %117 = arith.truncf %64 : vector<16x16xf32> to vector<16x16xbf16>
    %c0_39 = arith.constant 0 : index
    %c0_40 = arith.constant 0 : index
    %118 = vector.load %arg5[%c0_39, %c0_40] : memref<16x512xbf16, #tpu.memory_space<vmem>>, vector<16x512xbf16>
    %cst_41 = arith.constant dense<0.000000e+00> : vector<16x512xf32>
    %119 = tpu.matmul %117, %118, %cst_41 {dimension_numbers = #tpu.dot_dimension_numbers<[1], [0], [0], [1], [0, 0, 1, 1], [], []>} : vector<16x16xbf16>, vector<16x512xbf16>, vector<16x512xf32> -> vector<16x512xf32>
    %c0_42 = arith.constant 0 : index
    %c0_43 = arith.constant 0 : index
    %120 = vector.load %arg6[%c0_42, %c0_43] : memref<1x512xf32, #tpu.memory_space<vmem>>, vector<1x512xf32>
    %121 = vector.broadcast %120 : vector<1x512xf32> to vector<16x512xf32>
    %122 = arith.addf %119, %121 : vector<16x512xf32>
    %123 = vector.extract_strided_slice %122 {offsets = [0, 0], sizes = [16, 8], strides = [1, 1]} : vector<16x512xf32> to vector<16x8xf32>
    %124 = vector.extract_strided_slice %122 {offsets = [0, 128], sizes = [16, 16], strides = [1, 1]} : vector<16x512xf32> to vector<16x16xf32>
    %125 = vector.extract_strided_slice %122 {offsets = [0, 256], sizes = [16, 16], strides = [1, 1]} : vector<16x512xf32> to vector<16x16xf32>
    %126 = vector.extract_strided_slice %122 {offsets = [0, 384], sizes = [16, 16], strides = [1, 1]} : vector<16x512xf32> to vector<16x16xf32>
    %c4 = arith.constant 4 : index
    %127 = memref.load %arg1[%c4] : memref<12xf32, #tpu.memory_space<smem>>
    %c5 = arith.constant 5 : index
    %128 = memref.load %arg1[%c5] : memref<12xf32, #tpu.memory_space<smem>>
    %129 = math.cos %123 : vector<16x8xf32>
    %130 = vector.broadcast %127 : f32 to vector<16x8xf32>
    %131 = arith.mulf %130, %129 : vector<16x8xf32>
    %132 = math.sin %123 : vector<16x8xf32>
    %133 = vector.broadcast %127 : f32 to vector<16x8xf32>
    %134 = arith.mulf %133, %132 : vector<16x8xf32>
    %cst_44 = arith.constant 5.000000e-01 : f32
    %135 = vector.broadcast %cst_44 : f32 to vector<16x16xf32>
    %136 = arith.mulf %135, %124 : vector<16x16xf32>
    %cst_45 = arith.constant 0.707106769 : f32
    %137 = vector.broadcast %cst_45 : f32 to vector<16x16xf32>
    %138 = arith.mulf %124, %137 : vector<16x16xf32>
    %cst_46 = arith.constant 0.000000e+00 : f32
    %139 = vector.broadcast %cst_46 : f32 to vector<16x16xf32>
    %140 = arith.cmpf oge, %138, %139 : vector<16x16xf32>
    %cst_47 = arith.constant 1.000000e+00 : f32
    %cst_48 = arith.constant -1.000000e+00 : f32
    %141 = vector.broadcast %cst_47 : f32 to vector<16x16xf32>
    %142 = vector.broadcast %cst_48 : f32 to vector<16x16xf32>
    %143 = arith.select %140, %141, %142 : vector<16x16xi1>, vector<16x16xf32>
    %144 = math.absf %138 : vector<16x16xf32>
    %cst_49 = arith.constant 0.327591091 : f32
    %145 = vector.broadcast %cst_49 : f32 to vector<16x16xf32>
    %146 = arith.mulf %145, %144 : vector<16x16xf32>
    %cst_50 = arith.constant 1.000000e+00 : f32
    %147 = vector.broadcast %cst_50 : f32 to vector<16x16xf32>
    %148 = arith.addf %147, %146 : vector<16x16xf32>
    %cst_51 = arith.constant 1.000000e+00 : f32
    %149 = vector.broadcast %cst_51 : f32 to vector<16x16xf32>
    %150 = arith.divf %149, %148 : vector<16x16xf32>
    %cst_52 = arith.constant 1.06140542 : f32
    %151 = vector.broadcast %cst_52 : f32 to vector<16x16xf32>
    %152 = arith.mulf %151, %150 : vector<16x16xf32>
    %cst_53 = arith.constant -1.45315206 : f32
    %153 = vector.broadcast %cst_53 : f32 to vector<16x16xf32>
    %154 = arith.addf %152, %153 : vector<16x16xf32>
    %155 = arith.mulf %154, %150 : vector<16x16xf32>
    %cst_54 = arith.constant 1.42141378 : f32
    %156 = vector.broadcast %cst_54 : f32 to vector<16x16xf32>
    %157 = arith.addf %155, %156 : vector<16x16xf32>
    %158 = arith.mulf %157, %150 : vector<16x16xf32>
    %cst_55 = arith.constant -0.284496725 : f32
    %159 = vector.broadcast %cst_55 : f32 to vector<16x16xf32>
    %160 = arith.addf %158, %159 : vector<16x16xf32>
    %161 = arith.mulf %160, %150 : vector<16x16xf32>
    %cst_56 = arith.constant 0.254829586 : f32
    %162 = vector.broadcast %cst_56 : f32 to vector<16x16xf32>
    %163 = arith.addf %161, %162 : vector<16x16xf32>
    %164 = arith.mulf %163, %150 : vector<16x16xf32>
    %cst_57 = arith.constant 0.000000e+00 : f32
    %165 = vector.broadcast %cst_57 : f32 to vector<16x16xf32>
    %166 = arith.subf %165, %144 : vector<16x16xf32>
    %167 = arith.mulf %166, %144 : vector<16x16xf32>
    %168 = math.exp %167 : vector<16x16xf32>
    %169 = arith.mulf %164, %168 : vector<16x16xf32>
    %cst_58 = arith.constant 1.000000e+00 : f32
    %170 = vector.broadcast %cst_58 : f32 to vector<16x16xf32>
    %171 = arith.subf %170, %169 : vector<16x16xf32>
    %172 = arith.mulf %143, %171 : vector<16x16xf32>
    %cst_59 = arith.constant 1.000000e+00 : f32
    %173 = vector.broadcast %cst_59 : f32 to vector<16x16xf32>
    %174 = arith.addf %173, %172 : vector<16x16xf32>
    %175 = arith.mulf %136, %174 : vector<16x16xf32>
    %176 = vector.broadcast %128 : f32 to vector<16x16xf32>
    %177 = arith.mulf %176, %175 : vector<16x16xf32>
    %178 = tpu.concatenate %131, %134, %177 in 1 : vector<16x8xf32>, vector<16x8xf32>, vector<16x16xf32> -> vector<16x32xf32>
    %179 = arith.truncf %116 : vector<16x16xf32> to vector<16x16xbf16>
    %c0_60 = arith.constant 0 : index
    %c0_61 = arith.constant 0 : index
    %180 = vector.load %arg7[%c0_60, %c0_61] : memref<16x512xbf16, #tpu.memory_space<vmem>>, vector<16x512xbf16>
    %cst_62 = arith.constant dense<0.000000e+00> : vector<16x512xf32>
    %181 = tpu.matmul %179, %180, %cst_62 {dimension_numbers = #tpu.dot_dimension_numbers<[1], [0], [0], [1], [0, 0, 1, 1], [], []>} : vector<16x16xbf16>, vector<16x512xbf16>, vector<16x512xf32> -> vector<16x512xf32>
    %c0_63 = arith.constant 0 : index
    %c0_64 = arith.constant 0 : index
    %182 = vector.load %arg8[%c0_63, %c0_64] : memref<1x512xf32, #tpu.memory_space<vmem>>, vector<1x512xf32>
    %183 = vector.broadcast %182 : vector<1x512xf32> to vector<16x512xf32>
    %184 = arith.addf %181, %183 : vector<16x512xf32>
    %185 = vector.extract_strided_slice %184 {offsets = [0, 0], sizes = [16, 8], strides = [1, 1]} : vector<16x512xf32> to vector<16x8xf32>
    %186 = vector.extract_strided_slice %184 {offsets = [0, 128], sizes = [16, 16], strides = [1, 1]} : vector<16x512xf32> to vector<16x16xf32>
    %187 = vector.extract_strided_slice %184 {offsets = [0, 256], sizes = [16, 8], strides = [1, 1]} : vector<16x512xf32> to vector<16x8xf32>
    %188 = vector.extract_strided_slice %184 {offsets = [0, 384], sizes = [16, 16], strides = [1, 1]} : vector<16x512xf32> to vector<16x16xf32>
    %c6 = arith.constant 6 : index
    %189 = memref.load %arg1[%c6] : memref<12xf32, #tpu.memory_space<smem>>
    %c7 = arith.constant 7 : index
    %190 = memref.load %arg1[%c7] : memref<12xf32, #tpu.memory_space<smem>>
    %191 = math.cos %185 : vector<16x8xf32>
    %192 = vector.broadcast %189 : f32 to vector<16x8xf32>
    %193 = arith.mulf %192, %191 : vector<16x8xf32>
    %194 = math.sin %185 : vector<16x8xf32>
    %195 = vector.broadcast %189 : f32 to vector<16x8xf32>
    %196 = arith.mulf %195, %194 : vector<16x8xf32>
    %cst_65 = arith.constant 5.000000e-01 : f32
    %197 = vector.broadcast %cst_65 : f32 to vector<16x16xf32>
    %198 = arith.mulf %197, %186 : vector<16x16xf32>
    %cst_66 = arith.constant 0.707106769 : f32
    %199 = vector.broadcast %cst_66 : f32 to vector<16x16xf32>
    %200 = arith.mulf %186, %199 : vector<16x16xf32>
    %cst_67 = arith.constant 0.000000e+00 : f32
    %201 = vector.broadcast %cst_67 : f32 to vector<16x16xf32>
    %202 = arith.cmpf oge, %200, %201 : vector<16x16xf32>
    %cst_68 = arith.constant 1.000000e+00 : f32
    %cst_69 = arith.constant -1.000000e+00 : f32
    %203 = vector.broadcast %cst_68 : f32 to vector<16x16xf32>
    %204 = vector.broadcast %cst_69 : f32 to vector<16x16xf32>
    %205 = arith.select %202, %203, %204 : vector<16x16xi1>, vector<16x16xf32>
    %206 = math.absf %200 : vector<16x16xf32>
    %cst_70 = arith.constant 0.327591091 : f32
    %207 = vector.broadcast %cst_70 : f32 to vector<16x16xf32>
    %208 = arith.mulf %207, %206 : vector<16x16xf32>
    %cst_71 = arith.constant 1.000000e+00 : f32
    %209 = vector.broadcast %cst_71 : f32 to vector<16x16xf32>
    %210 = arith.addf %209, %208 : vector<16x16xf32>
    %cst_72 = arith.constant 1.000000e+00 : f32
    %211 = vector.broadcast %cst_72 : f32 to vector<16x16xf32>
    %212 = arith.divf %211, %210 : vector<16x16xf32>
    %cst_73 = arith.constant 1.06140542 : f32
    %213 = vector.broadcast %cst_73 : f32 to vector<16x16xf32>
    %214 = arith.mulf %213, %212 : vector<16x16xf32>
    %cst_74 = arith.constant -1.45315206 : f32
    %215 = vector.broadcast %cst_74 : f32 to vector<16x16xf32>
    %216 = arith.addf %214, %215 : vector<16x16xf32>
    %217 = arith.mulf %216, %212 : vector<16x16xf32>
    %cst_75 = arith.constant 1.42141378 : f32
    %218 = vector.broadcast %cst_75 : f32 to vector<16x16xf32>
    %219 = arith.addf %217, %218 : vector<16x16xf32>
    %220 = arith.mulf %219, %212 : vector<16x16xf32>
    %cst_76 = arith.constant -0.284496725 : f32
    %221 = vector.broadcast %cst_76 : f32 to vector<16x16xf32>
    %222 = arith.addf %220, %221 : vector<16x16xf32>
    %223 = arith.mulf %222, %212 : vector<16x16xf32>
    %cst_77 = arith.constant 0.254829586 : f32
    %224 = vector.broadcast %cst_77 : f32 to vector<16x16xf32>
    %225 = arith.addf %223, %224 : vector<16x16xf32>
    %226 = arith.mulf %225, %212 : vector<16x16xf32>
    %cst_78 = arith.constant 0.000000e+00 : f32
    %227 = vector.broadcast %cst_78 : f32 to vector<16x16xf32>
    %228 = arith.subf %227, %206 : vector<16x16xf32>
    %229 = arith.mulf %228, %206 : vector<16x16xf32>
    %230 = math.exp %229 : vector<16x16xf32>
    %231 = arith.mulf %226, %230 : vector<16x16xf32>
    %cst_79 = arith.constant 1.000000e+00 : f32
    %232 = vector.broadcast %cst_79 : f32 to vector<16x16xf32>
    %233 = arith.subf %232, %231 : vector<16x16xf32>
    %234 = arith.mulf %205, %233 : vector<16x16xf32>
    %cst_80 = arith.constant 1.000000e+00 : f32
    %235 = vector.broadcast %cst_80 : f32 to vector<16x16xf32>
    %236 = arith.addf %235, %234 : vector<16x16xf32>
    %237 = arith.mulf %198, %236 : vector<16x16xf32>
    %238 = vector.broadcast %190 : f32 to vector<16x16xf32>
    %239 = arith.mulf %238, %237 : vector<16x16xf32>
    %240 = tpu.concatenate %193, %196, %239 in 1 : vector<16x8xf32>, vector<16x8xf32>, vector<16x16xf32> -> vector<16x32xf32>
    %c8 = arith.constant 8 : index
    %241 = memref.load %arg1[%c8] : memref<12xf32, #tpu.memory_space<smem>>
    %c9 = arith.constant 9 : index
    %242 = memref.load %arg1[%c9] : memref<12xf32, #tpu.memory_space<smem>>
    %243 = math.cos %187 : vector<16x8xf32>
    %244 = vector.broadcast %241 : f32 to vector<16x8xf32>
    %245 = arith.mulf %244, %243 : vector<16x8xf32>
    %246 = math.sin %187 : vector<16x8xf32>
    %247 = vector.broadcast %241 : f32 to vector<16x8xf32>
    %248 = arith.mulf %247, %246 : vector<16x8xf32>
    %cst_81 = arith.constant 5.000000e-01 : f32
    %249 = vector.broadcast %cst_81 : f32 to vector<16x16xf32>
    %250 = arith.mulf %249, %188 : vector<16x16xf32>
    %cst_82 = arith.constant 0.707106769 : f32
    %251 = vector.broadcast %cst_82 : f32 to vector<16x16xf32>
    %252 = arith.mulf %188, %251 : vector<16x16xf32>
    %cst_83 = arith.constant 0.000000e+00 : f32
    %253 = vector.broadcast %cst_83 : f32 to vector<16x16xf32>
    %254 = arith.cmpf oge, %252, %253 : vector<16x16xf32>
    %cst_84 = arith.constant 1.000000e+00 : f32
    %cst_85 = arith.constant -1.000000e+00 : f32
    %255 = vector.broadcast %cst_84 : f32 to vector<16x16xf32>
    %256 = vector.broadcast %cst_85 : f32 to vector<16x16xf32>
    %257 = arith.select %254, %255, %256 : vector<16x16xi1>, vector<16x16xf32>
    %258 = math.absf %252 : vector<16x16xf32>
    %cst_86 = arith.constant 0.327591091 : f32
    %259 = vector.broadcast %cst_86 : f32 to vector<16x16xf32>
    %260 = arith.mulf %259, %258 : vector<16x16xf32>
    %cst_87 = arith.constant 1.000000e+00 : f32
    %261 = vector.broadcast %cst_87 : f32 to vector<16x16xf32>
    %262 = arith.addf %261, %260 : vector<16x16xf32>
    %cst_88 = arith.constant 1.000000e+00 : f32
    %263 = vector.broadcast %cst_88 : f32 to vector<16x16xf32>
    %264 = arith.divf %263, %262 : vector<16x16xf32>
    %cst_89 = arith.constant 1.06140542 : f32
    %265 = vector.broadcast %cst_89 : f32 to vector<16x16xf32>
    %266 = arith.mulf %265, %264 : vector<16x16xf32>
    %cst_90 = arith.constant -1.45315206 : f32
    %267 = vector.broadcast %cst_90 : f32 to vector<16x16xf32>
    %268 = arith.addf %266, %267 : vector<16x16xf32>
    %269 = arith.mulf %268, %264 : vector<16x16xf32>
    %cst_91 = arith.constant 1.42141378 : f32
    %270 = vector.broadcast %cst_91 : f32 to vector<16x16xf32>
    %271 = arith.addf %269, %270 : vector<16x16xf32>
    %272 = arith.mulf %271, %264 : vector<16x16xf32>
    %cst_92 = arith.constant -0.284496725 : f32
    %273 = vector.broadcast %cst_92 : f32 to vector<16x16xf32>
    %274 = arith.addf %272, %273 : vector<16x16xf32>
    %275 = arith.mulf %274, %264 : vector<16x16xf32>
    %cst_93 = arith.constant 0.254829586 : f32
    %276 = vector.broadcast %cst_93 : f32 to vector<16x16xf32>
    %277 = arith.addf %275, %276 : vector<16x16xf32>
    %278 = arith.mulf %277, %264 : vector<16x16xf32>
    %cst_94 = arith.constant 0.000000e+00 : f32
    %279 = vector.broadcast %cst_94 : f32 to vector<16x16xf32>
    %280 = arith.subf %279, %258 : vector<16x16xf32>
    %281 = arith.mulf %280, %258 : vector<16x16xf32>
    %282 = math.exp %281 : vector<16x16xf32>
    %283 = arith.mulf %278, %282 : vector<16x16xf32>
    %cst_95 = arith.constant 1.000000e+00 : f32
    %284 = vector.broadcast %cst_95 : f32 to vector<16x16xf32>
    %285 = arith.subf %284, %283 : vector<16x16xf32>
    %286 = arith.mulf %257, %285 : vector<16x16xf32>
    %cst_96 = arith.constant 1.000000e+00 : f32
    %287 = vector.broadcast %cst_96 : f32 to vector<16x16xf32>
    %288 = arith.addf %287, %286 : vector<16x16xf32>
    %289 = arith.mulf %250, %288 : vector<16x16xf32>
    %290 = vector.broadcast %242 : f32 to vector<16x16xf32>
    %291 = arith.mulf %290, %289 : vector<16x16xf32>
    %292 = tpu.concatenate %245, %248, %291 in 1 : vector<16x8xf32>, vector<16x8xf32>, vector<16x16xf32> -> vector<16x32xf32>
    %c0_97 = arith.constant 0 : index
    %c0_98 = arith.constant 0 : index
    %293 = vector.load %arg11[%c0_97, %c0_98] : memref<8x4xf32, #tpu.memory_space<vmem>>, vector<8x4xf32>
    %c0_99 = arith.constant 0 : index
    %c0_100 = arith.constant 0 : index
    %294 = vector.load %arg12[%c0_99, %c0_100] : memref<8x4xf32, #tpu.memory_space<vmem>>, vector<8x4xf32>
    %295 = vector.extract_strided_slice %11 {offsets = [0, 0], sizes = [8, 4], strides = [1, 1]} : vector<16x4xf32> to vector<8x4xf32>
    %296 = vector.extract_strided_slice %12 {offsets = [0, 0], sizes = [8, 4], strides = [1, 1]} : vector<16x4xf32> to vector<8x4xf32>
    %297 = arith.mulf %295, %293 : vector<8x4xf32>
    %298 = arith.mulf %296, %294 : vector<8x4xf32>
    %299 = arith.subf %297, %298 : vector<8x4xf32>
    %300 = arith.mulf %295, %294 : vector<8x4xf32>
    %301 = arith.mulf %296, %293 : vector<8x4xf32>
    %302 = arith.addf %300, %301 : vector<8x4xf32>
    %303 = tpu.concatenate %299, %302 in 1 : vector<8x4xf32>, vector<8x4xf32> -> vector<8x8xf32>
    %304 = vector.extract_strided_slice %178 {offsets = [0, 0], sizes = [8, 8], strides = [1, 1]} : vector<16x32xf32> to vector<8x8xf32>
    %305 = vector.extract_strided_slice %240 {offsets = [0, 0], sizes = [8, 8], strides = [1, 1]} : vector<16x32xf32> to vector<8x8xf32>
    %306 = vector.extract_strided_slice %292 {offsets = [0, 0], sizes = [8, 8], strides = [1, 1]} : vector<16x32xf32> to vector<8x8xf32>
    %307 = vector.extract_strided_slice %125 {offsets = [0, 0], sizes = [8, 4], strides = [1, 1]} : vector<16x16xf32> to vector<8x4xf32>
    %308 = vector.extract_strided_slice %126 {offsets = [0, 0], sizes = [8, 4], strides = [1, 1]} : vector<16x16xf32> to vector<8x4xf32>
    %309 = arith.mulf %307, %293 : vector<8x4xf32>
    %310 = arith.mulf %308, %294 : vector<8x4xf32>
    %311 = arith.subf %309, %310 : vector<8x4xf32>
    %312 = arith.mulf %307, %294 : vector<8x4xf32>
    %313 = arith.mulf %308, %293 : vector<8x4xf32>
    %314 = arith.addf %312, %313 : vector<8x4xf32>
    %315 = tpu.concatenate %311, %314 in 1 : vector<8x4xf32>, vector<8x4xf32> -> vector<8x8xf32>
    %316 = tpu.concatenate %304, %315 in 1 : vector<8x8xf32>, vector<8x8xf32> -> vector<8x16xf32>
    %317 = arith.truncf %316 : vector<8x16xf32> to vector<8x16xbf16>
    %318 = tpu.concatenate %305, %303 in 1 : vector<8x8xf32>, vector<8x8xf32> -> vector<8x16xf32>
    %319 = arith.truncf %318 : vector<8x16xf32> to vector<8x16xbf16>
    %cst_101 = arith.constant dense<0.000000e+00> : vector<8x8xf32>
    %320 = tpu.matmul %317, %319, %cst_101 {dimension_numbers = #tpu.dot_dimension_numbers<[1], [1], [0], [0], [0, 0, 1, 0], [], []>} : vector<8x16xbf16>, vector<8x16xbf16>, vector<8x8xf32> -> vector<8x8xf32>
    %cst_102 = arith.constant dense<0xFF800000> : vector<8xf32>
    %321 = vector.multi_reduction <maximumf>, %320, %cst_102 [1] : vector<8x8xf32> to vector<8xf32>
    %322 = vector.shape_cast %321 : vector<8xf32> to vector<8x1xf32>
    %323 = vector.broadcast %322 : vector<8x1xf32> to vector<8x8xf32>
    %324 = arith.subf %320, %323 : vector<8x8xf32>
    %325 = math.exp %324 : vector<8x8xf32>
    %cst_103 = arith.constant dense<0.000000e+00> : vector<8xf32>
    %326 = vector.multi_reduction <add>, %325, %cst_103 [1] : vector<8x8xf32> to vector<8xf32>
    %327 = vector.shape_cast %326 : vector<8xf32> to vector<8x1xf32>
    %328 = tpu.reciprocal %327 {approx = true} : vector<8x1xf32> -> vector<8x1xf32>
    %329 = vector.broadcast %328 : vector<8x1xf32> to vector<8x8xf32>
    %330 = arith.mulf %325, %329 : vector<8x8xf32>
    %331 = arith.truncf %330 : vector<8x8xf32> to vector<8x8xbf16>
    %332 = arith.truncf %306 : vector<8x8xf32> to vector<8x8xbf16>
    %cst_104 = arith.constant dense<0.000000e+00> : vector<8x8xf32>
    %333 = tpu.matmul %331, %332, %cst_104 {dimension_numbers = #tpu.dot_dimension_numbers<[1], [0], [0], [1], [0, 0, 1, 1], [], []>} : vector<8x8xbf16>, vector<8x8xbf16>, vector<8x8xf32> -> vector<8x8xf32>
    %c0_105 = arith.constant 0 : index
    %c0_106 = arith.constant 0 : index
    %334 = vector.load %arg14[%c0_105, %c0_106] : memref<16x32xf32, #tpu.memory_space<vmem>>, vector<8x8xf32>
    tpu.vector_store %arg14[%c0_105, %c0_106], %333 {strides = array<i32>} : memref<16x32xf32, #tpu.memory_space<vmem>>, vector<8x8xf32>,
    %335 = vector.extract_strided_slice %178 {offsets = [0, 8], sizes = [8, 8], strides = [1, 1]} : vector<16x32xf32> to vector<8x8xf32>
    %336 = vector.extract_strided_slice %240 {offsets = [0, 8], sizes = [8, 8], strides = [1, 1]} : vector<16x32xf32> to vector<8x8xf32>
    %337 = vector.extract_strided_slice %292 {offsets = [0, 8], sizes = [8, 8], strides = [1, 1]} : vector<16x32xf32> to vector<8x8xf32>
    %338 = vector.extract_strided_slice %125 {offsets = [0, 4], sizes = [8, 4], strides = [1, 1]} : vector<16x16xf32> to vector<8x4xf32>
    %339 = vector.extract_strided_slice %126 {offsets = [0, 4], sizes = [8, 4], strides = [1, 1]} : vector<16x16xf32> to vector<8x4xf32>
    %340 = arith.mulf %338, %293 : vector<8x4xf32>
    %341 = arith.mulf %339, %294 : vector<8x4xf32>
    %342 = arith.subf %340, %341 : vector<8x4xf32>
    %343 = arith.mulf %338, %294 : vector<8x4xf32>
    %344 = arith.mulf %339, %293 : vector<8x4xf32>
    %345 = arith.addf %343, %344 : vector<8x4xf32>
    %346 = tpu.concatenate %342, %345 in 1 : vector<8x4xf32>, vector<8x4xf32> -> vector<8x8xf32>
    %347 = tpu.concatenate %335, %346 in 1 : vector<8x8xf32>, vector<8x8xf32> -> vector<8x16xf32>
    %348 = arith.truncf %347 : vector<8x16xf32> to vector<8x16xbf16>
    %349 = tpu.concatenate %336, %303 in 1 : vector<8x8xf32>, vector<8x8xf32> -> vector<8x16xf32>
    %350 = arith.truncf %349 : vector<8x16xf32> to vector<8x16xbf16>
    %cst_107 = arith.constant dense<0.000000e+00> : vector<8x8xf32>
    %351 = tpu.matmul %348, %350, %cst_107 {dimension_numbers = #tpu.dot_dimension_numbers<[1], [1], [0], [0], [0, 0, 1, 0], [], []>} : vector<8x16xbf16>, vector<8x16xbf16>, vector<8x8xf32> -> vector<8x8xf32>
    %cst_108 = arith.constant dense<0xFF800000> : vector<8xf32>
    %352 = vector.multi_reduction <maximumf>, %351, %cst_108 [1] : vector<8x8xf32> to vector<8xf32>
    %353 = vector.shape_cast %352 : vector<8xf32> to vector<8x1xf32>
    %354 = vector.broadcast %353 : vector<8x1xf32> to vector<8x8xf32>
    %355 = arith.subf %351, %354 : vector<8x8xf32>
    %356 = math.exp %355 : vector<8x8xf32>
    %cst_109 = arith.constant dense<0.000000e+00> : vector<8xf32>
    %357 = vector.multi_reduction <add>, %356, %cst_109 [1] : vector<8x8xf32> to vector<8xf32>
    %358 = vector.shape_cast %357 : vector<8xf32> to vector<8x1xf32>
    %359 = tpu.reciprocal %358 {approx = true} : vector<8x1xf32> -> vector<8x1xf32>
    %360 = vector.broadcast %359 : vector<8x1xf32> to vector<8x8xf32>
    %361 = arith.mulf %356, %360 : vector<8x8xf32>
    %362 = arith.truncf %361 : vector<8x8xf32> to vector<8x8xbf16>
    %363 = arith.truncf %337 : vector<8x8xf32> to vector<8x8xbf16>
    %cst_110 = arith.constant dense<0.000000e+00> : vector<8x8xf32>
    %364 = tpu.matmul %362, %363, %cst_110 {dimension_numbers = #tpu.dot_dimension_numbers<[1], [0], [0], [1], [0, 0, 1, 1], [], []>} : vector<8x8xbf16>, vector<8x8xbf16>, vector<8x8xf32> -> vector<8x8xf32>
    %c0_111 = arith.constant 0 : index
    %c8_112 = arith.constant 8 : index
    %365 = vector.load %arg14[%c0_111, %c8_112] : memref<16x32xf32, #tpu.memory_space<vmem>>, vector<8x8xf32>
    tpu.vector_store %arg14[%c0_111, %c8_112], %364 {strides = array<i32>} : memref<16x32xf32, #tpu.memory_space<vmem>>, vector<8x8xf32>,
    %366 = vector.extract_strided_slice %178 {offsets = [0, 16], sizes = [8, 8], strides = [1, 1]} : vector<16x32xf32> to vector<8x8xf32>
    %367 = vector.extract_strided_slice %240 {offsets = [0, 16], sizes = [8, 8], strides = [1, 1]} : vector<16x32xf32> to vector<8x8xf32>
    %368 = vector.extract_strided_slice %292 {offsets = [0, 16], sizes = [8, 8], strides = [1, 1]} : vector<16x32xf32> to vector<8x8xf32>
    %369 = vector.extract_strided_slice %125 {offsets = [0, 8], sizes = [8, 4], strides = [1, 1]} : vector<16x16xf32> to vector<8x4xf32>
    %370 = vector.extract_strided_slice %126 {offsets = [0, 8], sizes = [8, 4], strides = [1, 1]} : vector<16x16xf32> to vector<8x4xf32>
    %371 = arith.mulf %369, %293 : vector<8x4xf32>
    %372 = arith.mulf %370, %294 : vector<8x4xf32>
    %373 = arith.subf %371, %372 : vector<8x4xf32>
    %374 = arith.mulf %369, %294 : vector<8x4xf32>
    %375 = arith.mulf %370, %293 : vector<8x4xf32>
    %376 = arith.addf %374, %375 : vector<8x4xf32>
    %377 = tpu.concatenate %373, %376 in 1 : vector<8x4xf32>, vector<8x4xf32> -> vector<8x8xf32>
    %378 = tpu.concatenate %366, %377 in 1 : vector<8x8xf32>, vector<8x8xf32> -> vector<8x16xf32>
    %379 = arith.truncf %378 : vector<8x16xf32> to vector<8x16xbf16>
    %380 = tpu.concatenate %367, %303 in 1 : vector<8x8xf32>, vector<8x8xf32> -> vector<8x16xf32>
    %381 = arith.truncf %380 : vector<8x16xf32> to vector<8x16xbf16>
    %cst_113 = arith.constant dense<0.000000e+00> : vector<8x8xf32>
    %382 = tpu.matmul %379, %381, %cst_113 {dimension_numbers = #tpu.dot_dimension_numbers<[1], [1], [0], [0], [0, 0, 1, 0], [], []>} : vector<8x16xbf16>, vector<8x16xbf16>, vector<8x8xf32> -> vector<8x8xf32>
    %cst_114 = arith.constant dense<0xFF800000> : vector<8xf32>
    %383 = vector.multi_reduction <maximumf>, %382, %cst_114 [1] : vector<8x8xf32> to vector<8xf32>
    %384 = vector.shape_cast %383 : vector<8xf32> to vector<8x1xf32>
    %385 = vector.broadcast %384 : vector<8x1xf32> to vector<8x8xf32>
    %386 = arith.subf %382, %385 : vector<8x8xf32>
    %387 = math.exp %386 : vector<8x8xf32>
    %cst_115 = arith.constant dense<0.000000e+00> : vector<8xf32>
    %388 = vector.multi_reduction <add>, %387, %cst_115 [1] : vector<8x8xf32> to vector<8xf32>
    %389 = vector.shape_cast %388 : vector<8xf32> to vector<8x1xf32>
    %390 = tpu.reciprocal %389 {approx = true} : vector<8x1xf32> -> vector<8x1xf32>
    %391 = vector.broadcast %390 : vector<8x1xf32> to vector<8x8xf32>
    %392 = arith.mulf %387, %391 : vector<8x8xf32>
    %393 = arith.truncf %392 : vector<8x8xf32> to vector<8x8xbf16>
    %394 = arith.truncf %368 : vector<8x8xf32> to vector<8x8xbf16>
    %cst_116 = arith.constant dense<0.000000e+00> : vector<8x8xf32>
    %395 = tpu.matmul %393, %394, %cst_116 {dimension_numbers = #tpu.dot_dimension_numbers<[1], [0], [0], [1], [0, 0, 1, 1], [], []>} : vector<8x8xbf16>, vector<8x8xbf16>, vector<8x8xf32> -> vector<8x8xf32>
    %c0_117 = arith.constant 0 : index
    %c16 = arith.constant 16 : index
    %396 = vector.load %arg14[%c0_117, %c16] : memref<16x32xf32, #tpu.memory_space<vmem>>, vector<8x8xf32>
    tpu.vector_store %arg14[%c0_117, %c16], %395 {strides = array<i32>} : memref<16x32xf32, #tpu.memory_space<vmem>>, vector<8x8xf32>,
    %397 = vector.extract_strided_slice %178 {offsets = [0, 24], sizes = [8, 8], strides = [1, 1]} : vector<16x32xf32> to vector<8x8xf32>
    %398 = vector.extract_strided_slice %240 {offsets = [0, 24], sizes = [8, 8], strides = [1, 1]} : vector<16x32xf32> to vector<8x8xf32>
    %399 = vector.extract_strided_slice %292 {offsets = [0, 24], sizes = [8, 8], strides = [1, 1]} : vector<16x32xf32> to vector<8x8xf32>
    %400 = vector.extract_strided_slice %125 {offsets = [0, 12], sizes = [8, 4], strides = [1, 1]} : vector<16x16xf32> to vector<8x4xf32>
    %401 = vector.extract_strided_slice %126 {offsets = [0, 12], sizes = [8, 4], strides = [1, 1]} : vector<16x16xf32> to vector<8x4xf32>
    %402 = arith.mulf %400, %293 : vector<8x4xf32>
    %403 = arith.mulf %401, %294 : vector<8x4xf32>
    %404 = arith.subf %402, %403 : vector<8x4xf32>
    %405 = arith.mulf %400, %294 : vector<8x4xf32>
    %406 = arith.mulf %401, %293 : vector<8x4xf32>
    %407 = arith.addf %405, %406 : vector<8x4xf32>
    %408 = tpu.concatenate %404, %407 in 1 : vector<8x4xf32>, vector<8x4xf32> -> vector<8x8xf32>
    %409 = tpu.concatenate %397, %408 in 1 : vector<8x8xf32>, vector<8x8xf32> -> vector<8x16xf32>
    %410 = arith.truncf %409 : vector<8x16xf32> to vector<8x16xbf16>
    %411 = tpu.concatenate %398, %303 in 1 : vector<8x8xf32>, vector<8x8xf32> -> vector<8x16xf32>
    %412 = arith.truncf %411 : vector<8x16xf32> to vector<8x16xbf16>
    %cst_118 = arith.constant dense<0.000000e+00> : vector<8x8xf32>
    %413 = tpu.matmul %410, %412, %cst_118 {dimension_numbers = #tpu.dot_dimension_numbers<[1], [1], [0], [0], [0, 0, 1, 0], [], []>} : vector<8x16xbf16>, vector<8x16xbf16>, vector<8x8xf32> -> vector<8x8xf32>
    %cst_119 = arith.constant dense<0xFF800000> : vector<8xf32>
    %414 = vector.multi_reduction <maximumf>, %413, %cst_119 [1] : vector<8x8xf32> to vector<8xf32>
    %415 = vector.shape_cast %414 : vector<8xf32> to vector<8x1xf32>
    %416 = vector.broadcast %415 : vector<8x1xf32> to vector<8x8xf32>
    %417 = arith.subf %413, %416 : vector<8x8xf32>
    %418 = math.exp %417 : vector<8x8xf32>
    %cst_120 = arith.constant dense<0.000000e+00> : vector<8xf32>
    %419 = vector.multi_reduction <add>, %418, %cst_120 [1] : vector<8x8xf32> to vector<8xf32>
    %420 = vector.shape_cast %419 : vector<8xf32> to vector<8x1xf32>
    %421 = tpu.reciprocal %420 {approx = true} : vector<8x1xf32> -> vector<8x1xf32>
    %422 = vector.broadcast %421 : vector<8x1xf32> to vector<8x8xf32>
    %423 = arith.mulf %418, %422 : vector<8x8xf32>
    %424 = arith.truncf %423 : vector<8x8xf32> to vector<8x8xbf16>
    %425 = arith.truncf %399 : vector<8x8xf32> to vector<8x8xbf16>
    %cst_121 = arith.constant dense<0.000000e+00> : vector<8x8xf32>
    %426 = tpu.matmul %424, %425, %cst_121 {dimension_numbers = #tpu.dot_dimension_numbers<[1], [0], [0], [1], [0, 0, 1, 1], [], []>} : vector<8x8xbf16>, vector<8x8xbf16>, vector<8x8xf32> -> vector<8x8xf32>
    %c0_122 = arith.constant 0 : index
    %c24 = arith.constant 24 : index
    %427 = vector.load %arg14[%c0_122, %c24] : memref<16x32xf32, #tpu.memory_space<vmem>>, vector<8x8xf32>
    tpu.vector_store %arg14[%c0_122, %c24], %426 {strides = array<i32>} : memref<16x32xf32, #tpu.memory_space<vmem>>, vector<8x8xf32>,
    %428 = vector.extract_strided_slice %11 {offsets = [8, 0], sizes = [8, 4], strides = [1, 1]} : vector<16x4xf32> to vector<8x4xf32>
    %429 = vector.extract_strided_slice %12 {offsets = [8, 0], sizes = [8, 4], strides = [1, 1]} : vector<16x4xf32> to vector<8x4xf32>
    %430 = arith.mulf %428, %293 : vector<8x4xf32>
    %431 = arith.mulf %429, %294 : vector<8x4xf32>
    %432 = arith.subf %430, %431 : vector<8x4xf32>
    %433 = arith.mulf %428, %294 : vector<8x4xf32>
    %434 = arith.mulf %429, %293 : vector<8x4xf32>
    %435 = arith.addf %433, %434 : vector<8x4xf32>
    %436 = tpu.concatenate %432, %435 in 1 : vector<8x4xf32>, vector<8x4xf32> -> vector<8x8xf32>
    %437 = vector.extract_strided_slice %178 {offsets = [8, 0], sizes = [8, 8], strides = [1, 1]} : vector<16x32xf32> to vector<8x8xf32>
    %438 = vector.extract_strided_slice %240 {offsets = [8, 0], sizes = [8, 8], strides = [1, 1]} : vector<16x32xf32> to vector<8x8xf32>
    %439 = vector.extract_strided_slice %292 {offsets = [8, 0], sizes = [8, 8], strides = [1, 1]} : vector<16x32xf32> to vector<8x8xf32>
    %440 = vector.extract_strided_slice %125 {offsets = [8, 0], sizes = [8, 4], strides = [1, 1]} : vector<16x16xf32> to vector<8x4xf32>
    %441 = vector.extract_strided_slice %126 {offsets = [8, 0], sizes = [8, 4], strides = [1, 1]} : vector<16x16xf32> to vector<8x4xf32>
    %442 = arith.mulf %440, %293 : vector<8x4xf32>
    %443 = arith.mulf %441, %294 : vector<8x4xf32>
    %444 = arith.subf %442, %443 : vector<8x4xf32>
    %445 = arith.mulf %440, %294 : vector<8x4xf32>
    %446 = arith.mulf %441, %293 : vector<8x4xf32>
    %447 = arith.addf %445, %446 : vector<8x4xf32>
    %448 = tpu.concatenate %444, %447 in 1 : vector<8x4xf32>, vector<8x4xf32> -> vector<8x8xf32>
    %449 = tpu.concatenate %437, %448 in 1 : vector<8x8xf32>, vector<8x8xf32> -> vector<8x16xf32>
    %450 = arith.truncf %449 : vector<8x16xf32> to vector<8x16xbf16>
    %451 = tpu.concatenate %438, %436 in 1 : vector<8x8xf32>, vector<8x8xf32> -> vector<8x16xf32>
    %452 = arith.truncf %451 : vector<8x16xf32> to vector<8x16xbf16>
    %cst_123 = arith.constant dense<0.000000e+00> : vector<8x8xf32>
    %453 = tpu.matmul %450, %452, %cst_123 {dimension_numbers = #tpu.dot_dimension_numbers<[1], [1], [0], [0], [0, 0, 1, 0], [], []>} : vector<8x16xbf16>, vector<8x16xbf16>, vector<8x8xf32> -> vector<8x8xf32>
    %cst_124 = arith.constant dense<0xFF800000> : vector<8xf32>
    %454 = vector.multi_reduction <maximumf>, %453, %cst_124 [1] : vector<8x8xf32> to vector<8xf32>
    %455 = vector.shape_cast %454 : vector<8xf32> to vector<8x1xf32>
    %456 = vector.broadcast %455 : vector<8x1xf32> to vector<8x8xf32>
    %457 = arith.subf %453, %456 : vector<8x8xf32>
    %458 = math.exp %457 : vector<8x8xf32>
    %cst_125 = arith.constant dense<0.000000e+00> : vector<8xf32>
    %459 = vector.multi_reduction <add>, %458, %cst_125 [1] : vector<8x8xf32> to vector<8xf32>
    %460 = vector.shape_cast %459 : vector<8xf32> to vector<8x1xf32>
    %461 = tpu.reciprocal %460 {approx = true} : vector<8x1xf32> -> vector<8x1xf32>
    %462 = vector.broadcast %461 : vector<8x1xf32> to vector<8x8xf32>
    %463 = arith.mulf %458, %462 : vector<8x8xf32>
    %464 = arith.truncf %463 : vector<8x8xf32> to vector<8x8xbf16>
    %465 = arith.truncf %439 : vector<8x8xf32> to vector<8x8xbf16>
    %cst_126 = arith.constant dense<0.000000e+00> : vector<8x8xf32>
    %466 = tpu.matmul %464, %465, %cst_126 {dimension_numbers = #tpu.dot_dimension_numbers<[1], [0], [0], [1], [0, 0, 1, 1], [], []>} : vector<8x8xbf16>, vector<8x8xbf16>, vector<8x8xf32> -> vector<8x8xf32>
    %c8_127 = arith.constant 8 : index
    %c0_128 = arith.constant 0 : index
    %467 = vector.load %arg14[%c8_127, %c0_128] : memref<16x32xf32, #tpu.memory_space<vmem>>, vector<8x8xf32>
    tpu.vector_store %arg14[%c8_127, %c0_128], %466 {strides = array<i32>} : memref<16x32xf32, #tpu.memory_space<vmem>>, vector<8x8xf32>,
    %468 = vector.extract_strided_slice %178 {offsets = [8, 8], sizes = [8, 8], strides = [1, 1]} : vector<16x32xf32> to vector<8x8xf32>
    %469 = vector.extract_strided_slice %240 {offsets = [8, 8], sizes = [8, 8], strides = [1, 1]} : vector<16x32xf32> to vector<8x8xf32>
    %470 = vector.extract_strided_slice %292 {offsets = [8, 8], sizes = [8, 8], strides = [1, 1]} : vector<16x32xf32> to vector<8x8xf32>
    %471 = vector.extract_strided_slice %125 {offsets = [8, 4], sizes = [8, 4], strides = [1, 1]} : vector<16x16xf32> to vector<8x4xf32>
    %472 = vector.extract_strided_slice %126 {offsets = [8, 4], sizes = [8, 4], strides = [1, 1]} : vector<16x16xf32> to vector<8x4xf32>
    %473 = arith.mulf %471, %293 : vector<8x4xf32>
    %474 = arith.mulf %472, %294 : vector<8x4xf32>
    %475 = arith.subf %473, %474 : vector<8x4xf32>
    %476 = arith.mulf %471, %294 : vector<8x4xf32>
    %477 = arith.mulf %472, %293 : vector<8x4xf32>
    %478 = arith.addf %476, %477 : vector<8x4xf32>
    %479 = tpu.concatenate %475, %478 in 1 : vector<8x4xf32>, vector<8x4xf32> -> vector<8x8xf32>
    %480 = tpu.concatenate %468, %479 in 1 : vector<8x8xf32>, vector<8x8xf32> -> vector<8x16xf32>
    %481 = arith.truncf %480 : vector<8x16xf32> to vector<8x16xbf16>
    %482 = tpu.concatenate %469, %436 in 1 : vector<8x8xf32>, vector<8x8xf32> -> vector<8x16xf32>
    %483 = arith.truncf %482 : vector<8x16xf32> to vector<8x16xbf16>
    %cst_129 = arith.constant dense<0.000000e+00> : vector<8x8xf32>
    %484 = tpu.matmul %481, %483, %cst_129 {dimension_numbers = #tpu.dot_dimension_numbers<[1], [1], [0], [0], [0, 0, 1, 0], [], []>} : vector<8x16xbf16>, vector<8x16xbf16>, vector<8x8xf32> -> vector<8x8xf32>
    %cst_130 = arith.constant dense<0xFF800000> : vector<8xf32>
    %485 = vector.multi_reduction <maximumf>, %484, %cst_130 [1] : vector<8x8xf32> to vector<8xf32>
    %486 = vector.shape_cast %485 : vector<8xf32> to vector<8x1xf32>
    %487 = vector.broadcast %486 : vector<8x1xf32> to vector<8x8xf32>
    %488 = arith.subf %484, %487 : vector<8x8xf32>
    %489 = math.exp %488 : vector<8x8xf32>
    %cst_131 = arith.constant dense<0.000000e+00> : vector<8xf32>
    %490 = vector.multi_reduction <add>, %489, %cst_131 [1] : vector<8x8xf32> to vector<8xf32>
    %491 = vector.shape_cast %490 : vector<8xf32> to vector<8x1xf32>
    %492 = tpu.reciprocal %491 {approx = true} : vector<8x1xf32> -> vector<8x1xf32>
    %493 = vector.broadcast %492 : vector<8x1xf32> to vector<8x8xf32>
    %494 = arith.mulf %489, %493 : vector<8x8xf32>
    %495 = arith.truncf %494 : vector<8x8xf32> to vector<8x8xbf16>
    %496 = arith.truncf %470 : vector<8x8xf32> to vector<8x8xbf16>
    %cst_132 = arith.constant dense<0.000000e+00> : vector<8x8xf32>
    %497 = tpu.matmul %495, %496, %cst_132 {dimension_numbers = #tpu.dot_dimension_numbers<[1], [0], [0], [1], [0, 0, 1, 1], [], []>} : vector<8x8xbf16>, vector<8x8xbf16>, vector<8x8xf32> -> vector<8x8xf32>
    %c8_133 = arith.constant 8 : index
    %c8_134 = arith.constant 8 : index
    %498 = vector.load %arg14[%c8_133, %c8_134] : memref<16x32xf32, #tpu.memory_space<vmem>>, vector<8x8xf32>
    tpu.vector_store %arg14[%c8_133, %c8_134], %497 {strides = array<i32>} : memref<16x32xf32, #tpu.memory_space<vmem>>, vector<8x8xf32>,
    %499 = vector.extract_strided_slice %178 {offsets = [8, 16], sizes = [8, 8], strides = [1, 1]} : vector<16x32xf32> to vector<8x8xf32>
    %500 = vector.extract_strided_slice %240 {offsets = [8, 16], sizes = [8, 8], strides = [1, 1]} : vector<16x32xf32> to vector<8x8xf32>
    %501 = vector.extract_strided_slice %292 {offsets = [8, 16], sizes = [8, 8], strides = [1, 1]} : vector<16x32xf32> to vector<8x8xf32>
    %502 = vector.extract_strided_slice %125 {offsets = [8, 8], sizes = [8, 4], strides = [1, 1]} : vector<16x16xf32> to vector<8x4xf32>
    %503 = vector.extract_strided_slice %126 {offsets = [8, 8], sizes = [8, 4], strides = [1, 1]} : vector<16x16xf32> to vector<8x4xf32>
    %504 = arith.mulf %502, %293 : vector<8x4xf32>
    %505 = arith.mulf %503, %294 : vector<8x4xf32>
    %506 = arith.subf %504, %505 : vector<8x4xf32>
    %507 = arith.mulf %502, %294 : vector<8x4xf32>
    %508 = arith.mulf %503, %293 : vector<8x4xf32>
    %509 = arith.addf %507, %508 : vector<8x4xf32>
    %510 = tpu.concatenate %506, %509 in 1 : vector<8x4xf32>, vector<8x4xf32> -> vector<8x8xf32>
    %511 = tpu.concatenate %499, %510 in 1 : vector<8x8xf32>, vector<8x8xf32> -> vector<8x16xf32>
    %512 = arith.truncf %511 : vector<8x16xf32> to vector<8x16xbf16>
    %513 = tpu.concatenate %500, %436 in 1 : vector<8x8xf32>, vector<8x8xf32> -> vector<8x16xf32>
    %514 = arith.truncf %513 : vector<8x16xf32> to vector<8x16xbf16>
    %cst_135 = arith.constant dense<0.000000e+00> : vector<8x8xf32>
    %515 = tpu.matmul %512, %514, %cst_135 {dimension_numbers = #tpu.dot_dimension_numbers<[1], [1], [0], [0], [0, 0, 1, 0], [], []>} : vector<8x16xbf16>, vector<8x16xbf16>, vector<8x8xf32> -> vector<8x8xf32>
    %cst_136 = arith.constant dense<0xFF800000> : vector<8xf32>
    %516 = vector.multi_reduction <maximumf>, %515, %cst_136 [1] : vector<8x8xf32> to vector<8xf32>
    %517 = vector.shape_cast %516 : vector<8xf32> to vector<8x1xf32>
    %518 = vector.broadcast %517 : vector<8x1xf32> to vector<8x8xf32>
    %519 = arith.subf %515, %518 : vector<8x8xf32>
    %520 = math.exp %519 : vector<8x8xf32>
    %cst_137 = arith.constant dense<0.000000e+00> : vector<8xf32>
    %521 = vector.multi_reduction <add>, %520, %cst_137 [1] : vector<8x8xf32> to vector<8xf32>
    %522 = vector.shape_cast %521 : vector<8xf32> to vector<8x1xf32>
    %523 = tpu.reciprocal %522 {approx = true} : vector<8x1xf32> -> vector<8x1xf32>
    %524 = vector.broadcast %523 : vector<8x1xf32> to vector<8x8xf32>
    %525 = arith.mulf %520, %524 : vector<8x8xf32>
    %526 = arith.truncf %525 : vector<8x8xf32> to vector<8x8xbf16>
    %527 = arith.truncf %501 : vector<8x8xf32> to vector<8x8xbf16>
    %cst_138 = arith.constant dense<0.000000e+00> : vector<8x8xf32>
    %528 = tpu.matmul %526, %527, %cst_138 {dimension_numbers = #tpu.dot_dimension_numbers<[1], [0], [0], [1], [0, 0, 1, 1], [], []>} : vector<8x8xbf16>, vector<8x8xbf16>, vector<8x8xf32> -> vector<8x8xf32>
    %c8_139 = arith.constant 8 : index
    %c16_140 = arith.constant 16 : index
    %529 = vector.load %arg14[%c8_139, %c16_140] : memref<16x32xf32, #tpu.memory_space<vmem>>, vector<8x8xf32>
    tpu.vector_store %arg14[%c8_139, %c16_140], %528 {strides = array<i32>} : memref<16x32xf32, #tpu.memory_space<vmem>>, vector<8x8xf32>,
    %530 = vector.extract_strided_slice %178 {offsets = [8, 24], sizes = [8, 8], strides = [1, 1]} : vector<16x32xf32> to vector<8x8xf32>
    %531 = vector.extract_strided_slice %240 {offsets = [8, 24], sizes = [8, 8], strides = [1, 1]} : vector<16x32xf32> to vector<8x8xf32>
    %532 = vector.extract_strided_slice %292 {offsets = [8, 24], sizes = [8, 8], strides = [1, 1]} : vector<16x32xf32> to vector<8x8xf32>
    %533 = vector.extract_strided_slice %125 {offsets = [8, 12], sizes = [8, 4], strides = [1, 1]} : vector<16x16xf32> to vector<8x4xf32>
    %534 = vector.extract_strided_slice %126 {offsets = [8, 12], sizes = [8, 4], strides = [1, 1]} : vector<16x16xf32> to vector<8x4xf32>
    %535 = arith.mulf %533, %293 : vector<8x4xf32>
    %536 = arith.mulf %534, %294 : vector<8x4xf32>
    %537 = arith.subf %535, %536 : vector<8x4xf32>
    %538 = arith.mulf %533, %294 : vector<8x4xf32>
    %539 = arith.mulf %534, %293 : vector<8x4xf32>
    %540 = arith.addf %538, %539 : vector<8x4xf32>
    %541 = tpu.concatenate %537, %540 in 1 : vector<8x4xf32>, vector<8x4xf32> -> vector<8x8xf32>
    %542 = tpu.concatenate %530, %541 in 1 : vector<8x8xf32>, vector<8x8xf32> -> vector<8x16xf32>
    %543 = arith.truncf %542 : vector<8x16xf32> to vector<8x16xbf16>
    %544 = tpu.concatenate %531, %436 in 1 : vector<8x8xf32>, vector<8x8xf32> -> vector<8x16xf32>
    %545 = arith.truncf %544 : vector<8x16xf32> to vector<8x16xbf16>
    %cst_141 = arith.constant dense<0.000000e+00> : vector<8x8xf32>
    %546 = tpu.matmul %543, %545, %cst_141 {dimension_numbers = #tpu.dot_dimension_numbers<[1], [1], [0], [0], [0, 0, 1, 0], [], []>} : vector<8x16xbf16>, vector<8x16xbf16>, vector<8x8xf32> -> vector<8x8xf32>
    %cst_142 = arith.constant dense<0xFF800000> : vector<8xf32>
    %547 = vector.multi_reduction <maximumf>, %546, %cst_142 [1] : vector<8x8xf32> to vector<8xf32>
    %548 = vector.shape_cast %547 : vector<8xf32> to vector<8x1xf32>
    %549 = vector.broadcast %548 : vector<8x1xf32> to vector<8x8xf32>
    %550 = arith.subf %546, %549 : vector<8x8xf32>
    %551 = math.exp %550 : vector<8x8xf32>
    %cst_143 = arith.constant dense<0.000000e+00> : vector<8xf32>
    %552 = vector.multi_reduction <add>, %551, %cst_143 [1] : vector<8x8xf32> to vector<8xf32>
    %553 = vector.shape_cast %552 : vector<8xf32> to vector<8x1xf32>
    %554 = tpu.reciprocal %553 {approx = true} : vector<8x1xf32> -> vector<8x1xf32>
    %555 = vector.broadcast %554 : vector<8x1xf32> to vector<8x8xf32>
    %556 = arith.mulf %551, %555 : vector<8x8xf32>
    %557 = arith.truncf %556 : vector<8x8xf32> to vector<8x8xbf16>
    %558 = arith.truncf %532 : vector<8x8xf32> to vector<8x8xbf16>
    %cst_144 = arith.constant dense<0.000000e+00> : vector<8x8xf32>
    %559 = tpu.matmul %557, %558, %cst_144 {dimension_numbers = #tpu.dot_dimension_numbers<[1], [0], [0], [1], [0, 0, 1, 1], [], []>} : vector<8x8xbf16>, vector<8x8xbf16>, vector<8x8xf32> -> vector<8x8xf32>
    %c8_145 = arith.constant 8 : index
    %c24_146 = arith.constant 24 : index
    %560 = vector.load %arg14[%c8_145, %c24_146] : memref<16x32xf32, #tpu.memory_space<vmem>>, vector<8x8xf32>
    tpu.vector_store %arg14[%c8_145, %c24_146], %559 {strides = array<i32>} : memref<16x32xf32, #tpu.memory_space<vmem>>, vector<8x8xf32>,
    %c0_147 = arith.constant 0 : index
    %c0_148 = arith.constant 0 : index
    %561 = vector.load %arg14[%c0_147, %c0_148] : memref<16x32xf32, #tpu.memory_space<vmem>>, vector<16x32xf32>
    %562 = arith.truncf %561 : vector<16x32xf32> to vector<16x32xbf16>
    %c0_149 = arith.constant 0 : index
    %c0_150 = arith.constant 0 : index
    %563 = vector.load %arg9[%c0_149, %c0_150] : memref<32x256xbf16, #tpu.memory_space<vmem>>, vector<32x256xbf16>
    %cst_151 = arith.constant dense<0.000000e+00> : vector<16x256xf32>
    %564 = tpu.matmul %562, %563, %cst_151 {dimension_numbers = #tpu.dot_dimension_numbers<[1], [0], [0], [1], [0, 0, 1, 1], [], []>} : vector<16x32xbf16>, vector<32x256xbf16>, vector<16x256xf32> -> vector<16x256xf32>
    %c0_152 = arith.constant 0 : index
    %c0_153 = arith.constant 0 : index
    %565 = vector.load %arg10[%c0_152, %c0_153] : memref<1x256xf32, #tpu.memory_space<vmem>>, vector<1x256xf32>
    %566 = vector.broadcast %565 : vector<1x256xf32> to vector<16x256xf32>
    %567 = arith.addf %564, %566 : vector<16x256xf32>
    %568 = vector.extract_strided_slice %567 {offsets = [0, 0], sizes = [16, 8], strides = [1, 1]} : vector<16x256xf32> to vector<16x8xf32>
    %569 = vector.extract_strided_slice %567 {offsets = [0, 128], sizes = [16, 16], strides = [1, 1]} : vector<16x256xf32> to vector<16x16xf32>
    %c10 = arith.constant 10 : index
    %570 = memref.load %arg1[%c10] : memref<12xf32, #tpu.memory_space<smem>>
    %c11 = arith.constant 11 : index
    %571 = memref.load %arg1[%c11] : memref<12xf32, #tpu.memory_space<smem>>
    %572 = math.cos %568 : vector<16x8xf32>
    %573 = vector.broadcast %570 : f32 to vector<16x8xf32>
    %574 = arith.mulf %573, %572 : vector<16x8xf32>
    %575 = math.sin %568 : vector<16x8xf32>
    %576 = vector.broadcast %570 : f32 to vector<16x8xf32>
    %577 = arith.mulf %576, %575 : vector<16x8xf32>
    %cst_154 = arith.constant 5.000000e-01 : f32
    %578 = vector.broadcast %cst_154 : f32 to vector<16x16xf32>
    %579 = arith.mulf %578, %569 : vector<16x16xf32>
    %cst_155 = arith.constant 0.707106769 : f32
    %580 = vector.broadcast %cst_155 : f32 to vector<16x16xf32>
    %581 = arith.mulf %569, %580 : vector<16x16xf32>
    %cst_156 = arith.constant 0.000000e+00 : f32
    %582 = vector.broadcast %cst_156 : f32 to vector<16x16xf32>
    %583 = arith.cmpf oge, %581, %582 : vector<16x16xf32>
    %cst_157 = arith.constant 1.000000e+00 : f32
    %cst_158 = arith.constant -1.000000e+00 : f32
    %584 = vector.broadcast %cst_157 : f32 to vector<16x16xf32>
    %585 = vector.broadcast %cst_158 : f32 to vector<16x16xf32>
    %586 = arith.select %583, %584, %585 : vector<16x16xi1>, vector<16x16xf32>
    %587 = math.absf %581 : vector<16x16xf32>
    %cst_159 = arith.constant 0.327591091 : f32
    %588 = vector.broadcast %cst_159 : f32 to vector<16x16xf32>
    %589 = arith.mulf %588, %587 : vector<16x16xf32>
    %cst_160 = arith.constant 1.000000e+00 : f32
    %590 = vector.broadcast %cst_160 : f32 to vector<16x16xf32>
    %591 = arith.addf %590, %589 : vector<16x16xf32>
    %cst_161 = arith.constant 1.000000e+00 : f32
    %592 = vector.broadcast %cst_161 : f32 to vector<16x16xf32>
    %593 = arith.divf %592, %591 : vector<16x16xf32>
    %cst_162 = arith.constant 1.06140542 : f32
    %594 = vector.broadcast %cst_162 : f32 to vector<16x16xf32>
    %595 = arith.mulf %594, %593 : vector<16x16xf32>
    %cst_163 = arith.constant -1.45315206 : f32
    %596 = vector.broadcast %cst_163 : f32 to vector<16x16xf32>
    %597 = arith.addf %595, %596 : vector<16x16xf32>
    %598 = arith.mulf %597, %593 : vector<16x16xf32>
    %cst_164 = arith.constant 1.42141378 : f32
    %599 = vector.broadcast %cst_164 : f32 to vector<16x16xf32>
    %600 = arith.addf %598, %599 : vector<16x16xf32>
    %601 = arith.mulf %600, %593 : vector<16x16xf32>
    %cst_165 = arith.constant -0.284496725 : f32
    %602 = vector.broadcast %cst_165 : f32 to vector<16x16xf32>
    %603 = arith.addf %601, %602 : vector<16x16xf32>
    %604 = arith.mulf %603, %593 : vector<16x16xf32>
    %cst_166 = arith.constant 0.254829586 : f32
    %605 = vector.broadcast %cst_166 : f32 to vector<16x16xf32>
    %606 = arith.addf %604, %605 : vector<16x16xf32>
    %607 = arith.mulf %606, %593 : vector<16x16xf32>
    %cst_167 = arith.constant 0.000000e+00 : f32
    %608 = vector.broadcast %cst_167 : f32 to vector<16x16xf32>
    %609 = arith.subf %608, %587 : vector<16x16xf32>
    %610 = arith.mulf %609, %587 : vector<16x16xf32>
    %611 = math.exp %610 : vector<16x16xf32>
    %612 = arith.mulf %607, %611 : vector<16x16xf32>
    %cst_168 = arith.constant 1.000000e+00 : f32
    %613 = vector.broadcast %cst_168 : f32 to vector<16x16xf32>
    %614 = arith.subf %613, %612 : vector<16x16xf32>
    %615 = arith.mulf %586, %614 : vector<16x16xf32>
    %cst_169 = arith.constant 1.000000e+00 : f32
    %616 = vector.broadcast %cst_169 : f32 to vector<16x16xf32>
    %617 = arith.addf %616, %615 : vector<16x16xf32>
    %618 = arith.mulf %579, %617 : vector<16x16xf32>
    %619 = vector.broadcast %571 : f32 to vector<16x16xf32>
    %620 = arith.mulf %619, %618 : vector<16x16xf32>
    %621 = tpu.concatenate %574, %577, %620 in 1 : vector<16x8xf32>, vector<16x8xf32>, vector<16x16xf32> -> vector<16x32xf32>
    %622 = vector.shape_cast %621 : vector<16x32xf32> to vector<2x8x32xf32>
    %c0_170 = arith.constant 0 : index
    %c0_171 = arith.constant 0 : index
    %c0_172 = arith.constant 0 : index
    %623 = vector.load %arg13[%c0_170, %c0_171, %c0_172] : memref<2x8x32xf32, #tpu.memory_space<vmem>>, vector<2x8x32xf32>
    tpu.vector_store %arg13[%c0_170, %c0_171, %c0_172], %622 {strides = array<i32>} : memref<2x8x32xf32, #tpu.memory_space<vmem>>, vector<2x8x32xf32>,
    return
  }
  func.func @transform_0(%arg0: i32) -> i32 {
    %c0_i32 = arith.constant 0 : i32
    %c0_i32_0 = arith.constant 0 : i32
    return %c0_i32 : i32
  }
  func.func @transform_1(%arg0: i32) -> (i32, i32, i32) {
    %c0_i32 = arith.constant 0 : i32
    %c0_i32_0 = arith.constant 0 : i32
    %c0_i32_1 = arith.constant 0 : i32
    return %arg0, %c0_i32, %c0_i32_0 : i32, i32, i32
  }
  func.func @transform_2(%arg0: i32) -> (i32, i32) {
    %c0_i32 = arith.constant 0 : i32
    %c0_i32_0 = arith.constant 0 : i32
    %c0_i32_1 = arith.constant 0 : i32
    return %c0_i32, %c0_i32_0 : i32, i32
  }
  func.func @transform_3(%arg0: i32) -> (i32, i32) {
    %c0_i32 = arith.constant 0 : i32
    %c0_i32_0 = arith.constant 0 : i32
    %c0_i32_1 = arith.constant 0 : i32
    return %c0_i32, %c0_i32_0 : i32, i32
  }
  func.func @transform_4(%arg0: i32) -> (i32, i32) {
    %c0_i32 = arith.constant 0 : i32
    %c0_i32_0 = arith.constant 0 : i32
    %c0_i32_1 = arith.constant 0 : i32
    return %c0_i32, %c0_i32_0 : i32, i32
  }
  func.func @transform_5(%arg0: i32) -> (i32, i32) {
    %c0_i32 = arith.constant 0 : i32
    %c0_i32_0 = arith.constant 0 : i32
    %c0_i32_1 = arith.constant 0 : i32
    return %c0_i32, %c0_i32_0 : i32, i32
  }
  func.func @transform_6(%arg0: i32) -> (i32, i32) {
    %c0_i32 = arith.constant 0 : i32
    %c0_i32_0 = arith.constant 0 : i32
    %c0_i32_1 = arith.constant 0 : i32
    return %c0_i32, %c0_i32_0 : i32, i32
  }
  func.func @transform_7(%arg0: i32) -> (i32, i32) {
    %c0_i32 = arith.constant 0 : i32
    %c0_i32_0 = arith.constant 0 : i32
    %c0_i32_1 = arith.constant 0 : i32
    return %c0_i32, %c0_i32_0 : i32, i32
  }
  func.func @transform_8(%arg0: i32) -> (i32, i32) {
    %c0_i32 = arith.constant 0 : i32
    %c0_i32_0 = arith.constant 0 : i32
    %c0_i32_1 = arith.constant 0 : i32
    return %c0_i32, %c0_i32_0 : i32, i32
  }
  func.func @transform_9(%arg0: i32) -> (i32, i32) {
    %c0_i32 = arith.constant 0 : i32
    %c0_i32_0 = arith.constant 0 : i32
    %c0_i32_1 = arith.constant 0 : i32
    return %c0_i32, %c0_i32_0 : i32, i32
  }
  func.func @transform_10(%arg0: i32) -> (i32, i32) {
    %c0_i32 = arith.constant 0 : i32
    %c0_i32_0 = arith.constant 0 : i32
    %c0_i32_1 = arith.constant 0 : i32
    return %c0_i32, %c0_i32_0 : i32, i32
  }
  func.func @transform_11(%arg0: i32) -> (i32, i32) {
    %c0_i32 = arith.constant 0 : i32
    %c0_i32_0 = arith.constant 0 : i32
    %c0_i32_1 = arith.constant 0 : i32
    return %c0_i32, %c0_i32_0 : i32, i32
  }
  func.func @transform_12(%arg0: i32) -> (i32, i32, i32) {
    %c0_i32 = arith.constant 0 : i32
    %c0_i32_0 = arith.constant 0 : i32
    %c0_i32_1 = arith.constant 0 : i32
    return %arg0, %c0_i32, %c0_i32_0 : i32, i32, i32
  }
}

</mosaic_0001>

<llo_original>
// kernel: mla_forward.1
$region0: #{mla_forward.1}
  #allocation0 [shape = 'u32[]', space=smem, size = 0x4, offset = 0x4, fixed_abs, tag = 'smem constant byte address 0x4 - core index']
  #allocation1 [shape = 'u32[144,128]{1,0:T(1,128)}', space=vmem, size = 0x12000, scoped, tag = 'internal scratch']
  #allocation2 [shape = 'f32[16,32]{1,0:T(8,128)}', space=vmem, size = 0x2000, scoped, tag = 'scratch operand']
  %s0 = inlined_call_operand.vmem [shape: f32[12], index: 0, kind: input, shape index: {}]
  %s1 = inlined_call_operand.vmem [shape: bf16[2,8,32], index: 1, kind: input, shape index: {}]
  %s2 = inlined_call_operand.hbm [shape: bf16[32,768], index: 2, kind: input, shape index: {}]
  %s3 = inlined_call_operand.hbm [shape: f32[1,768], index: 3, kind: input, shape index: {}]
  %s4 = inlined_call_operand.vmem [shape: bf16[16,512], index: 4, kind: input, shape index: {}]
  %s5 = inlined_call_operand.hbm [shape: f32[1,512], index: 5, kind: input, shape index: {}]
  %s6 = inlined_call_operand.vmem [shape: bf16[16,512], index: 6, kind: input, shape index: {}]
  %s7 = inlined_call_operand.hbm [shape: f32[1,512], index: 7, kind: input, shape index: {}]
  %s8 = inlined_call_operand.hbm [shape: bf16[32,256], index: 8, kind: input, shape index: {}]
  %s9 = inlined_call_operand.hbm [shape: f32[1,256], index: 9, kind: input, shape index: {}]
  %s10 = inlined_call_operand.vmem [shape: f32[8,4], index: 10, kind: input, shape index: {}]
  %s11 = inlined_call_operand.vmem [shape: f32[8,4], index: 11, kind: input, shape index: {}]
  %s12 = inlined_call_operand.hbm [shape: f32[2,8,32], index: 12, kind: output, shape index: {}]
  %s13 = sld [smem:[#allocation0]]
  $region86: #{mla_forward.1} parent=0
    _
  %s15 = ssub.s32 1, %s13
  %s16 = scalar_select 0, %s15, %s13
  $region1: #{mla_forward.1} parent=0
    #allocation3 [shape = 'u8[512]{0}', space=smem, size = 0x200, scoped, tag = 'input window, operand 0, single buffered']
    #allocation4 [shape = 's32[1]{0}', space=sflag, size = 0x4, scoped, tag = 'scoped memory for mla_forward.1']
    #allocation5 [shape = 's32[1]{0}', space=sflag, size = 0x4, scoped, tag = 'scoped memory for mla_forward.1']
    #allocation6 [shape = 's32[1]{0}', space=sflag, size = 0x4, scoped, tag = 'scoped memory for mla_forward.1']
    #allocation7 [shape = 'u8[49152]{0}', space=vmem, size = 0xc000, scoped, tag = 'input window, operand 2, single buffered']
    #allocation8 [shape = 'u8[3072]{0}', space=vmem, size = 0xc00, scoped, tag = 'input window, operand 3, single buffered']
    #allocation9 [shape = 's32[1]{0}', space=sflag, size = 0x4, scoped, tag = 'scoped memory for mla_forward.1']
    #allocation10 [shape = 'u8[2048]{0}', space=vmem, size = 0x800, scoped, tag = 'input window, operand 5, single buffered']
    #allocation11 [shape = 'u8[2048]{0}', space=vmem, size = 0x800, scoped, tag = 'input window, operand 7, single buffered']
    #allocation12 [shape = 's32[1]{0}', space=sflag, size = 0x4, scoped, tag = 'scoped memory for mla_forward.1']
    #allocation13 [shape = 'u8[16384]{0}', space=vmem, size = 0x4000, scoped, tag = 'input window, operand 8, single buffered']
    #allocation14 [shape = 'u8[1024]{0}', space=vmem, size = 0x400, scoped, tag = 'input window, operand 9, single buffered']
    #allocation15 [shape = 's32[1]{0}', space=sflag, size = 0x4, scoped, tag = 'scoped memory for mla_forward.1']
    #allocation16 [shape = 'u8[8192]{0}', space=vmem, size = 0x2000, scoped, tag = 'output window, operand 0, single buffered']
    %17 = vsyncpa [#allocation6], 0
    %18 = vsyncpa [#allocation4], 0
    %19 = vsyncpa [#allocation9], 0
    %20 = vsyncpa [#allocation12], 0
    %21 = vsyncpa [#allocation15], 0
    %22 = vsyncpa [#allocation5], 0
    // Predicated region
    $region2: #{mla_forward.1} parent=1 // pred_check
      _
    $region3: #{mla_forward.1} parent=1 // pred_check_branch
      %24 = sbr.rel (0) target = $region5
    $region4: #{mla_forward.1} parent=1 // pred_region
      %s26 = ssub.s32 16, 16
      %27 = vsyncadd [#allocation6], %s26
      %s29 = sshll.u32 %s0, 4
      %s30 = int_to_ptr.vmem [resolvable:$true] %s29
      %32 = dma.vmem_to_smem %s30, 16, [#allocation3], [#allocation6]
    $region5: #{mla_forward.1} parent=1 // pred_fallthru
      _
    // Predicated region
    $region6: #{mla_forward.1} parent=1 // pred_check
      _
    $region7: #{mla_forward.1} parent=1 // pred_check_branch
      %34 = sbr.rel (0) target = $region9
    $region8: #{mla_forward.1} parent=1 // pred_region
      _
    $region9: #{mla_forward.1} parent=1 // pred_fallthru
      _
    // Predicated region
    $region10: #{mla_forward.1} parent=1 // pred_check
      _
    $region11: #{mla_forward.1} parent=1 // pred_check_branch
      %36 = sbr.rel (0) target = $region13
    $region12: #{mla_forward.1} parent=1 // pred_region
      %s38 = ssub.s32 1536, 1536
      %39 = vsyncadd [#allocation4], %s38
      %s40 = sshll.u32 [#allocation7], 4
      %s41 = int_to_ptr.vmem [resolvable:$true] %s40
      %46 = dma.hbm_to_vmem [thread:$0]  %s2, 1536, %s41, [#allocation4], 384, 384, 24
    $region13: #{mla_forward.1} parent=1 // pred_fallthru
      _
    // Predicated region
    $region14: #{mla_forward.1} parent=1 // pred_check
      _
    $region15: #{mla_forward.1} parent=1 // pred_check_branch
      %48 = sbr.rel (0) target = $region17
    $region16: #{mla_forward.1} parent=1 // pred_region
      %s50 = ssub.s32 96, 96
      %51 = vsyncadd [#allocation9], %s50
      %s53 = sshll.u32 [#allocation8], 4
      %s54 = int_to_ptr.vmem [resolvable:$true] %s53
      %56 = dma.hbm_to_vmem [thread:$0]  %s3, 96, %s54, [#allocation9]
    $region17: #{mla_forward.1} parent=1 // pred_fallthru
      _
    // Predicated region
    $region18: #{mla_forward.1} parent=1 // pred_check
      _
    $region19: #{mla_forward.1} parent=1 // pred_check_branch
      %58 = sbr.rel (0) target = $region21
    $region20: #{mla_forward.1} parent=1 // pred_region
      _
    $region21: #{mla_forward.1} parent=1 // pred_fallthru
      _
    // Predicated region
    $region22: #{mla_forward.1} parent=1 // pred_check
      _
    $region23: #{mla_forward.1} parent=1 // pred_check_branch
      %60 = sbr.rel (0) target = $region25
    $region24: #{mla_forward.1} parent=1 // pred_region
      %s62 = ssub.s32 64, 64
      %63 = vsyncadd [#allocation9], %s62
      %s65 = sshll.u32 [#allocation10], 4
      %s66 = int_to_ptr.vmem [resolvable:$true] %s65
      %68 = dma.hbm_to_vmem [thread:$0]  %s5, 64, %s66, [#allocation9]
    $region25: #{mla_forward.1} parent=1 // pred_fallthru
      _
    // Predicated region
    $region26: #{mla_forward.1} parent=1 // pred_check
      _
    $region27: #{mla_forward.1} parent=1 // pred_check_branch
      %70 = sbr.rel (0) target = $region29
    $region28: #{mla_forward.1} parent=1 // pred_region
      _
    $region29: #{mla_forward.1} parent=1 // pred_fallthru
      _
    // Predicated region
    $region30: #{mla_forward.1} parent=1 // pred_check
      _
    $region31: #{mla_forward.1} parent=1 // pred_check_branch
      %72 = sbr.rel (0) target = $region33
    $region32: #{mla_forward.1} parent=1 // pred_region
      %s74 = ssub.s32 64, 64
      %75 = vsyncadd [#allocation12], %s74
      %s77 = sshll.u32 [#allocation11], 4
      %s78 = int_to_ptr.vmem [resolvable:$true] %s77
      %80 = dma.hbm_to_vmem [thread:$0]  %s7, 64, %s78, [#allocation12]
    $region33: #{mla_forward.1} parent=1 // pred_fallthru
      _
    // Predicated region
    $region34: #{mla_forward.1} parent=1 // pred_check
      _
    $region35: #{mla_forward.1} parent=1 // pred_check_branch
      %82 = sbr.rel (0) target = $region37
    $region36: #{mla_forward.1} parent=1 // pred_region
      %s84 = ssub.s32 512, 512
      %85 = vsyncadd [#allocation12], %s84
      %s86 = sshll.u32 [#allocation13], 4
      %s87 = int_to_ptr.vmem [resolvable:$true] %s86
      %92 = dma.hbm_to_vmem [thread:$0]  %s8, 512, %s87, [#allocation12], 128, 128, 8
    $region37: #{mla_forward.1} parent=1 // pred_fallthru
      _
    // Predicated region
    $region38: #{mla_forward.1} parent=1 // pred_check
      _
    $region39: #{mla_forward.1} parent=1 // pred_check_branch
      %94 = sbr.rel (0) target = $region41
    $region40: #{mla_forward.1} parent=1 // pred_region
      %s96 = ssub.s32 32, 32
      %97 = vsyncadd [#allocation15], %s96
      %s99 = sshll.u32 [#allocation14], 4
      %s100 = int_to_ptr.vmem [resolvable:$true] %s99
      %102 = dma.hbm_to_vmem [thread:$0]  %s9, 32, %s100, [#allocation15]
    $region41: #{mla_forward.1} parent=1 // pred_fallthru
      _
    // Predicated region
    $region42: #{mla_forward.1} parent=1 // pred_check
      _
    $region43: #{mla_forward.1} parent=1 // pred_check_branch
      %104 = sbr.rel (0) target = $region45
    $region44: #{mla_forward.1} parent=1 // pred_region
      _
    $region45: #{mla_forward.1} parent=1 // pred_fallthru
      _
    // Predicated region
    $region46: #{mla_forward.1} parent=1 // pred_check
      _
    $region47: #{mla_forward.1} parent=1 // pred_check_branch
      %106 = sbr.rel (0) target = $region49
    $region48: #{mla_forward.1} parent=1 // pred_region
      _
    $region49: #{mla_forward.1} parent=1 // pred_fallthru
      _
    // Predicated region
    $region50: #{mla_forward.1} parent=1 // pred_check
      _
    $region51: #{mla_forward.1} parent=1 // pred_check_branch
      %108 = sbr.rel (0) target = $region53
    $region52: #{mla_forward.1} parent=1 // pred_region
      %109 = dma.done [#allocation6], 16
    $region53: #{mla_forward.1} parent=1 // pred_fallthru
      _
    // Predicated region
    $region54: #{mla_forward.1} parent=1 // pred_check
      _
    $region55: #{mla_forward.1} parent=1 // pred_check_branch
      %111 = sbr.rel (0) target = $region57
    $region56: #{mla_forward.1} parent=1 // pred_region
      %112 = dma.done [#allocation4], 1536
    $region57: #{mla_forward.1} parent=1 // pred_fallthru
      _
    // Predicated region
    $region58: #{mla_forward.1} parent=1 // pred_check
      _
    $region59: #{mla_forward.1} parent=1 // pred_check_branch
      %114 = sbr.rel (0) target = $region61
    $region60: #{mla_forward.1} parent=1 // pred_region
      %115 = dma.done [#allocation9], 96
    $region61: #{mla_forward.1} parent=1 // pred_fallthru
      _
    // Predicated region
    $region62: #{mla_forward.1} parent=1 // pred_check
      _
    $region63: #{mla_forward.1} parent=1 // pred_check_branch
      %117 = sbr.rel (0) target = $region65
    $region64: #{mla_forward.1} parent=1 // pred_region
      %118 = dma.done [#allocation9], 64
    $region65: #{mla_forward.1} parent=1 // pred_fallthru
      _
    // Predicated region
    $region66: #{mla_forward.1} parent=1 // pred_check
      _
    $region67: #{mla_forward.1} parent=1 // pred_check_branch
      %120 = sbr.rel (0) target = $region69
    $region68: #{mla_forward.1} parent=1 // pred_region
      %121 = dma.done [#allocation12], 64
    $region69: #{mla_forward.1} parent=1 // pred_fallthru
      _
    // Predicated region
    $region70: #{mla_forward.1} parent=1 // pred_check
      _
    $region71: #{mla_forward.1} parent=1 // pred_check_branch
      %123 = sbr.rel (0) target = $region73
    $region72: #{mla_forward.1} parent=1 // pred_region
      %124 = dma.done [#allocation12], 512
    $region73: #{mla_forward.1} parent=1 // pred_fallthru
      _
    // Predicated region
    $region74: #{mla_forward.1} parent=1 // pred_check
      _
    $region75: #{mla_forward.1} parent=1 // pred_check_branch
      %126 = sbr.rel (0) target = $region77
    $region76: #{mla_forward.1} parent=1 // pred_region
      %127 = dma.done [#allocation15], 32
    $region77: #{mla_forward.1} parent=1 // pred_fallthru
      _
    %128 = sfence
    %v130 = vld [vmem:[%s1] sm:$0xf]
    %v131 = vld [vmem:[%s1 + $0x4] sm:$0xf]
    %v132 = vld [vmem:[#allocation7] sm:$0xff]
    %v133 = vld [vmem:[#allocation7 + $0x8] sm:$0xff]
    %v134 = vld [vmem:[#allocation7 + $0x10] sm:$0xff]
    %v135 = vld [vmem:[#allocation7 + $0x18] sm:$0xff]
    %v136 = vld [vmem:[#allocation7 + $0x20] sm:$0xff]
    %v137 = vld [vmem:[#allocation7 + $0x28] sm:$0xff]
    %v138 = vld [vmem:[#allocation7 + $0x30] sm:$0xff]
    %v139 = vld [vmem:[#allocation7 + $0x38] sm:$0xff]
    %v140 = vld [vmem:[#allocation7 + $0x40] sm:$0xff]
    %v141 = vld [vmem:[#allocation7 + $0x48] sm:$0xff]
    %v142 = vld [vmem:[#allocation7 + $0x50] sm:$0xff]
    %v143 = vld [vmem:[#allocation7 + $0x58] sm:$0xff]
    %v144 = vld [vmem:[#allocation8] sm:$0x3f]
    %v146 = vlaneseq
    %v147 = vshrl.u32 %v146, 7
    %v148 = vsub.s32 0, %v147
    %v149 = vrot.slane %v144, %v148
    %v150 = vlaneseq
    %v151 = vshrl.u32 %v150, 7
    %v152 = vsub.s32 1, %v151
    %v153 = vrot.slane %v144, %v152
    %v154 = vlaneseq
    %v155 = vshrl.u32 %v154, 7
    %v156 = vsub.s32 2, %v155
    %v157 = vrot.slane %v144, %v156
    %v158 = vlaneseq
    %v159 = vshrl.u32 %v158, 7
    %v160 = vsub.s32 3, %v159
    %v161 = vrot.slane %v144, %v160
    %v162 = vlaneseq
    %v163 = vshrl.u32 %v162, 7
    %v164 = vsub.s32 4, %v163
    %v165 = vrot.slane %v144, %v164
    %v166 = vlaneseq
    %v167 = vshrl.u32 %v166, 7
    %v168 = vsub.s32 5, %v167
    %v169 = vrot.slane %v144, %v168
    %v178 = vunpack.c.l.b16 %v130
    %v179 = vunpack.c.l.b16 %v131
    %v180 = vpack.c.b16 %v179, %v178
    %v193 = vunpack.c.l.b16 %v132
    %v194 = vunpack.c.h.b16 %v132
    %v195 = vunpack.c.l.b16 %v133
    %v196 = vunpack.c.h.b16 %v133
    %v197 = vunpack.c.l.b16 %v134
    %v198 = vunpack.c.h.b16 %v134
    %v199 = vunpack.c.l.b16 %v135
    %v200 = vunpack.c.h.b16 %v135
    %v201 = vunpack.c.l.b16 %v136
    %v202 = vunpack.c.h.b16 %v136
    %v203 = vunpack.c.l.b16 %v137
    %v204 = vunpack.c.h.b16 %v137
    %v205 = vunpack.c.l.b16 %v138
    %v206 = vunpack.c.h.b16 %v138
    %v207 = vunpack.c.l.b16 %v139
    %v208 = vunpack.c.h.b16 %v139
    %v209 = vunpack.c.l.b16 %v140
    %v210 = vunpack.c.h.b16 %v140
    %v211 = vunpack.c.l.b16 %v141
    %v212 = vunpack.c.h.b16 %v141
    %v213 = vunpack.c.l.b16 %v142
    %v214 = vunpack.c.h.b16 %v142
    %v215 = vunpack.c.l.b16 %v143
    %v216 = vunpack.c.h.b16 %v143
    %v217 = vpack.c.b16 %v199, %v193
    %v218 = vpack.c.b16 %v200, %v194
    %v219 = vpack.c.b16 %v201, %v195
    %v220 = vpack.c.b16 %v202, %v196
    %v221 = vpack.c.b16 %v203, %v197
    %v222 = vpack.c.b16 %v204, %v198
    %v223 = vpack.c.b16 %v211, %v205
    %v224 = vpack.c.b16 %v212, %v206
    %v225 = vpack.c.b16 %v213, %v207
    %v226 = vpack.c.b16 %v214, %v208
    %v227 = vpack.c.b16 %v215, %v209
    %v228 = vpack.c.b16 %v216, %v210
    %vm241 = vcmask 261120
    %v243 = vsel %vm241, %v180, 0
    %245 = vmatprep.subr.bf16.mxu0 %v218
    %246 = vmatpush1.bf16.msra.mxu0 %v217
    %247 = vmatprep.subr.bf16.mxu0 %v224
    %248 = vmatpush1.bf16.msra.mxu0 %v223
    %249 = vmatprep.subr.bf16.mxu0 0
    %250 = vmatpush1.bf16.msra.mxu0 0
    %251 = vmatprep.subr.bf16.mxu0 0
    %252 = vmatpush1.bf16.msra.mxu0 0
    %253 = vmatprep.subr.bf16.mxu0 0
    %254 = vmatpush1.bf16.msra.mxu0 0
    %255 = vmatprep.subr.bf16.mxu0 0
    %256 = vmatpush1.bf16.msra.mxu0 0
    %257 = vmatprep.subr.bf16.mxu0 0
    %258 = vmatpush1.bf16.msra.mxu0 0
    %259 = vmatprep.subr.bf16.mxu0 0
    %260 = vmatpush1.bf16.msra.mxu0 0
    %261 = vmatprep.subr.bf16.mxu0 0
    %262 = vmatpush1.bf16.msra.mxu0 0
    %263 = vmatprep.subr.bf16.mxu0 0
    %264 = vmatpush1.bf16.msra.mxu0 0
    %265 = vmatprep.subr.bf16.mxu0 0
    %266 = vmatpush1.bf16.msra.mxu0 0
    %267 = vmatprep.subr.bf16.mxu0 0
    %268 = vmatpush1.bf16.msra.mxu0 0
    %269 = vmatprep.subr.bf16.mxu0 0
    %270 = vmatpush1.bf16.msra.mxu0 0
    %271 = vmatprep.subr.bf16.mxu0 0
    %272 = vmatpush1.bf16.msra.mxu0 0
    %273 = vmatprep.subr.bf16.mxu0 0
    %274 = vmatpush1.bf16.msra.mxu0 0
    %275 = vmatprep.subr.bf16.mxu0 0
    %276 = vmatpush1.bf16.msra.mxu0 0
    %277 = vmatprep.mubr.bf16.mxu0 0
    %278 = vmatmul.mubr.bf16.gmra.mrb[0].mxu0 %v243
    %v279 = vpop.f32.mrb[0].mxu0
    %v280 = vadd.f32 %v149, %v279
    %v281 = vpop.f32.mrb[0].mxu0
    %v282 = vadd.f32 %v153, %v281
    %v283 = vpop.f32.mrb[0].mxu0
    %v284 = vadd.f32 %v149, %v283
    %v285 = vpop.f32.mrb[0].mxu0
    %v286 = vadd.f32 %v153, %v285
    %287 = vdwg.mxu0
    %288 = vmatprep.subr.bf16.mxu0 %v220
    %289 = vmatpush1.bf16.msra.mxu0 %v219
    %290 = vmatprep.subr.bf16.mxu0 %v226
    %291 = vmatpush1.bf16.msra.mxu0 %v225
    %292 = vmatprep.subr.bf16.mxu0 0
    %293 = vmatpush1.bf16.msra.mxu0 0
    %294 = vmatprep.subr.bf16.mxu0 0
    %295 = vmatpush1.bf16.msra.mxu0 0
    %296 = vmatprep.subr.bf16.mxu0 0
    %297 = vmatpush1.bf16.msra.mxu0 0
    %298 = vmatprep.subr.bf16.mxu0 0
    %299 = vmatpush1.bf16.msra.mxu0 0
    %300 = vmatprep.subr.bf16.mxu0 0
    %301 = vmatpush1.bf16.msra.mxu0 0
    %302 = vmatprep.subr.bf16.mxu0 0
    %303 = vmatpush1.bf16.msra.mxu0 0
    %304 = vmatprep.subr.bf16.mxu0 0
    %305 = vmatpush1.bf16.msra.mxu0 0
    %306 = vmatprep.subr.bf16.mxu0 0
    %307 = vmatpush1.bf16.msra.mxu0 0
    %308 = vmatprep.subr.bf16.mxu0 0
    %309 = vmatpush1.bf16.msra.mxu0 0
    %310 = vmatprep.subr.bf16.mxu0 0
    %311 = vmatpush1.bf16.msra.mxu0 0
    %312 = vmatprep.subr.bf16.mxu0 0
    %313 = vmatpush1.bf16.msra.mxu0 0
    %314 = vmatprep.subr.bf16.mxu0 0
    %315 = vmatpush1.bf16.msra.mxu0 0
    %316 = vmatprep.subr.bf16.mxu0 0
    %317 = vmatpush1.bf16.msra.mxu0 0
    %318 = vmatprep.subr.bf16.mxu0 0
    %319 = vmatpush1.bf16.msra.mxu0 0
    %320 = vmatprep.mubr.bf16.mxu0 0
    %321 = vmatmul.mubr.bf16.gmra.mrb[0].mxu0 %v243
    %v322 = vpop.f32.mrb[0].mxu0
    %v323 = vadd.f32 %v157, %v322
    %v324 = vpop.f32.mrb[0].mxu0
    %v325 = vadd.f32 %v161, %v324
    %v326 = vpop.f32.mrb[0].mxu0
    %v327 = vadd.f32 %v157, %v326
    %v328 = vpop.f32.mrb[0].mxu0
    %v329 = vadd.f32 %v161, %v328
    %330 = vdwg.mxu0
    %331 = vmatprep.subr.bf16.mxu0 %v222
    %332 = vmatpush1.bf16.msra.mxu0 %v221
    %333 = vmatprep.subr.bf16.mxu0 %v228
    %334 = vmatpush1.bf16.msra.mxu0 %v227
    %335 = vmatprep.subr.bf16.mxu0 0
    %336 = vmatpush1.bf16.msra.mxu0 0
    %337 = vmatprep.subr.bf16.mxu0 0
    %338 = vmatpush1.bf16.msra.mxu0 0
    %339 = vmatprep.subr.bf16.mxu0 0
    %340 = vmatpush1.bf16.msra.mxu0 0
    %341 = vmatprep.subr.bf16.mxu0 0
    %342 = vmatpush1.bf16.msra.mxu0 0
    %343 = vmatprep.subr.bf16.mxu0 0
    %344 = vmatpush1.bf16.msra.mxu0 0
    %345 = vmatprep.subr.bf16.mxu0 0
    %346 = vmatpush1.bf16.msra.mxu0 0
    %347 = vmatprep.subr.bf16.mxu0 0
    %348 = vmatpush1.bf16.msra.mxu0 0
    %349 = vmatprep.subr.bf16.mxu0 0
    %350 = vmatpush1.bf16.msra.mxu0 0
    %351 = vmatprep.subr.bf16.mxu0 0
    %352 = vmatpush1.bf16.msra.mxu0 0
    %353 = vmatprep.subr.bf16.mxu0 0
    %354 = vmatpush1.bf16.msra.mxu0 0
    %355 = vmatprep.subr.bf16.mxu0 0
    %356 = vmatpush1.bf16.msra.mxu0 0
    %357 = vmatprep.subr.bf16.mxu0 0
    %358 = vmatpush1.bf16.msra.mxu0 0
    %359 = vmatprep.subr.bf16.mxu0 0
    %360 = vmatpush1.bf16.msra.mxu0 0
    %361 = vmatprep.subr.bf16.mxu0 0
    %362 = vmatpush1.bf16.msra.mxu0 0
    %363 = vmatprep.mubr.bf16.mxu0 0
    %364 = vmatmul.mubr.bf16.gmra.mrb[0].mxu0 %v243
    %v365 = vpop.f32.mrb[0].mxu0
    %v366 = vadd.f32 %v165, %v365
    %v367 = vpop.f32.mrb[0].mxu0
    %v368 = vadd.f32 %v169, %v367
    %v369 = vpop.f32.mrb[0].mxu0
    %v370 = vadd.f32 %v165, %v369
    %v371 = vpop.f32.mrb[0].mxu0
    %v372 = vadd.f32 %v169, %v371
    %373 = vdwg.mxu0
    %s374 = sld [smem:[#allocation3]]
    %s375 = sld [smem:[#allocation3 + $0x1]]
    %v376 = vand.u32 2147483647, %v280
    %vm377 = vcmp.le.f32.partialorder %v376, 0.7853982
    %vm378 = vcmp.lt.s32.totalorder %v280, 0
    %v379 = vand.u32 %v280, 2139095040
    %v380 = vshrl.u32 %v379, 23
    %v381 = vsub.s32 %v380, 127
    %v382 = vand.u32 2147483647, %v280
    %v383 = vand.u32 %v382, 8388607
    %v384 = vor.u32 %v383, 8388608
    %v385 = vsub.s32 0, %v384
    %v386 = vadd.s32 %v381, 1
    %vm387 = vcmp.gt.s32.totalorder %v386, 0
    %v388 = vsel %vm387, %v386, 0
    %v389 = vshrl.u32 %v388, 5
    %v390 = vand.u32 %v388, 31
    %v391 = vsub.s32 32, %v390
    %v392 = vshrl.u32 683565275, %v391
    %v393 = vshll.u32 683565275, %v390
    %v394 = vshrl.u32 2475754826, %v391
    %v395 = vor.u32 %v393, %v394
    %v396 = vshll.u32 2475754826, %v390
    %v397 = vshrl.u32 2131351028, %v391
    %v398 = vor.u32 %v396, %v397
    %v399 = vshll.u32 2131351028, %v390
    %v400 = vshrl.u32 2102212464, %v391
    %v401 = vor.u32 %v399, %v400
    %v402 = vshll.u32 2102212464, %v390
    %v403 = vshrl.u32 920167782, %v391
    %v404 = vor.u32 %v402, %v403
    %v405 = vshll.u32 920167782, %v390
    %v406 = vshrl.u32 1326507024, %v391
    %v407 = vor.u32 %v405, %v406
    %vm408 = vcmp.lt.s32.totalorder %v389, 1
    %vm409 = vcmp.lt.s32.totalorder %v389, 2
    %vm410 = vcmp.lt.s32.totalorder %v389, 3
    %vm411 = vcmp.lt.s32.totalorder %v389, 4
    %v412 = vsel %vm408, %v392, %v395
    %v413 = vsel %vm411, %v401, 2102212464
    %v414 = vsel %vm410, %v398, %v413
    %v415 = vsel %vm409, %v412, %v414
    %v416 = vsel %vm408, %v395, %v398
    %v417 = vsel %vm411, %v404, 920167782
    %v418 = vsel %vm410, %v401, %v417
    %v419 = vsel %vm409, %v416, %v418
    %v420 = vsel %vm408, %v398, %v401
    %v421 = vsel %vm411, %v407, 1326507024
    %v422 = vsel %vm410, %v404, %v421
    %v423 = vsel %vm409, %v420, %v422
    %v424 = vshll.u32 %v384, 8
    %v425 = vmul.u32.u64.compose %v424, %v423
    %v426 = vextract.low.u32 %v425
    %v427 = vextract.high.u32 %v425
    %v428 = vmul.u32.u64.compose %v424, %v419
    %v429 = vextract.low.u32 %v428
    %v430 = vextract.high.u32 %v428
    %v431 = vmul.u32 %v424, %v415
    %v432 = vadd.s32 %v427, %v429
    %vm433 = vc.u32 %v427, %v429
    %v434 = vadd.s32 %v430, 1
    %v435 = vsel %vm433, %v434, %v430
    %v436 = vadd.s32 %v431, %v435
    %v437 = vadd.s32 %v436, 536870912
    %v438 = vshrl.u32 %v437, 30
    %v439 = vshll.u32 %v438, 30
    %v440 = vsub.s32 %v436, %v439
    %vm441 = vcmp.lt.s32.totalorder %v440, 0
    %v442 = vsub.s32 0, %v440
    %v443 = vsel %vm441, %v442, %v440
    %v444 = vclz %v443
    %v445 = vsub.s32 %v444, 2
    %vm446 = vcmp.gt.s32.totalorder 0, %v445
    %v447 = vsel %vm446, 0, %v445
    %v448 = vsub.s32 32, %v447
    %v449 = vshll.u32 %v440, %v447
    %v450 = vshrl.u32 %v432, %v448
    %v451 = vor.u32 %v449, %v450
    %v452 = vsub.s32 4294967266, %v447
    %v453 = vadd.s32 %v452, 127
    %v454 = vshll.u32 %v453, 23
    %v455 = vor.u32 4788187, %v454
    %v456 = vand.u32 2147483647, %v455
    %v458 = vcvt.s32.f32 %v451
    %v459 = vmul.f32 %v458, %v456
    %v460 = vxor.u32 %v459, 2147483648
    %v461 = vsel %vm378, %v460, %v459
    %v462 = vsub.s32 4, %v438
    %v463 = vsel %vm378, %v462, %v438
    %v464 = vsel %vm377, %v280, %v461
    %v465 = vsel %vm377, 0, %v463
    %v466 = vcosq.f32.pop %v464
    %v467 = vsinq.f32.pop %v464
    %vm468 = vweird.f32 %v280
    %v469 = vand.u32 %v465, 3
    %vm470 = vcmp.lt.s32.totalorder %v469, 2
    %vm471 = vcmp.eq.s32.totalorder %v469, 0
    %v472 = vxor.u32 %v467, 2147483648
    %v473 = vsel %vm471, %v466, %v472
    %vm474 = vcmp.eq.s32.totalorder %v469, 2
    %v475 = vxor.u32 %v466, 2147483648
    %v476 = vsel %vm474, %v475, %v467
    %v477 = vsel %vm470, %v473, %v476
    %v478 = vsel %vm468, nan, %v477
    %v479 = vand.u32 2147483647, %v284
    %vm480 = vcmp.le.f32.partialorder %v479, 0.7853982
    %vm481 = vcmp.lt.s32.totalorder %v284, 0
    %v482 = vand.u32 %v284, 2139095040
    %v483 = vshrl.u32 %v482, 23
    %v484 = vsub.s32 %v483, 127
    %v485 = vand.u32 2147483647, %v284
    %v486 = vand.u32 %v485, 8388607
    %v487 = vor.u32 %v486, 8388608
    %v488 = vsub.s32 0, %v487
    %v489 = vadd.s32 %v484, 1
    %vm490 = vcmp.gt.s32.totalorder %v489, 0
    %v491 = vsel %vm490, %v489, 0
    %v492 = vshrl.u32 %v491, 5
    %v493 = vand.u32 %v491, 31
    %v494 = vsub.s32 32, %v493
    %v495 = vshrl.u32 683565275, %v494
    %v496 = vshll.u32 683565275, %v493
    %v497 = vshrl.u32 2475754826, %v494
    %v498 = vor.u32 %v496, %v497
    %v499 = vshll.u32 2475754826, %v493
    %v500 = vshrl.u32 2131351028, %v494
    %v501 = vor.u32 %v499, %v500
    %v502 = vshll.u32 2131351028, %v493
    %v503 = vshrl.u32 2102212464, %v494
    %v504 = vor.u32 %v502, %v503
    %v505 = vshll.u32 2102212464, %v493
    %v506 = vshrl.u32 920167782, %v494
    %v507 = vor.u32 %v505, %v506
    %v508 = vshll.u32 920167782, %v493
    %v509 = vshrl.u32 1326507024, %v494
    %v510 = vor.u32 %v508, %v509
    %vm511 = vcmp.lt.s32.totalorder %v492, 1
    %vm512 = vcmp.lt.s32.totalorder %v492, 2
    %vm513 = vcmp.lt.s32.totalorder %v492, 3
    %vm514 = vcmp.lt.s32.totalorder %v492, 4
    %v515 = vsel %vm511, %v495, %v498
    %v516 = vsel %vm514, %v504, 2102212464
    %v517 = vsel %vm513, %v501, %v516
    %v518 = vsel %vm512, %v515, %v517
    %v519 = vsel %vm511, %v498, %v501
    %v520 = vsel %vm514, %v507, 920167782
    %v521 = vsel %vm513, %v504, %v520
    %v522 = vsel %vm512, %v519, %v521
    %v523 = vsel %vm511, %v501, %v504
    %v524 = vsel %vm514, %v510, 1326507024
    %v525 = vsel %vm513, %v507, %v524
    %v526 = vsel %vm512, %v523, %v525
    %v527 = vshll.u32 %v487, 8
    %v528 = vmul.u32.u64.compose %v527, %v526
    %v529 = vextract.low.u32 %v528
    %v530 = vextract.high.u32 %v528
    %v531 = vmul.u32.u64.compose %v527, %v522
    %v532 = vextract.low.u32 %v531
    %v533 = vextract.high.u32 %v531
    %v534 = vmul.u32 %v527, %v518
    %v535 = vadd.s32 %v530, %v532
    %vm536 = vc.u32 %v530, %v532
    %v537 = vadd.s32 %v533, 1
    %v538 = vsel %vm536, %v537, %v533
    %v539 = vadd.s32 %v534, %v538
    %v540 = vadd.s32 %v539, 536870912
    %v541 = vshrl.u32 %v540, 30
    %v542 = vshll.u32 %v541, 30
    %v543 = vsub.s32 %v539, %v542
    %vm544 = vcmp.lt.s32.totalorder %v543, 0
    %v545 = vsub.s32 0, %v543
    %v546 = vsel %vm544, %v545, %v543
    %v547 = vclz %v546
    %v548 = vsub.s32 %v547, 2
    %vm549 = vcmp.gt.s32.totalorder 0, %v548
    %v550 = vsel %vm549, 0, %v548
    %v551 = vsub.s32 32, %v550
    %v552 = vshll.u32 %v543, %v550
    %v553 = vshrl.u32 %v535, %v551
    %v554 = vor.u32 %v552, %v553
    %v555 = vsub.s32 4294967266, %v550
    %v556 = vadd.s32 %v555, 127
    %v557 = vshll.u32 %v556, 23
    %v558 = vor.u32 4788187, %v557
    %v559 = vand.u32 2147483647, %v558
    %v561 = vcvt.s32.f32 %v554
    %v562 = vmul.f32 %v561, %v559
    %v563 = vxor.u32 %v562, 2147483648
    %v564 = vsel %vm481, %v563, %v562
    %v565 = vsub.s32 4, %v541
    %v566 = vsel %vm481, %v565, %v541
    %v567 = vsel %vm480, %v284, %v564
    %v568 = vsel %vm480, 0, %v566
    %v569 = vcosq.f32.pop %v567
    %v570 = vsinq.f32.pop %v567
    %vm571 = vweird.f32 %v284
    %v572 = vand.u32 %v568, 3
    %vm573 = vcmp.lt.s32.totalorder %v572, 2
    %vm574 = vcmp.eq.s32.totalorder %v572, 0
    %v575 = vxor.u32 %v570, 2147483648
    %v576 = vsel %vm574, %v569, %v575
    %vm577 = vcmp.eq.s32.totalorder %v572, 2
    %v578 = vxor.u32 %v569, 2147483648
    %v579 = vsel %vm577, %v578, %v570
    %v580 = vsel %vm573, %v576, %v579
    %v581 = vsel %vm571, nan, %v580
    %v582 = vstv %s374
    %v583 = vmul.f32 %v582, %v478
    %v584 = vmul.f32 %v582, %v581
    %v585 = vand.u32 2147483647, %v280
    %vm586 = vcmp.le.f32.partialorder %v585, 0.7853982
    %vm587 = vcmp.lt.s32.totalorder %v280, 0
    %v588 = vand.u32 %v280, 2139095040
    %v589 = vshrl.u32 %v588, 23
    %v590 = vsub.s32 %v589, 127
    %v591 = vand.u32 2147483647, %v280
    %v592 = vand.u32 %v591, 8388607
    %v593 = vor.u32 %v592, 8388608
    %v594 = vsub.s32 0, %v593
    %v595 = vadd.s32 %v590, 1
    %vm596 = vcmp.gt.s32.totalorder %v595, 0
    %v597 = vsel %vm596, %v595, 0
    %v598 = vshrl.u32 %v597, 5
    %v599 = vand.u32 %v597, 31
    %v600 = vsub.s32 32, %v599
    %v601 = vshrl.u32 683565275, %v600
    %v602 = vshll.u32 683565275, %v599
    %v603 = vshrl.u32 2475754826, %v600
    %v604 = vor.u32 %v602, %v603
    %v605 = vshll.u32 2475754826, %v599
    %v606 = vshrl.u32 2131351028, %v600
    %v607 = vor.u32 %v605, %v606
    %v608 = vshll.u32 2131351028, %v599
    %v609 = vshrl.u32 2102212464, %v600
    %v610 = vor.u32 %v608, %v609
    %v611 = vshll.u32 2102212464, %v599
    %v612 = vshrl.u32 920167782, %v600
    %v613 = vor.u32 %v611, %v612
    %v614 = vshll.u32 920167782, %v599
    %v615 = vshrl.u32 1326507024, %v600
    %v616 = vor.u32 %v614, %v615
    %vm617 = vcmp.lt.s32.totalorder %v598, 1
    %vm618 = vcmp.lt.s32.totalorder %v598, 2
    %vm619 = vcmp.lt.s32.totalorder %v598, 3
    %vm620 = vcmp.lt.s32.totalorder %v598, 4
    %v621 = vsel %vm617, %v601, %v604
    %v622 = vsel %vm620, %v610, 2102212464
    %v623 = vsel %vm619, %v607, %v622
    %v624 = vsel %vm618, %v621, %v623
    %v625 = vsel %vm617, %v604, %v607
    %v626 = vsel %vm620, %v613, 920167782
    %v627 = vsel %vm619, %v610, %v626
    %v628 = vsel %vm618, %v625, %v627
    %v629 = vsel %vm617, %v607, %v610
    %v630 = vsel %vm620, %v616, 1326507024
    %v631 = vsel %vm619, %v613, %v630
    %v632 = vsel %vm618, %v629, %v631
    %v633 = vshll.u32 %v593, 8
    %v634 = vmul.u32.u64.compose %v633, %v632
    %v635 = vextract.low.u32 %v634
    %v636 = vextract.high.u32 %v634
    %v637 = vmul.u32.u64.compose %v633, %v628
    %v638 = vextract.low.u32 %v637
    %v639 = vextract.high.u32 %v637
    %v640 = vmul.u32 %v633, %v624
    %v641 = vadd.s32 %v636, %v638
    %vm642 = vc.u32 %v636, %v638
    %v643 = vadd.s32 %v639, 1
    %v644 = vsel %vm642, %v643, %v639
    %v645 = vadd.s32 %v640, %v644
    %v646 = vadd.s32 %v645, 536870912
    %v647 = vshrl.u32 %v646, 30
    %v648 = vshll.u32 %v647, 30
    %v649 = vsub.s32 %v645, %v648
    %vm650 = vcmp.lt.s32.totalorder %v649, 0
    %v651 = vsub.s32 0, %v649
    %v652 = vsel %vm650, %v651, %v649
    %v653 = vclz %v652
    %v654 = vsub.s32 %v653, 2
    %vm655 = vcmp.gt.s32.totalorder 0, %v654
    %v656 = vsel %vm655, 0, %v654
    %v657 = vsub.s32 32, %v656
    %v658 = vshll.u32 %v649, %v656
    %v659 = vshrl.u32 %v641, %v657
    %v660 = vor.u32 %v658, %v659
    %v661 = vsub.s32 4294967266, %v656
    %v662 = vadd.s32 %v661, 127
    %v663 = vshll.u32 %v662, 23
    %v664 = vor.u32 4788187, %v663
    %v665 = vand.u32 2147483647, %v664
    %v667 = vcvt.s32.f32 %v660
    %v668 = vmul.f32 %v667, %v665
    %v669 = vxor.u32 %v668, 2147483648
    %v670 = vsel %vm587, %v669, %v668
    %v671 = vsub.s32 4, %v647
    %v672 = vsel %vm587, %v671, %v647
    %v673 = vsel %vm586, %v280, %v670
    %v674 = vsel %vm586, 0, %v672
    %v675 = vcosq.f32.pop %v673
    %v676 = vsinq.f32.pop %v673
    %vm677 = vweird.f32 %v280
    %v678 = vadd.s32 %v674, 3
    %v679 = vand.u32 %v678, 3
    %vm680 = vcmp.lt.s32.totalorder %v679, 2
    %vm681 = vcmp.eq.s32.totalorder %v679, 0
    %v682 = vxor.u32 %v676, 2147483648
    %v683 = vsel %vm681, %v675, %v682
    %vm684 = vcmp.eq.s32.totalorder %v679, 2
    %v685 = vxor.u32 %v675, 2147483648
    %v686 = vsel %vm684, %v685, %v676
    %v687 = vsel %vm680, %v683, %v686
    %v688 = vsel %vm677, nan, %v687
    %v689 = vand.u32 2147483647, %v284
    %vm690 = vcmp.le.f32.partialorder %v689, 0.7853982
    %vm691 = vcmp.lt.s32.totalorder %v284, 0
    %v692 = vand.u32 %v284, 2139095040
    %v693 = vshrl.u32 %v692, 23
    %v694 = vsub.s32 %v693, 127
    %v695 = vand.u32 2147483647, %v284
    %v696 = vand.u32 %v695, 8388607
    %v697 = vor.u32 %v696, 8388608
    %v698 = vsub.s32 0, %v697
    %v699 = vadd.s32 %v694, 1
    %vm700 = vcmp.gt.s32.totalorder %v699, 0
    %v701 = vsel %vm700, %v699, 0
    %v702 = vshrl.u32 %v701, 5
    %v703 = vand.u32 %v701, 31
    %v704 = vsub.s32 32, %v703
    %v705 = vshrl.u32 683565275, %v704
    %v706 = vshll.u32 683565275, %v703
    %v707 = vshrl.u32 2475754826, %v704
    %v708 = vor.u32 %v706, %v707
    %v709 = vshll.u32 2475754826, %v703
    %v710 = vshrl.u32 2131351028, %v704
    %v711 = vor.u32 %v709, %v710
    %v712 = vshll.u32 2131351028, %v703
    %v713 = vshrl.u32 2102212464, %v704
    %v714 = vor.u32 %v712, %v713
    %v715 = vshll.u32 2102212464, %v703
    %v716 = vshrl.u32 920167782, %v704
    %v717 = vor.u32 %v715, %v716
    %v718 = vshll.u32 920167782, %v703
    %v719 = vshrl.u32 1326507024, %v704
    %v720 = vor.u32 %v718, %v719
    %vm721 = vcmp.lt.s32.totalorder %v702, 1
    %vm722 = vcmp.lt.s32.totalorder %v702, 2
    %vm723 = vcmp.lt.s32.totalorder %v702, 3
    %vm724 = vcmp.lt.s32.totalorder %v702, 4
    %v725 = vsel %vm721, %v705, %v708
    %v726 = vsel %vm724, %v714, 2102212464
    %v727 = vsel %vm723, %v711, %v726
    %v728 = vsel %vm722, %v725, %v727
    %v729 = vsel %vm721, %v708, %v711
    %v730 = vsel %vm724, %v717, 920167782
    %v731 = vsel %vm723, %v714, %v730
    %v732 = vsel %vm722, %v729, %v731
    %v733 = vsel %vm721, %v711, %v714
    %v734 = vsel %vm724, %v720, 1326507024
    %v735 = vsel %vm723, %v717, %v734
    %v736 = vsel %vm722, %v733, %v735
    %v737 = vshll.u32 %v697, 8
    %v738 = vmul.u32.u64.compose %v737, %v736
    %v739 = vextract.low.u32 %v738
    %v740 = vextract.high.u32 %v738
    %v741 = vmul.u32.u64.compose %v737, %v732
    %v742 = vextract.low.u32 %v741
    %v743 = vextract.high.u32 %v741
    %v744 = vmul.u32 %v737, %v728
    %v745 = vadd.s32 %v740, %v742
    %vm746 = vc.u32 %v740, %v742
    %v747 = vadd.s32 %v743, 1
    %v748 = vsel %vm746, %v747, %v743
    %v749 = vadd.s32 %v744, %v748
    %v750 = vadd.s32 %v749, 536870912
    %v751 = vshrl.u32 %v750, 30
    %v752 = vshll.u32 %v751, 30
    %v753 = vsub.s32 %v749, %v752
    %vm754 = vcmp.lt.s32.totalorder %v753, 0
    %v755 = vsub.s32 0, %v753
    %v756 = vsel %vm754, %v755, %v753
    %v757 = vclz %v756
    %v758 = vsub.s32 %v757, 2
    %vm759 = vcmp.gt.s32.totalorder 0, %v758
    %v760 = vsel %vm759, 0, %v758
    %v761 = vsub.s32 32, %v760
    %v762 = vshll.u32 %v753, %v760
    %v763 = vshrl.u32 %v745, %v761
    %v764 = vor.u32 %v762, %v763
    %v765 = vsub.s32 4294967266, %v760
    %v766 = vadd.s32 %v765, 127
    %v767 = vshll.u32 %v766, 23
    %v768 = vor.u32 4788187, %v767
    %v769 = vand.u32 2147483647, %v768
    %v771 = vcvt.s32.f32 %v764
    %v772 = vmul.f32 %v771, %v769
    %v773 = vxor.u32 %v772, 2147483648
    %v774 = vsel %vm691, %v773, %v772
    %v775 = vsub.s32 4, %v751
    %v776 = vsel %vm691, %v775, %v751
    %v777 = vsel %vm690, %v284, %v774
    %v778 = vsel %vm690, 0, %v776
    %v779 = vcosq.f32.pop %v777
    %v780 = vsinq.f32.pop %v777
    %vm781 = vweird.f32 %v284
    %v782 = vadd.s32 %v778, 3
    %v783 = vand.u32 %v782, 3
    %vm784 = vcmp.lt.s32.totalorder %v783, 2
    %vm785 = vcmp.eq.s32.totalorder %v783, 0
    %v786 = vxor.u32 %v780, 2147483648
    %v787 = vsel %vm785, %v779, %v786
    %vm788 = vcmp.eq.s32.totalorder %v783, 2
    %v789 = vxor.u32 %v779, 2147483648
    %v790 = vsel %vm788, %v789, %v780
    %v791 = vsel %vm784, %v787, %v790
    %v792 = vsel %vm781, nan, %v791
    %v793 = vmul.f32 %v582, %v688
    %v794 = vmul.f32 %v582, %v792
    %v795 = vmul.f32 %v282, 0.5
    %v796 = vmul.f32 %v286, 0.5
    %v797 = vmul.f32 %v282, 0.70710677
    %v798 = vmul.f32 %v286, 0.70710677
    %vm799 = vcmp.ge.f32.partialorder %v797, 0.0
    %vm800 = vcmp.ge.f32.partialorder %v798, 0.0
    %v801 = vsel %vm799, 1.0, -1.0
    %v802 = vsel %vm800, 1.0, -1.0
    %v803 = vand.u32 2147483647, %v797
    %v804 = vand.u32 2147483647, %v798
    %v805 = vmul.f32 %v803, 0.3275911
    %v806 = vmul.f32 %v804, 0.3275911
    %v807 = vadd.f32 %v805, 1.0
    %v808 = vadd.f32 %v806, 1.0
    %v809 = vrcp.pop %v807
    %v810 = vmul.f32 1.0, %v809
    %v811 = vrcp.pop %v808
    %v812 = vmul.f32 1.0, %v811
    %v813 = vmul.f32 %v810, 1.0614054
    %v814 = vmul.f32 %v812, 1.0614054
    %v815 = vadd.f32 %v813, -1.4531521
    %v816 = vadd.f32 %v814, -1.4531521
    %v817 = vmul.f32 %v815, %v810
    %v818 = vmul.f32 %v816, %v812
    %v819 = vadd.f32 %v817, 1.4214138
    %v820 = vadd.f32 %v818, 1.4214138
    %v821 = vmul.f32 %v819, %v810
    %v822 = vmul.f32 %v820, %v812
    %v823 = vadd.f32 %v821, -0.28449672
    %v824 = vadd.f32 %v822, -0.28449672
    %v825 = vmul.f32 %v823, %v810
    %v826 = vmul.f32 %v824, %v812
    %v827 = vadd.f32 %v825, 0.2548296
    %v828 = vadd.f32 %v826, 0.2548296
    %v829 = vmul.f32 %v827, %v810
    %v830 = vmul.f32 %v828, %v812
    %v831 = vsub.f32 0.0, %v803
    %v832 = vsub.f32 0.0, %v804
    %v833 = vmul.f32 %v831, %v803
    %v834 = vmul.f32 %v832, %v804
    %v835 = vmul.f32 %v833, 1.442695
    %v836 = vpow.pop %v835
    %v837 = vmul.f32 %v834, 1.442695
    %v838 = vpow.pop %v837
    %v839 = vmul.f32 %v829, %v836
    %v840 = vmul.f32 %v830, %v838
    %v841 = vsub.f32 1.0, %v839
    %v842 = vsub.f32 1.0, %v840
    %v843 = vmul.f32 %v801, %v841
    %v844 = vmul.f32 %v802, %v842
    %v845 = vadd.f32 %v843, 1.0
    %v846 = vadd.f32 %v844, 1.0
    %v847 = vmul.f32 %v795, %v845
    %v848 = vmul.f32 %v796, %v846
    %v849 = vstv %s375
    %v850 = vmul.f32 %v849, %v847
    %v851 = vmul.f32 %v849, %v848
    %854 = vrot.lane.b32.xlu0 %v793, 4
    %v855 = vpop.permute.xlu0 %854
    %856 = vrot.lane.b32.xlu0 %v794, 4
    %v857 = vpop.permute.xlu0 %856
    %862 = vrot.lane.b32.xlu0 %v850, 8
    %v863 = vpop.permute.xlu0 %862
    %864 = vrot.lane.b32.xlu0 %v851, 8
    %v865 = vpop.permute.xlu0 %864
    %vm868 = vcmask 31744
    %v869 = vsel %vm868, %v583, %v855
    %v870 = vsel %vm868, %v584, %v857
    %vm871 = vcmask 64512
    %v872 = vsel %vm871, %v869, %v863
    %v873 = vsel %vm871, %v870, %v865
    %s874 = sld [smem:[#allocation3 + $0x2]]
    %s875 = sld [smem:[#allocation3 + $0x3]]
    %v876 = vand.u32 2147483647, %v323
    %vm877 = vcmp.le.f32.partialorder %v876, 0.7853982
    %vm878 = vcmp.lt.s32.totalorder %v323, 0
    %v879 = vand.u32 %v323, 2139095040
    %v880 = vshrl.u32 %v879, 23
    %v881 = vsub.s32 %v880, 127
    %v882 = vand.u32 2147483647, %v323
    %v883 = vand.u32 %v882, 8388607
    %v884 = vor.u32 %v883, 8388608
    %v885 = vsub.s32 0, %v884
    %v886 = vadd.s32 %v881, 1
    %vm887 = vcmp.gt.s32.totalorder %v886, 0
    %v888 = vsel %vm887, %v886, 0
    %v889 = vshrl.u32 %v888, 5
    %v890 = vand.u32 %v888, 31
    %v891 = vsub.s32 32, %v890
    %v892 = vshrl.u32 683565275, %v891
    %v893 = vshll.u32 683565275, %v890
    %v894 = vshrl.u32 2475754826, %v891
    %v895 = vor.u32 %v893, %v894
    %v896 = vshll.u32 2475754826, %v890
    %v897 = vshrl.u32 2131351028, %v891
    %v898 = vor.u32 %v896, %v897
    %v899 = vshll.u32 2131351028, %v890
    %v900 = vshrl.u32 2102212464, %v891
    %v901 = vor.u32 %v899, %v900
    %v902 = vshll.u32 2102212464, %v890
    %v903 = vshrl.u32 920167782, %v891
    %v904 = vor.u32 %v902, %v903
    %v905 = vshll.u32 920167782, %v890
    %v906 = vshrl.u32 1326507024, %v891
    %v907 = vor.u32 %v905, %v906
    %vm908 = vcmp.lt.s32.totalorder %v889, 1
    %vm909 = vcmp.lt.s32.totalorder %v889, 2
    %vm910 = vcmp.lt.s32.totalorder %v889, 3
    %vm911 = vcmp.lt.s32.totalorder %v889, 4
    %v912 = vsel %vm908, %v892, %v895
    %v913 = vsel %vm911, %v901, 2102212464
    %v914 = vsel %vm910, %v898, %v913
    %v915 = vsel %vm909, %v912, %v914
    %v916 = vsel %vm908, %v895, %v898
    %v917 = vsel %vm911, %v904, 920167782
    %v918 = vsel %vm910, %v901, %v917
    %v919 = vsel %vm909, %v916, %v918
    %v920 = vsel %vm908, %v898, %v901
    %v921 = vsel %vm911, %v907, 1326507024
    %v922 = vsel %vm910, %v904, %v921
    %v923 = vsel %vm909, %v920, %v922
    %v924 = vshll.u32 %v884, 8
    %v925 = vmul.u32.u64.compose %v924, %v923
    %v926 = vextract.low.u32 %v925
    %v927 = vextract.high.u32 %v925
    %v928 = vmul.u32.u64.compose %v924, %v919
    %v929 = vextract.low.u32 %v928
    %v930 = vextract.high.u32 %v928
    %v931 = vmul.u32 %v924, %v915
    %v932 = vadd.s32 %v927, %v929
    %vm933 = vc.u32 %v927, %v929
    %v934 = vadd.s32 %v930, 1
    %v935 = vsel %vm933, %v934, %v930
    %v936 = vadd.s32 %v931, %v935
    %v937 = vadd.s32 %v936, 536870912
    %v938 = vshrl.u32 %v937, 30
    %v939 = vshll.u32 %v938, 30
    %v940 = vsub.s32 %v936, %v939
    %vm941 = vcmp.lt.s32.totalorder %v940, 0
    %v942 = vsub.s32 0, %v940
    %v943 = vsel %vm941, %v942, %v940
    %v944 = vclz %v943
    %v945 = vsub.s32 %v944, 2
    %vm946 = vcmp.gt.s32.totalorder 0, %v945
    %v947 = vsel %vm946, 0, %v945
    %v948 = vsub.s32 32, %v947
    %v949 = vshll.u32 %v940, %v947
    %v950 = vshrl.u32 %v932, %v948
    %v951 = vor.u32 %v949, %v950
    %v952 = vsub.s32 4294967266, %v947
    %v953 = vadd.s32 %v952, 127
    %v954 = vshll.u32 %v953, 23
    %v955 = vor.u32 4788187, %v954
    %v956 = vand.u32 2147483647, %v955
    %v958 = vcvt.s32.f32 %v951
    %v959 = vmul.f32 %v958, %v956
    %v960 = vxor.u32 %v959, 2147483648
    %v961 = vsel %vm878, %v960, %v959
    %v962 = vsub.s32 4, %v938
    %v963 = vsel %vm878, %v962, %v938
    %v964 = vsel %vm877, %v323, %v961
    %v965 = vsel %vm877, 0, %v963
    %v966 = vcosq.f32.pop %v964
    %v967 = vsinq.f32.pop %v964
    %vm968 = vweird.f32 %v323
    %v969 = vand.u32 %v965, 3
    %vm970 = vcmp.lt.s32.totalorder %v969, 2
    %vm971 = vcmp.eq.s32.totalorder %v969, 0
    %v972 = vxor.u32 %v967, 2147483648
    %v973 = vsel %vm971, %v966, %v972
    %vm974 = vcmp.eq.s32.totalorder %v969, 2
    %v975 = vxor.u32 %v966, 2147483648
    %v976 = vsel %vm974, %v975, %v967
    %v977 = vsel %vm970, %v973, %v976
    %v978 = vsel %vm968, nan, %v977
    %v979 = vand.u32 2147483647, %v327
    %vm980 = vcmp.le.f32.partialorder %v979, 0.7853982
    %vm981 = vcmp.lt.s32.totalorder %v327, 0
    %v982 = vand.u32 %v327, 2139095040
    %v983 = vshrl.u32 %v982, 23
    %v984 = vsub.s32 %v983, 127
    %v985 = vand.u32 2147483647, %v327
    %v986 = vand.u32 %v985, 8388607
    %v987 = vor.u32 %v986, 8388608
    %v988 = vsub.s32 0, %v987
    %v989 = vadd.s32 %v984, 1
    %vm990 = vcmp.gt.s32.totalorder %v989, 0
    %v991 = vsel %vm990, %v989, 0
    %v992 = vshrl.u32 %v991, 5
    %v993 = vand.u32 %v991, 31
    %v994 = vsub.s32 32, %v993
    %v995 = vshrl.u32 683565275, %v994
    %v996 = vshll.u32 683565275, %v993
    %v997 = vshrl.u32 2475754826, %v994
    %v998 = vor.u32 %v996, %v997
    %v999 = vshll.u32 2475754826, %v993
    %v1000 = vshrl.u32 2131351028, %v994
    %v1001 = vor.u32 %v999, %v1000
    %v1002 = vshll.u32 2131351028, %v993
    %v1003 = vshrl.u32 2102212464, %v994
    %v1004 = vor.u32 %v1002, %v1003
    %v1005 = vshll.u32 2102212464, %v993
    %v1006 = vshrl.u32 920167782, %v994
    %v1007 = vor.u32 %v1005, %v1006
    %v1008 = vshll.u32 920167782, %v993
    %v1009 = vshrl.u32 1326507024, %v994
    %v1010 = vor.u32 %v1008, %v1009
    %vm1011 = vcmp.lt.s32.totalorder %v992, 1
    %vm1012 = vcmp.lt.s32.totalorder %v992, 2
    %vm1013 = vcmp.lt.s32.totalorder %v992, 3
    %vm1014 = vcmp.lt.s32.totalorder %v992, 4
    %v1015 = vsel %vm1011, %v995, %v998
    %v1016 = vsel %vm1014, %v1004, 2102212464
    %v1017 = vsel %vm1013, %v1001, %v1016
    %v1018 = vsel %vm1012, %v1015, %v1017
    %v1019 = vsel %vm1011, %v998, %v1001
    %v1020 = vsel %vm1014, %v1007, 920167782
    %v1021 = vsel %vm1013, %v1004, %v1020
    %v1022 = vsel %vm1012, %v1019, %v1021
    %v1023 = vsel %vm1011, %v1001, %v1004
    %v1024 = vsel %vm1014, %v1010, 1326507024
    %v1025 = vsel %vm1013, %v1007, %v1024
    %v1026 = vsel %vm1012, %v1023, %v1025
    %v1027 = vshll.u32 %v987, 8
    %v1028 = vmul.u32.u64.compose %v1027, %v1026
    %v1029 = vextract.low.u32 %v1028
    %v1030 = vextract.high.u32 %v1028
    %v1031 = vmul.u32.u64.compose %v1027, %v1022
    %v1032 = vextract.low.u32 %v1031
    %v1033 = vextract.high.u32 %v1031
    %v1034 = vmul.u32 %v1027, %v1018
    %v1035 = vadd.s32 %v1030, %v1032
    %vm1036 = vc.u32 %v1030, %v1032
    %v1037 = vadd.s32 %v1033, 1
    %v1038 = vsel %vm1036, %v1037, %v1033
    %v1039 = vadd.s32 %v1034, %v1038
    %v1040 = vadd.s32 %v1039, 536870912
    %v1041 = vshrl.u32 %v1040, 30
    %v1042 = vshll.u32 %v1041, 30
    %v1043 = vsub.s32 %v1039, %v1042
    %vm1044 = vcmp.lt.s32.totalorder %v1043, 0
    %v1045 = vsub.s32 0, %v1043
    %v1046 = vsel %vm1044, %v1045, %v1043
    %v1047 = vclz %v1046
    %v1048 = vsub.s32 %v1047, 2
    %vm1049 = vcmp.gt.s32.totalorder 0, %v1048
    %v1050 = vsel %vm1049, 0, %v1048
    %v1051 = vsub.s32 32, %v1050
    %v1052 = vshll.u32 %v1043, %v1050
    %v1053 = vshrl.u32 %v1035, %v1051
    %v1054 = vor.u32 %v1052, %v1053
    %v1055 = vsub.s32 4294967266, %v1050
    %v1056 = vadd.s32 %v1055, 127
    %v1057 = vshll.u32 %v1056, 23
    %v1058 = vor.u32 4788187, %v1057
    %v1059 = vand.u32 2147483647, %v1058
    %v1061 = vcvt.s32.f32 %v1054
    %v1062 = vmul.f32 %v1061, %v1059
    %v1063 = vxor.u32 %v1062, 2147483648
    %v1064 = vsel %vm981, %v1063, %v1062
    %v1065 = vsub.s32 4, %v1041
    %v1066 = vsel %vm981, %v1065, %v1041
    %v1067 = vsel %vm980, %v327, %v1064
    %v1068 = vsel %vm980, 0, %v1066
    %v1069 = vcosq.f32.pop %v1067
    %v1070 = vsinq.f32.pop %v1067
    %vm1071 = vweird.f32 %v327
    %v1072 = vand.u32 %v1068, 3
    %vm1073 = vcmp.lt.s32.totalorder %v1072, 2
    %vm1074 = vcmp.eq.s32.totalorder %v1072, 0
    %v1075 = vxor.u32 %v1070, 2147483648
    %v1076 = vsel %vm1074, %v1069, %v1075
    %vm1077 = vcmp.eq.s32.totalorder %v1072, 2
    %v1078 = vxor.u32 %v1069, 2147483648
    %v1079 = vsel %vm1077, %v1078, %v1070
    %v1080 = vsel %vm1073, %v1076, %v1079
    %v1081 = vsel %vm1071, nan, %v1080
    %v1082 = vstv %s874
    %v1083 = vmul.f32 %v1082, %v978
    %v1084 = vmul.f32 %v1082, %v1081
    %v1085 = vand.u32 2147483647, %v323
    %vm1086 = vcmp.le.f32.partialorder %v1085, 0.7853982
    %vm1087 = vcmp.lt.s32.totalorder %v323, 0
    %v1088 = vand.u32 %v323, 2139095040
    %v1089 = vshrl.u32 %v1088, 23
    %v1090 = vsub.s32 %v1089, 127
    %v1091 = vand.u32 2147483647, %v323
    %v1092 = vand.u32 %v1091, 8388607
    %v1093 = vor.u32 %v1092, 8388608
    %v1094 = vsub.s32 0, %v1093
    %v1095 = vadd.s32 %v1090, 1
    %vm1096 = vcmp.gt.s32.totalorder %v1095, 0
    %v1097 = vsel %vm1096, %v1095, 0
    %v1098 = vshrl.u32 %v1097, 5
    %v1099 = vand.u32 %v1097, 31
    %v1100 = vsub.s32 32, %v1099
    %v1101 = vshrl.u32 683565275, %v1100
    %v1102 = vshll.u32 683565275, %v1099
    %v1103 = vshrl.u32 2475754826, %v1100
    %v1104 = vor.u32 %v1102, %v1103
    %v1105 = vshll.u32 2475754826, %v1099
    %v1106 = vshrl.u32 2131351028, %v1100
    %v1107 = vor.u32 %v1105, %v1106
    %v1108 = vshll.u32 2131351028, %v1099
    %v1109 = vshrl.u32 2102212464, %v1100
    %v1110 = vor.u32 %v1108, %v1109
    %v1111 = vshll.u32 2102212464, %v1099
    %v1112 = vshrl.u32 920167782, %v1100
    %v1113 = vor.u32 %v1111, %v1112
    %v1114 = vshll.u32 920167782, %v1099
    %v1115 = vshrl.u32 1326507024, %v1100
    %v1116 = vor.u32 %v1114, %v1115
    %vm1117 = vcmp.lt.s32.totalorder %v1098, 1
    %vm1118 = vcmp.lt.s32.totalorder %v1098, 2
    %vm1119 = vcmp.lt.s32.totalorder %v1098, 3
    %vm1120 = vcmp.lt.s32.totalorder %v1098, 4
    %v1121 = vsel %vm1117, %v1101, %v1104
    %v1122 = vsel %vm1120, %v1110, 2102212464
    %v1123 = vsel %vm1119, %v1107, %v1122
    %v1124 = vsel %vm1118, %v1121, %v1123
    %v1125 = vsel %vm1117, %v1104, %v1107
    %v1126 = vsel %vm1120, %v1113, 920167782
    %v1127 = vsel %vm1119, %v1110, %v1126
    %v1128 = vsel %vm1118, %v1125, %v1127
    %v1129 = vsel %vm1117, %v1107, %v1110
    %v1130 = vsel %vm1120, %v1116, 1326507024
    %v1131 = vsel %vm1119, %v1113, %v1130
    %v1132 = vsel %vm1118, %v1129, %v1131
    %v1133 = vshll.u32 %v1093, 8
    %v1134 = vmul.u32.u64.compose %v1133, %v1132
    %v1135 = vextract.low.u32 %v1134
    %v1136 = vextract.high.u32 %v1134
    %v1137 = vmul.u32.u64.compose %v1133, %v1128
    %v1138 = vextract.low.u32 %v1137
    %v1139 = vextract.high.u32 %v1137
    %v1140 = vmul.u32 %v1133, %v1124
    %v1141 = vadd.s32 %v1136, %v1138
    %vm1142 = vc.u32 %v1136, %v1138
    %v1143 = vadd.s32 %v1139, 1
    %v1144 = vsel %vm1142, %v1143, %v1139
    %v1145 = vadd.s32 %v1140, %v1144
    %v1146 = vadd.s32 %v1145, 536870912
    %v1147 = vshrl.u32 %v1146, 30
    %v1148 = vshll.u32 %v1147, 30
    %v1149 = vsub.s32 %v1145, %v1148
    %vm1150 = vcmp.lt.s32.totalorder %v1149, 0
    %v1151 = vsub.s32 0, %v1149
    %v1152 = vsel %vm1150, %v1151, %v1149
    %v1153 = vclz %v1152
    %v1154 = vsub.s32 %v1153, 2
    %vm1155 = vcmp.gt.s32.totalorder 0, %v1154
    %v1156 = vsel %vm1155, 0, %v1154
    %v1157 = vsub.s32 32, %v1156
    %v1158 = vshll.u32 %v1149, %v1156
    %v1159 = vshrl.u32 %v1141, %v1157
    %v1160 = vor.u32 %v1158, %v1159
    %v1161 = vsub.s32 4294967266, %v1156
    %v1162 = vadd.s32 %v1161, 127
    %v1163 = vshll.u32 %v1162, 23
    %v1164 = vor.u32 4788187, %v1163
    %v1165 = vand.u32 2147483647, %v1164
    %v1167 = vcvt.s32.f32 %v1160
    %v1168 = vmul.f32 %v1167, %v1165
    %v1169 = vxor.u32 %v1168, 2147483648
    %v1170 = vsel %vm1087, %v1169, %v1168
    %v1171 = vsub.s32 4, %v1147
    %v1172 = vsel %vm1087, %v1171, %v1147
    %v1173 = vsel %vm1086, %v323, %v1170
    %v1174 = vsel %vm1086, 0, %v1172
    %v1175 = vcosq.f32.pop %v1173
    %v1176 = vsinq.f32.pop %v1173
    %vm1177 = vweird.f32 %v323
    %v1178 = vadd.s32 %v1174, 3
    %v1179 = vand.u32 %v1178, 3
    %vm1180 = vcmp.lt.s32.totalorder %v1179, 2
    %vm1181 = vcmp.eq.s32.totalorder %v1179, 0
    %v1182 = vxor.u32 %v1176, 2147483648
    %v1183 = vsel %vm1181, %v1175, %v1182
    %vm1184 = vcmp.eq.s32.totalorder %v1179, 2
    %v1185 = vxor.u32 %v1175, 2147483648
    %v1186 = vsel %vm1184, %v1185, %v1176
    %v1187 = vsel %vm1180, %v1183, %v1186
    %v1188 = vsel %vm1177, nan, %v1187
    %v1189 = vand.u32 2147483647, %v327
    %vm1190 = vcmp.le.f32.partialorder %v1189, 0.7853982
    %vm1191 = vcmp.lt.s32.totalorder %v327, 0
    %v1192 = vand.u32 %v327, 2139095040
    %v1193 = vshrl.u32 %v1192, 23
    %v1194 = vsub.s32 %v1193, 127
    %v1195 = vand.u32 2147483647, %v327
    %v1196 = vand.u32 %v1195, 8388607
    %v1197 = vor.u32 %v1196, 8388608
    %v1198 = vsub.s32 0, %v1197
    %v1199 = vadd.s32 %v1194, 1
    %vm1200 = vcmp.gt.s32.totalorder %v1199, 0
    %v1201 = vsel %vm1200, %v1199, 0
    %v1202 = vshrl.u32 %v1201, 5
    %v1203 = vand.u32 %v1201, 31
    %v1204 = vsub.s32 32, %v1203
    %v1205 = vshrl.u32 683565275, %v1204
    %v1206 = vshll.u32 683565275, %v1203
    %v1207 = vshrl.u32 2475754826, %v1204
    %v1208 = vor.u32 %v1206, %v1207
    %v1209 = vshll.u32 2475754826, %v1203
    %v1210 = vshrl.u32 2131351028, %v1204
    %v1211 = vor.u32 %v1209, %v1210
    %v1212 = vshll.u32 2131351028, %v1203
    %v1213 = vshrl.u32 2102212464, %v1204
    %v1214 = vor.u32 %v1212, %v1213
    %v1215 = vshll.u32 2102212464, %v1203
    %v1216 = vshrl.u32 920167782, %v1204
    %v1217 = vor.u32 %v1215, %v1216
    %v1218 = vshll.u32 920167782, %v1203
    %v1219 = vshrl.u32 1326507024, %v1204
    %v1220 = vor.u32 %v1218, %v1219
    %vm1221 = vcmp.lt.s32.totalorder %v1202, 1
    %vm1222 = vcmp.lt.s32.totalorder %v1202, 2
    %vm1223 = vcmp.lt.s32.totalorder %v1202, 3
    %vm1224 = vcmp.lt.s32.totalorder %v1202, 4
    %v1225 = vsel %vm1221, %v1205, %v1208
    %v1226 = vsel %vm1224, %v1214, 2102212464
    %v1227 = vsel %vm1223, %v1211, %v1226
    %v1228 = vsel %vm1222, %v1225, %v1227
    %v1229 = vsel %vm1221, %v1208, %v1211
    %v1230 = vsel %vm1224, %v1217, 920167782
    %v1231 = vsel %vm1223, %v1214, %v1230
    %v1232 = vsel %vm1222, %v1229, %v1231
    %v1233 = vsel %vm1221, %v1211, %v1214
    %v1234 = vsel %vm1224, %v1220, 1326507024
    %v1235 = vsel %vm1223, %v1217, %v1234
    %v1236 = vsel %vm1222, %v1233, %v1235
    %v1237 = vshll.u32 %v1197, 8
    %v1238 = vmul.u32.u64.compose %v1237, %v1236
    %v1239 = vextract.low.u32 %v1238
    %v1240 = vextract.high.u32 %v1238
    %v1241 = vmul.u32.u64.compose %v1237, %v1232
    %v1242 = vextract.low.u32 %v1241
    %v1243 = vextract.high.u32 %v1241
    %v1244 = vmul.u32 %v1237, %v1228
    %v1245 = vadd.s32 %v1240, %v1242
    %vm1246 = vc.u32 %v1240, %v1242
    %v1247 = vadd.s32 %v1243, 1
    %v1248 = vsel %vm1246, %v1247, %v1243
    %v1249 = vadd.s32 %v1244, %v1248
    %v1250 = vadd.s32 %v1249, 536870912
    %v1251 = vshrl.u32 %v1250, 30
    %v1252 = vshll.u32 %v1251, 30
    %v1253 = vsub.s32 %v1249, %v1252
    %vm1254 = vcmp.lt.s32.totalorder %v1253, 0
    %v1255 = vsub.s32 0, %v1253
    %v1256 = vsel %vm1254, %v1255, %v1253
    %v1257 = vclz %v1256
    %v1258 = vsub.s32 %v1257, 2
    %vm1259 = vcmp.gt.s32.totalorder 0, %v1258
    %v1260 = vsel %vm1259, 0, %v1258
    %v1261 = vsub.s32 32, %v1260
    %v1262 = vshll.u32 %v1253, %v1260
    %v1263 = vshrl.u32 %v1245, %v1261
    %v1264 = vor.u32 %v1262, %v1263
    %v1265 = vsub.s32 4294967266, %v1260
    %v1266 = vadd.s32 %v1265, 127
    %v1267 = vshll.u32 %v1266, 23
    %v1268 = vor.u32 4788187, %v1267
    %v1269 = vand.u32 2147483647, %v1268
    %v1271 = vcvt.s32.f32 %v1264
    %v1272 = vmul.f32 %v1271, %v1269
    %v1273 = vxor.u32 %v1272, 2147483648
    %v1274 = vsel %vm1191, %v1273, %v1272
    %v1275 = vsub.s32 4, %v1251
    %v1276 = vsel %vm1191, %v1275, %v1251
    %v1277 = vsel %vm1190, %v327, %v1274
    %v1278 = vsel %vm1190, 0, %v1276
    %v1279 = vcosq.f32.pop %v1277
    %v1280 = vsinq.f32.pop %v1277
    %vm1281 = vweird.f32 %v327
    %v1282 = vadd.s32 %v1278, 3
    %v1283 = vand.u32 %v1282, 3
    %vm1284 = vcmp.lt.s32.totalorder %v1283, 2
    %vm1285 = vcmp.eq.s32.totalorder %v1283, 0
    %v1286 = vxor.u32 %v1280, 2147483648
    %v1287 = vsel %vm1285, %v1279, %v1286
    %vm1288 = vcmp.eq.s32.totalorder %v1283, 2
    %v1289 = vxor.u32 %v1279, 2147483648
    %v1290 = vsel %vm1288, %v1289, %v1280
    %v1291 = vsel %vm1284, %v1287, %v1290
    %v1292 = vsel %vm1281, nan, %v1291
    %v1293 = vmul.f32 %v1082, %v1188
    %v1294 = vmul.f32 %v1082, %v1292
    %v1295 = vmul.f32 %v325, 0.5
    %v1296 = vmul.f32 %v329, 0.5
    %v1297 = vmul.f32 %v325, 0.70710677
    %v1298 = vmul.f32 %v329, 0.70710677
    %vm1299 = vcmp.ge.f32.partialorder %v1297, 0.0
    %vm1300 = vcmp.ge.f32.partialorder %v1298, 0.0
    %v1301 = vsel %vm1299, 1.0, -1.0
    %v1302 = vsel %vm1300, 1.0, -1.0
    %v1303 = vand.u32 2147483647, %v1297
    %v1304 = vand.u32 2147483647, %v1298
    %v1305 = vmul.f32 %v1303, 0.3275911
    %v1306 = vmul.f32 %v1304, 0.3275911
    %v1307 = vadd.f32 %v1305, 1.0
    %v1308 = vadd.f32 %v1306, 1.0
    %v1309 = vrcp.pop %v1307
    %v1310 = vmul.f32 1.0, %v1309
    %v1311 = vrcp.pop %v1308
    %v1312 = vmul.f32 1.0, %v1311
    %v1313 = vmul.f32 %v1310, 1.0614054
    %v1314 = vmul.f32 %v1312, 1.0614054
    %v1315 = vadd.f32 %v1313, -1.4531521
    %v1316 = vadd.f32 %v1314, -1.4531521
    %v1317 = vmul.f32 %v1315, %v1310
    %v1318 = vmul.f32 %v1316, %v1312
    %v1319 = vadd.f32 %v1317, 1.4214138
    %v1320 = vadd.f32 %v1318, 1.4214138
    %v1321 = vmul.f32 %v1319, %v1310
    %v1322 = vmul.f32 %v1320, %v1312
    %v1323 = vadd.f32 %v1321, -0.28449672
    %v1324 = vadd.f32 %v1322, -0.28449672
    %v1325 = vmul.f32 %v1323, %v1310
    %v1326 = vmul.f32 %v1324, %v1312
    %v1327 = vadd.f32 %v1325, 0.2548296
    %v1328 = vadd.f32 %v1326, 0.2548296
    %v1329 = vmul.f32 %v1327, %v1310
    %v1330 = vmul.f32 %v1328, %v1312
    %v1331 = vsub.f32 0.0, %v1303
    %v1332 = vsub.f32 0.0, %v1304
    %v1333 = vmul.f32 %v1331, %v1303
    %v1334 = vmul.f32 %v1332, %v1304
    %v1335 = vmul.f32 %v1333, 1.442695
    %v1336 = vpow.pop %v1335
    %v1337 = vmul.f32 %v1334, 1.442695
    %v1338 = vpow.pop %v1337
    %v1339 = vmul.f32 %v1329, %v1336
    %v1340 = vmul.f32 %v1330, %v1338
    %v1341 = vsub.f32 1.0, %v1339
    %v1342 = vsub.f32 1.0, %v1340
    %v1343 = vmul.f32 %v1301, %v1341
    %v1344 = vmul.f32 %v1302, %v1342
    %v1345 = vadd.f32 %v1343, 1.0
    %v1346 = vadd.f32 %v1344, 1.0
    %v1347 = vmul.f32 %v1295, %v1345
    %v1348 = vmul.f32 %v1296, %v1346
    %v1349 = vstv %s875
    %v1350 = vmul.f32 %v1349, %v1347
    %v1351 = vmul.f32 %v1349, %v1348
    %1354 = vrot.lane.b32.xlu0 %v1293, 4
    %v1355 = vpop.permute.xlu0 %1354
    %1356 = vrot.lane.b32.xlu0 %v1294, 4
    %v1357 = vpop.permute.xlu0 %1356
    %1362 = vrot.lane.b32.xlu0 %v1350, 8
    %v1363 = vpop.permute.xlu0 %1362
    %1364 = vrot.lane.b32.xlu0 %v1351, 8
    %v1365 = vpop.permute.xlu0 %1364
    %v1368 = vsel %vm868, %v1083, %v1355
    %v1369 = vsel %vm868, %v1084, %v1357
    %v1370 = vsel %vm871, %v1368, %v1363
    %v1371 = vsel %vm871, %v1369, %v1365
    %v1372 = vpack.c.bf16 %v873, %v872
    %v1373 = vld [vmem:[%s4] sm:$0xff]
    %v1374 = vld [vmem:[%s4 + $0x8] sm:$0xff]
    %v1375 = vld [vmem:[%s4 + $0x10] sm:$0xff]
    %v1376 = vld [vmem:[%s4 + $0x18] sm:$0xff]
    %v1377 = vld [vmem:[#allocation10] sm:$0xf]
    %v1379 = vlaneseq
    %v1380 = vshrl.u32 %v1379, 7
    %v1381 = vsub.s32 0, %v1380
    %v1382 = vrot.slane %v1377, %v1381
    %v1383 = vlaneseq
    %v1384 = vshrl.u32 %v1383, 7
    %v1385 = vsub.s32 1, %v1384
    %v1386 = vrot.slane %v1377, %v1385
    %v1387 = vlaneseq
    %v1388 = vshrl.u32 %v1387, 7
    %v1389 = vsub.s32 2, %v1388
    %v1390 = vrot.slane %v1377, %v1389
    %v1391 = vlaneseq
    %v1392 = vshrl.u32 %v1391, 7
    %v1393 = vsub.s32 3, %v1392
    %v1394 = vrot.slane %v1377, %v1393
    %v1403 = vunpack.c.l.b16 %v1373
    %v1404 = vunpack.c.h.b16 %v1373
    %v1405 = vunpack.c.l.b16 %v1374
    %v1406 = vunpack.c.h.b16 %v1374
    %v1407 = vunpack.c.l.b16 %v1375
    %v1408 = vunpack.c.h.b16 %v1375
    %v1409 = vunpack.c.l.b16 %v1376
    %v1410 = vunpack.c.h.b16 %v1376
    %v1411 = vpack.c.b16 %v1407, %v1403
    %v1412 = vpack.c.b16 %v1408, %v1404
    %v1413 = vpack.c.b16 %v1409, %v1405
    %v1414 = vpack.c.b16 %v1410, %v1406
    %vm1419 = vcmask 130048
    %v1421 = vsel %vm1419, %v1372, 0
    %1423 = vmatprep.subr.bf16.mxu0 %v1412
    %1424 = vmatpush1.bf16.msra.mxu0 %v1411
    %1425 = vmatprep.subr.bf16.mxu0 0
    %1426 = vmatpush1.bf16.msra.mxu0 0
    %1427 = vmatprep.subr.bf16.mxu0 0
    %1428 = vmatpush1.bf16.msra.mxu0 0
    %1429 = vmatprep.subr.bf16.mxu0 0
    %1430 = vmatpush1.bf16.msra.mxu0 0
    %1431 = vmatprep.subr.bf16.mxu0 0
    %1432 = vmatpush1.bf16.msra.mxu0 0
    %1433 = vmatprep.subr.bf16.mxu0 0
    %1434 = vmatpush1.bf16.msra.mxu0 0
    %1435 = vmatprep.subr.bf16.mxu0 0
    %1436 = vmatpush1.bf16.msra.mxu0 0
    %1437 = vmatprep.subr.bf16.mxu0 0
    %1438 = vmatpush1.bf16.msra.mxu0 0
    %1439 = vmatprep.subr.bf16.mxu0 0
    %1440 = vmatpush1.bf16.msra.mxu0 0
    %1441 = vmatprep.subr.bf16.mxu0 0
    %1442 = vmatpush1.bf16.msra.mxu0 0
    %1443 = vmatprep.subr.bf16.mxu0 0
    %1444 = vmatpush1.bf16.msra.mxu0 0
    %1445 = vmatprep.subr.bf16.mxu0 0
    %1446 = vmatpush1.bf16.msra.mxu0 0
    %1447 = vmatprep.subr.bf16.mxu0 0
    %1448 = vmatpush1.bf16.msra.mxu0 0
    %1449 = vmatprep.subr.bf16.mxu0 0
    %1450 = vmatpush1.bf16.msra.mxu0 0
    %1451 = vmatprep.subr.bf16.mxu0 0
    %1452 = vmatpush1.bf16.msra.mxu0 0
    %1453 = vmatprep.subr.bf16.mxu0 0
    %1454 = vmatpush1.bf16.msra.mxu0 0
    %1455 = vmatprep.mubr.bf16.mxu0 0
    %1456 = vmatmul.mubr.bf16.gmra.mrb[0].mxu0 %v1421
    %v1457 = vpop.f32.mrb[0].mxu0
    %v1458 = vadd.f32 %v1382, %v1457
    %v1459 = vpop.f32.mrb[0].mxu0
    %v1460 = vadd.f32 %v1386, %v1459
    %v1461 = vpop.f32.mrb[0].mxu0
    %v1462 = vadd.f32 %v1382, %v1461
    %v1463 = vpop.f32.mrb[0].mxu0
    %v1464 = vadd.f32 %v1386, %v1463
    %1465 = vdwg.mxu0
    %1466 = vmatprep.subr.bf16.mxu0 %v1414
    %1467 = vmatpush1.bf16.msra.mxu0 %v1413
    %1468 = vmatprep.subr.bf16.mxu0 0
    %1469 = vmatpush1.bf16.msra.mxu0 0
    %1470 = vmatprep.subr.bf16.mxu0 0
    %1471 = vmatpush1.bf16.msra.mxu0 0
    %1472 = vmatprep.subr.bf16.mxu0 0
    %1473 = vmatpush1.bf16.msra.mxu0 0
    %1474 = vmatprep.subr.bf16.mxu0 0
    %1475 = vmatpush1.bf16.msra.mxu0 0
    %1476 = vmatprep.subr.bf16.mxu0 0
    %1477 = vmatpush1.bf16.msra.mxu0 0
    %1478 = vmatprep.subr.bf16.mxu0 0
    %1479 = vmatpush1.bf16.msra.mxu0 0
    %1480 = vmatprep.subr.bf16.mxu0 0
    %1481 = vmatpush1.bf16.msra.mxu0 0
    %1482 = vmatprep.subr.bf16.mxu0 0
    %1483 = vmatpush1.bf16.msra.mxu0 0
    %1484 = vmatprep.subr.bf16.mxu0 0
    %1485 = vmatpush1.bf16.msra.mxu0 0
    %1486 = vmatprep.subr.bf16.mxu0 0
    %1487 = vmatpush1.bf16.msra.mxu0 0
    %1488 = vmatprep.subr.bf16.mxu0 0
    %1489 = vmatpush1.bf16.msra.mxu0 0
    %1490 = vmatprep.subr.bf16.mxu0 0
    %1491 = vmatpush1.bf16.msra.mxu0 0
    %1492 = vmatprep.subr.bf16.mxu0 0
    %1493 = vmatpush1.bf16.msra.mxu0 0
    %1494 = vmatprep.subr.bf16.mxu0 0
    %1495 = vmatpush1.bf16.msra.mxu0 0
    %1496 = vmatprep.subr.bf16.mxu0 0
    %1497 = vmatpush1.bf16.msra.mxu0 0
    %1498 = vmatprep.mubr.bf16.mxu0 0
    %1499 = vmatmul.mubr.bf16.gmra.mrb[0].mxu0 %v1421
    %v1500 = vpop.f32.mrb[0].mxu0
    %v1501 = vadd.f32 %v1390, %v1500
    %v1502 = vpop.f32.mrb[0].mxu0
    %v1503 = vadd.f32 %v1394, %v1502
    %v1504 = vpop.f32.mrb[0].mxu0
    %v1505 = vadd.f32 %v1390, %v1504
    %v1506 = vpop.f32.mrb[0].mxu0
    %v1507 = vadd.f32 %v1394, %v1506
    %1508 = vdwg.mxu0
    %s1509 = sld [smem:[#allocation3 + $0x4]]
    %s1510 = sld [smem:[#allocation3 + $0x5]]
    %v1511 = vand.u32 2147483647, %v1458
    %vm1512 = vcmp.le.f32.partialorder %v1511, 0.7853982
    %vm1513 = vcmp.lt.s32.totalorder %v1458, 0
    %v1514 = vand.u32 %v1458, 2139095040
    %v1515 = vshrl.u32 %v1514, 23
    %v1516 = vsub.s32 %v1515, 127
    %v1517 = vand.u32 2147483647, %v1458
    %v1518 = vand.u32 %v1517, 8388607
    %v1519 = vor.u32 %v1518, 8388608
    %v1520 = vsub.s32 0, %v1519
    %v1521 = vadd.s32 %v1516, 1
    %vm1522 = vcmp.gt.s32.totalorder %v1521, 0
    %v1523 = vsel %vm1522, %v1521, 0
    %v1524 = vshrl.u32 %v1523, 5
    %v1525 = vand.u32 %v1523, 31
    %v1526 = vsub.s32 32, %v1525
    %v1527 = vshrl.u32 683565275, %v1526
    %v1528 = vshll.u32 683565275, %v1525
    %v1529 = vshrl.u32 2475754826, %v1526
    %v1530 = vor.u32 %v1528, %v1529
    %v1531 = vshll.u32 2475754826, %v1525
    %v1532 = vshrl.u32 2131351028, %v1526
    %v1533 = vor.u32 %v1531, %v1532
    %v1534 = vshll.u32 2131351028, %v1525
    %v1535 = vshrl.u32 2102212464, %v1526
    %v1536 = vor.u32 %v1534, %v1535
    %v1537 = vshll.u32 2102212464, %v1525
    %v1538 = vshrl.u32 920167782, %v1526
    %v1539 = vor.u32 %v1537, %v1538
    %v1540 = vshll.u32 920167782, %v1525
    %v1541 = vshrl.u32 1326507024, %v1526
    %v1542 = vor.u32 %v1540, %v1541
    %vm1543 = vcmp.lt.s32.totalorder %v1524, 1
    %vm1544 = vcmp.lt.s32.totalorder %v1524, 2
    %vm1545 = vcmp.lt.s32.totalorder %v1524, 3
    %vm1546 = vcmp.lt.s32.totalorder %v1524, 4
    %v1547 = vsel %vm1543, %v1527, %v1530
    %v1548 = vsel %vm1546, %v1536, 2102212464
    %v1549 = vsel %vm1545, %v1533, %v1548
    %v1550 = vsel %vm1544, %v1547, %v1549
    %v1551 = vsel %vm1543, %v1530, %v1533
    %v1552 = vsel %vm1546, %v1539, 920167782
    %v1553 = vsel %vm1545, %v1536, %v1552
    %v1554 = vsel %vm1544, %v1551, %v1553
    %v1555 = vsel %vm1543, %v1533, %v1536
    %v1556 = vsel %vm1546, %v1542, 1326507024
    %v1557 = vsel %vm1545, %v1539, %v1556
    %v1558 = vsel %vm1544, %v1555, %v1557
    %v1559 = vshll.u32 %v1519, 8
    %v1560 = vmul.u32.u64.compose %v1559, %v1558
    %v1561 = vextract.low.u32 %v1560
    %v1562 = vextract.high.u32 %v1560
    %v1563 = vmul.u32.u64.compose %v1559, %v1554
    %v1564 = vextract.low.u32 %v1563
    %v1565 = vextract.high.u32 %v1563
    %v1566 = vmul.u32 %v1559, %v1550
    %v1567 = vadd.s32 %v1562, %v1564
    %vm1568 = vc.u32 %v1562, %v1564
    %v1569 = vadd.s32 %v1565, 1
    %v1570 = vsel %vm1568, %v1569, %v1565
    %v1571 = vadd.s32 %v1566, %v1570
    %v1572 = vadd.s32 %v1571, 536870912
    %v1573 = vshrl.u32 %v1572, 30
    %v1574 = vshll.u32 %v1573, 30
    %v1575 = vsub.s32 %v1571, %v1574
    %vm1576 = vcmp.lt.s32.totalorder %v1575, 0
    %v1577 = vsub.s32 0, %v1575
    %v1578 = vsel %vm1576, %v1577, %v1575
    %v1579 = vclz %v1578
    %v1580 = vsub.s32 %v1579, 2
    %vm1581 = vcmp.gt.s32.totalorder 0, %v1580
    %v1582 = vsel %vm1581, 0, %v1580
    %v1583 = vsub.s32 32, %v1582
    %v1584 = vshll.u32 %v1575, %v1582
    %v1585 = vshrl.u32 %v1567, %v1583
    %v1586 = vor.u32 %v1584, %v1585
    %v1587 = vsub.s32 4294967266, %v1582
    %v1588 = vadd.s32 %v1587, 127
    %v1589 = vshll.u32 %v1588, 23
    %v1590 = vor.u32 4788187, %v1589
    %v1591 = vand.u32 2147483647, %v1590
    %v1593 = vcvt.s32.f32 %v1586
    %v1594 = vmul.f32 %v1593, %v1591
    %v1595 = vxor.u32 %v1594, 2147483648
    %v1596 = vsel %vm1513, %v1595, %v1594
    %v1597 = vsub.s32 4, %v1573
    %v1598 = vsel %vm1513, %v1597, %v1573
    %v1599 = vsel %vm1512, %v1458, %v1596
    %v1600 = vsel %vm1512, 0, %v1598
    %v1601 = vcosq.f32.pop %v1599
    %v1602 = vsinq.f32.pop %v1599
    %vm1603 = vweird.f32 %v1458
    %v1604 = vand.u32 %v1600, 3
    %vm1605 = vcmp.lt.s32.totalorder %v1604, 2
    %vm1606 = vcmp.eq.s32.totalorder %v1604, 0
    %v1607 = vxor.u32 %v1602, 2147483648
    %v1608 = vsel %vm1606, %v1601, %v1607
    %vm1609 = vcmp.eq.s32.totalorder %v1604, 2
    %v1610 = vxor.u32 %v1601, 2147483648
    %v1611 = vsel %vm1609, %v1610, %v1602
    %v1612 = vsel %vm1605, %v1608, %v1611
    %v1613 = vsel %vm1603, nan, %v1612
    %v1614 = vand.u32 2147483647, %v1462
    %vm1615 = vcmp.le.f32.partialorder %v1614, 0.7853982
    %vm1616 = vcmp.lt.s32.totalorder %v1462, 0
    %v1617 = vand.u32 %v1462, 2139095040
    %v1618 = vshrl.u32 %v1617, 23
    %v1619 = vsub.s32 %v1618, 127
    %v1620 = vand.u32 2147483647, %v1462
    %v1621 = vand.u32 %v1620, 8388607
    %v1622 = vor.u32 %v1621, 8388608
    %v1623 = vsub.s32 0, %v1622
    %v1624 = vadd.s32 %v1619, 1
    %vm1625 = vcmp.gt.s32.totalorder %v1624, 0
    %v1626 = vsel %vm1625, %v1624, 0
    %v1627 = vshrl.u32 %v1626, 5
    %v1628 = vand.u32 %v1626, 31
    %v1629 = vsub.s32 32, %v1628
    %v1630 = vshrl.u32 683565275, %v1629
    %v1631 = vshll.u32 683565275, %v1628
    %v1632 = vshrl.u32 2475754826, %v1629
    %v1633 = vor.u32 %v1631, %v1632
    %v1634 = vshll.u32 2475754826, %v1628
    %v1635 = vshrl.u32 2131351028, %v1629
    %v1636 = vor.u32 %v1634, %v1635
    %v1637 = vshll.u32 2131351028, %v1628
    %v1638 = vshrl.u32 2102212464, %v1629
    %v1639 = vor.u32 %v1637, %v1638
    %v1640 = vshll.u32 2102212464, %v1628
    %v1641 = vshrl.u32 920167782, %v1629
    %v1642 = vor.u32 %v1640, %v1641
    %v1643 = vshll.u32 920167782, %v1628
    %v1644 = vshrl.u32 1326507024, %v1629
    %v1645 = vor.u32 %v1643, %v1644
    %vm1646 = vcmp.lt.s32.totalorder %v1627, 1
    %vm1647 = vcmp.lt.s32.totalorder %v1627, 2
    %vm1648 = vcmp.lt.s32.totalorder %v1627, 3
    %vm1649 = vcmp.lt.s32.totalorder %v1627, 4
    %v1650 = vsel %vm1646, %v1630, %v1633
    %v1651 = vsel %vm1649, %v1639, 2102212464
    %v1652 = vsel %vm1648, %v1636, %v1651
    %v1653 = vsel %vm1647, %v1650, %v1652
    %v1654 = vsel %vm1646, %v1633, %v1636
    %v1655 = vsel %vm1649, %v1642, 920167782
    %v1656 = vsel %vm1648, %v1639, %v1655
    %v1657 = vsel %vm1647, %v1654, %v1656
    %v1658 = vsel %vm1646, %v1636, %v1639
    %v1659 = vsel %vm1649, %v1645, 1326507024
    %v1660 = vsel %vm1648, %v1642, %v1659
    %v1661 = vsel %vm1647, %v1658, %v1660
    %v1662 = vshll.u32 %v1622, 8
    %v1663 = vmul.u32.u64.compose %v1662, %v1661
    %v1664 = vextract.low.u32 %v1663
    %v1665 = vextract.high.u32 %v1663
    %v1666 = vmul.u32.u64.compose %v1662, %v1657
    %v1667 = vextract.low.u32 %v1666
    %v1668 = vextract.high.u32 %v1666
    %v1669 = vmul.u32 %v1662, %v1653
    %v1670 = vadd.s32 %v1665, %v1667
    %vm1671 = vc.u32 %v1665, %v1667
    %v1672 = vadd.s32 %v1668, 1
    %v1673 = vsel %vm1671, %v1672, %v1668
    %v1674 = vadd.s32 %v1669, %v1673
    %v1675 = vadd.s32 %v1674, 536870912
    %v1676 = vshrl.u32 %v1675, 30
    %v1677 = vshll.u32 %v1676, 30
    %v1678 = vsub.s32 %v1674, %v1677
    %vm1679 = vcmp.lt.s32.totalorder %v1678, 0
    %v1680 = vsub.s32 0, %v1678
    %v1681 = vsel %vm1679, %v1680, %v1678
    %v1682 = vclz %v1681
    %v1683 = vsub.s32 %v1682, 2
    %vm1684 = vcmp.gt.s32.totalorder 0, %v1683
    %v1685 = vsel %vm1684, 0, %v1683
    %v1686 = vsub.s32 32, %v1685
    %v1687 = vshll.u32 %v1678, %v1685
    %v1688 = vshrl.u32 %v1670, %v1686
    %v1689 = vor.u32 %v1687, %v1688
    %v1690 = vsub.s32 4294967266, %v1685
    %v1691 = vadd.s32 %v1690, 127
    %v1692 = vshll.u32 %v1691, 23
    %v1693 = vor.u32 4788187, %v1692
    %v1694 = vand.u32 2147483647, %v1693
    %v1696 = vcvt.s32.f32 %v1689
    %v1697 = vmul.f32 %v1696, %v1694
    %v1698 = vxor.u32 %v1697, 2147483648
    %v1699 = vsel %vm1616, %v1698, %v1697
    %v1700 = vsub.s32 4, %v1676
    %v1701 = vsel %vm1616, %v1700, %v1676
    %v1702 = vsel %vm1615, %v1462, %v1699
    %v1703 = vsel %vm1615, 0, %v1701
    %v1704 = vcosq.f32.pop %v1702
    %v1705 = vsinq.f32.pop %v1702
    %vm1706 = vweird.f32 %v1462
    %v1707 = vand.u32 %v1703, 3
    %vm1708 = vcmp.lt.s32.totalorder %v1707, 2
    %vm1709 = vcmp.eq.s32.totalorder %v1707, 0
    %v1710 = vxor.u32 %v1705, 2147483648
    %v1711 = vsel %vm1709, %v1704, %v1710
    %vm1712 = vcmp.eq.s32.totalorder %v1707, 2
    %v1713 = vxor.u32 %v1704, 2147483648
    %v1714 = vsel %vm1712, %v1713, %v1705
    %v1715 = vsel %vm1708, %v1711, %v1714
    %v1716 = vsel %vm1706, nan, %v1715
    %v1717 = vstv %s1509
    %v1718 = vmul.f32 %v1717, %v1613
    %v1719 = vmul.f32 %v1717, %v1716
    %v1720 = vand.u32 2147483647, %v1458
    %vm1721 = vcmp.le.f32.partialorder %v1720, 0.7853982
    %vm1722 = vcmp.lt.s32.totalorder %v1458, 0
    %v1723 = vand.u32 %v1458, 2139095040
    %v1724 = vshrl.u32 %v1723, 23
    %v1725 = vsub.s32 %v1724, 127
    %v1726 = vand.u32 2147483647, %v1458
    %v1727 = vand.u32 %v1726, 8388607
    %v1728 = vor.u32 %v1727, 8388608
    %v1729 = vsub.s32 0, %v1728
    %v1730 = vadd.s32 %v1725, 1
    %vm1731 = vcmp.gt.s32.totalorder %v1730, 0
    %v1732 = vsel %vm1731, %v1730, 0
    %v1733 = vshrl.u32 %v1732, 5
    %v1734 = vand.u32 %v1732, 31
    %v1735 = vsub.s32 32, %v1734
    %v1736 = vshrl.u32 683565275, %v1735
    %v1737 = vshll.u32 683565275, %v1734
    %v1738 = vshrl.u32 2475754826, %v1735
    %v1739 = vor.u32 %v1737, %v1738
    %v1740 = vshll.u32 2475754826, %v1734
    %v1741 = vshrl.u32 2131351028, %v1735
    %v1742 = vor.u32 %v1740, %v1741
    %v1743 = vshll.u32 2131351028, %v1734
    %v1744 = vshrl.u32 2102212464, %v1735
    %v1745 = vor.u32 %v1743, %v1744
    %v1746 = vshll.u32 2102212464, %v1734
    %v1747 = vshrl.u32 920167782, %v1735
    %v1748 = vor.u32 %v1746, %v1747
    %v1749 = vshll.u32 920167782, %v1734
    %v1750 = vshrl.u32 1326507024, %v1735
    %v1751 = vor.u32 %v1749, %v1750
    %vm1752 = vcmp.lt.s32.totalorder %v1733, 1
    %vm1753 = vcmp.lt.s32.totalorder %v1733, 2
    %vm1754 = vcmp.lt.s32.totalorder %v1733, 3
    %vm1755 = vcmp.lt.s32.totalorder %v1733, 4
    %v1756 = vsel %vm1752, %v1736, %v1739
    %v1757 = vsel %vm1755, %v1745, 2102212464
    %v1758 = vsel %vm1754, %v1742, %v1757
    %v1759 = vsel %vm1753, %v1756, %v1758
    %v1760 = vsel %vm1752, %v1739, %v1742
    %v1761 = vsel %vm1755, %v1748, 920167782
    %v1762 = vsel %vm1754, %v1745, %v1761
    %v1763 = vsel %vm1753, %v1760, %v1762
    %v1764 = vsel %vm1752, %v1742, %v1745
    %v1765 = vsel %vm1755, %v1751, 1326507024
    %v1766 = vsel %vm1754, %v1748, %v1765
    %v1767 = vsel %vm1753, %v1764, %v1766
    %v1768 = vshll.u32 %v1728, 8
    %v1769 = vmul.u32.u64.compose %v1768, %v1767
    %v1770 = vextract.low.u32 %v1769
    %v1771 = vextract.high.u32 %v1769
    %v1772 = vmul.u32.u64.compose %v1768, %v1763
    %v1773 = vextract.low.u32 %v1772
    %v1774 = vextract.high.u32 %v1772
    %v1775 = vmul.u32 %v1768, %v1759
    %v1776 = vadd.s32 %v1771, %v1773
    %vm1777 = vc.u32 %v1771, %v1773
    %v1778 = vadd.s32 %v1774, 1
    %v1779 = vsel %vm1777, %v1778, %v1774
    %v1780 = vadd.s32 %v1775, %v1779
    %v1781 = vadd.s32 %v1780, 536870912
    %v1782 = vshrl.u32 %v1781, 30
    %v1783 = vshll.u32 %v1782, 30
    %v1784 = vsub.s32 %v1780, %v1783
    %vm1785 = vcmp.lt.s32.totalorder %v1784, 0
    %v1786 = vsub.s32 0, %v1784
    %v1787 = vsel %vm1785, %v1786, %v1784
    %v1788 = vclz %v1787
    %v1789 = vsub.s32 %v1788, 2
    %vm1790 = vcmp.gt.s32.totalorder 0, %v1789
    %v1791 = vsel %vm1790, 0, %v1789
    %v1792 = vsub.s32 32, %v1791
    %v1793 = vshll.u32 %v1784, %v1791
    %v1794 = vshrl.u32 %v1776, %v1792
    %v1795 = vor.u32 %v1793, %v1794
    %v1796 = vsub.s32 4294967266, %v1791
    %v1797 = vadd.s32 %v1796, 127
    %v1798 = vshll.u32 %v1797, 23
    %v1799 = vor.u32 4788187, %v1798
    %v1800 = vand.u32 2147483647, %v1799
    %v1802 = vcvt.s32.f32 %v1795
    %v1803 = vmul.f32 %v1802, %v1800
    %v1804 = vxor.u32 %v1803, 2147483648
    %v1805 = vsel %vm1722, %v1804, %v1803
    %v1806 = vsub.s32 4, %v1782
    %v1807 = vsel %vm1722, %v1806, %v1782
    %v1808 = vsel %vm1721, %v1458, %v1805
    %v1809 = vsel %vm1721, 0, %v1807
    %v1810 = vcosq.f32.pop %v1808
    %v1811 = vsinq.f32.pop %v1808
    %vm1812 = vweird.f32 %v1458
    %v1813 = vadd.s32 %v1809, 3
    %v1814 = vand.u32 %v1813, 3
    %vm1815 = vcmp.lt.s32.totalorder %v1814, 2
    %vm1816 = vcmp.eq.s32.totalorder %v1814, 0
    %v1817 = vxor.u32 %v1811, 2147483648
    %v1818 = vsel %vm1816, %v1810, %v1817
    %vm1819 = vcmp.eq.s32.totalorder %v1814, 2
    %v1820 = vxor.u32 %v1810, 2147483648
    %v1821 = vsel %vm1819, %v1820, %v1811
    %v1822 = vsel %vm1815, %v1818, %v1821
    %v1823 = vsel %vm1812, nan, %v1822
    %v1824 = vand.u32 2147483647, %v1462
    %vm1825 = vcmp.le.f32.partialorder %v1824, 0.7853982
    %vm1826 = vcmp.lt.s32.totalorder %v1462, 0
    %v1827 = vand.u32 %v1462, 2139095040
    %v1828 = vshrl.u32 %v1827, 23
    %v1829 = vsub.s32 %v1828, 127
    %v1830 = vand.u32 2147483647, %v1462
    %v1831 = vand.u32 %v1830, 8388607
    %v1832 = vor.u32 %v1831, 8388608
    %v1833 = vsub.s32 0, %v1832
    %v1834 = vadd.s32 %v1829, 1
    %vm1835 = vcmp.gt.s32.totalorder %v1834, 0
    %v1836 = vsel %vm1835, %v1834, 0
    %v1837 = vshrl.u32 %v1836, 5
    %v1838 = vand.u32 %v1836, 31
    %v1839 = vsub.s32 32, %v1838
    %v1840 = vshrl.u32 683565275, %v1839
    %v1841 = vshll.u32 683565275, %v1838
    %v1842 = vshrl.u32 2475754826, %v1839
    %v1843 = vor.u32 %v1841, %v1842
    %v1844 = vshll.u32 2475754826, %v1838
    %v1845 = vshrl.u32 2131351028, %v1839
    %v1846 = vor.u32 %v1844, %v1845
    %v1847 = vshll.u32 2131351028, %v1838
    %v1848 = vshrl.u32 2102212464, %v1839
    %v1849 = vor.u32 %v1847, %v1848
    %v1850 = vshll.u32 2102212464, %v1838
    %v1851 = vshrl.u32 920167782, %v1839
    %v1852 = vor.u32 %v1850, %v1851
    %v1853 = vshll.u32 920167782, %v1838
    %v1854 = vshrl.u32 1326507024, %v1839
    %v1855 = vor.u32 %v1853, %v1854
    %vm1856 = vcmp.lt.s32.totalorder %v1837, 1
    %vm1857 = vcmp.lt.s32.totalorder %v1837, 2
    %vm1858 = vcmp.lt.s32.totalorder %v1837, 3
    %vm1859 = vcmp.lt.s32.totalorder %v1837, 4
    %v1860 = vsel %vm1856, %v1840, %v1843
    %v1861 = vsel %vm1859, %v1849, 2102212464
    %v1862 = vsel %vm1858, %v1846, %v1861
    %v1863 = vsel %vm1857, %v1860, %v1862
    %v1864 = vsel %vm1856, %v1843, %v1846
    %v1865 = vsel %vm1859, %v1852, 920167782
    %v1866 = vsel %vm1858, %v1849, %v1865
    %v1867 = vsel %vm1857, %v1864, %v1866
    %v1868 = vsel %vm1856, %v1846, %v1849
    %v1869 = vsel %vm1859, %v1855, 1326507024
    %v1870 = vsel %vm1858, %v1852, %v1869
    %v1871 = vsel %vm1857, %v1868, %v1870
    %v1872 = vshll.u32 %v1832, 8
    %v1873 = vmul.u32.u64.compose %v1872, %v1871
    %v1874 = vextract.low.u32 %v1873
    %v1875 = vextract.high.u32 %v1873
    %v1876 = vmul.u32.u64.compose %v1872, %v1867
    %v1877 = vextract.low.u32 %v1876
    %v1878 = vextract.high.u32 %v1876
    %v1879 = vmul.u32 %v1872, %v1863
    %v1880 = vadd.s32 %v1875, %v1877
    %vm1881 = vc.u32 %v1875, %v1877
    %v1882 = vadd.s32 %v1878, 1
    %v1883 = vsel %vm1881, %v1882, %v1878
    %v1884 = vadd.s32 %v1879, %v1883
    %v1885 = vadd.s32 %v1884, 536870912
    %v1886 = vshrl.u32 %v1885, 30
    %v1887 = vshll.u32 %v1886, 30
    %v1888 = vsub.s32 %v1884, %v1887
    %vm1889 = vcmp.lt.s32.totalorder %v1888, 0
    %v1890 = vsub.s32 0, %v1888
    %v1891 = vsel %vm1889, %v1890, %v1888
    %v1892 = vclz %v1891
    %v1893 = vsub.s32 %v1892, 2
    %vm1894 = vcmp.gt.s32.totalorder 0, %v1893
    %v1895 = vsel %vm1894, 0, %v1893
    %v1896 = vsub.s32 32, %v1895
    %v1897 = vshll.u32 %v1888, %v1895
    %v1898 = vshrl.u32 %v1880, %v1896
    %v1899 = vor.u32 %v1897, %v1898
    %v1900 = vsub.s32 4294967266, %v1895
    %v1901 = vadd.s32 %v1900, 127
    %v1902 = vshll.u32 %v1901, 23
    %v1903 = vor.u32 4788187, %v1902
    %v1904 = vand.u32 2147483647, %v1903
    %v1906 = vcvt.s32.f32 %v1899
    %v1907 = vmul.f32 %v1906, %v1904
    %v1908 = vxor.u32 %v1907, 2147483648
    %v1909 = vsel %vm1826, %v1908, %v1907
    %v1910 = vsub.s32 4, %v1886
    %v1911 = vsel %vm1826, %v1910, %v1886
    %v1912 = vsel %vm1825, %v1462, %v1909
    %v1913 = vsel %vm1825, 0, %v1911
    %v1914 = vcosq.f32.pop %v1912
    %v1915 = vsinq.f32.pop %v1912
    %vm1916 = vweird.f32 %v1462
    %v1917 = vadd.s32 %v1913, 3
    %v1918 = vand.u32 %v1917, 3
    %vm1919 = vcmp.lt.s32.totalorder %v1918, 2
    %vm1920 = vcmp.eq.s32.totalorder %v1918, 0
    %v1921 = vxor.u32 %v1915, 2147483648
    %v1922 = vsel %vm1920, %v1914, %v1921
    %vm1923 = vcmp.eq.s32.totalorder %v1918, 2
    %v1924 = vxor.u32 %v1914, 2147483648
    %v1925 = vsel %vm1923, %v1924, %v1915
    %v1926 = vsel %vm1919, %v1922, %v1925
    %v1927 = vsel %vm1916, nan, %v1926
    %v1928 = vmul.f32 %v1717, %v1823
    %v1929 = vmul.f32 %v1717, %v1927
    %v1930 = vmul.f32 %v1460, 0.5
    %v1931 = vmul.f32 %v1464, 0.5
    %v1932 = vmul.f32 %v1460, 0.70710677
    %v1933 = vmul.f32 %v1464, 0.70710677
    %vm1934 = vcmp.ge.f32.partialorder %v1932, 0.0
    %vm1935 = vcmp.ge.f32.partialorder %v1933, 0.0
    %v1936 = vsel %vm1934, 1.0, -1.0
    %v1937 = vsel %vm1935, 1.0, -1.0
    %v1938 = vand.u32 2147483647, %v1932
    %v1939 = vand.u32 2147483647, %v1933
    %v1940 = vmul.f32 %v1938, 0.3275911
    %v1941 = vmul.f32 %v1939, 0.3275911
    %v1942 = vadd.f32 %v1940, 1.0
    %v1943 = vadd.f32 %v1941, 1.0
    %v1944 = vrcp.pop %v1942
    %v1945 = vmul.f32 1.0, %v1944
    %v1946 = vrcp.pop %v1943
    %v1947 = vmul.f32 1.0, %v1946
    %v1948 = vmul.f32 %v1945, 1.0614054
    %v1949 = vmul.f32 %v1947, 1.0614054
    %v1950 = vadd.f32 %v1948, -1.4531521
    %v1951 = vadd.f32 %v1949, -1.4531521
    %v1952 = vmul.f32 %v1950, %v1945
    %v1953 = vmul.f32 %v1951, %v1947
    %v1954 = vadd.f32 %v1952, 1.4214138
    %v1955 = vadd.f32 %v1953, 1.4214138
    %v1956 = vmul.f32 %v1954, %v1945
    %v1957 = vmul.f32 %v1955, %v1947
    %v1958 = vadd.f32 %v1956, -0.28449672
    %v1959 = vadd.f32 %v1957, -0.28449672
    %v1960 = vmul.f32 %v1958, %v1945
    %v1961 = vmul.f32 %v1959, %v1947
    %v1962 = vadd.f32 %v1960, 0.2548296
    %v1963 = vadd.f32 %v1961, 0.2548296
    %v1964 = vmul.f32 %v1962, %v1945
    %v1965 = vmul.f32 %v1963, %v1947
    %v1966 = vsub.f32 0.0, %v1938
    %v1967 = vsub.f32 0.0, %v1939
    %v1968 = vmul.f32 %v1966, %v1938
    %v1969 = vmul.f32 %v1967, %v1939
    %v1970 = vmul.f32 %v1968, 1.442695
    %v1971 = vpow.pop %v1970
    %v1972 = vmul.f32 %v1969, 1.442695
    %v1973 = vpow.pop %v1972
    %v1974 = vmul.f32 %v1964, %v1971
    %v1975 = vmul.f32 %v1965, %v1973
    %v1976 = vsub.f32 1.0, %v1974
    %v1977 = vsub.f32 1.0, %v1975
    %v1978 = vmul.f32 %v1936, %v1976
    %v1979 = vmul.f32 %v1937, %v1977
    %v1980 = vadd.f32 %v1978, 1.0
    %v1981 = vadd.f32 %v1979, 1.0
    %v1982 = vmul.f32 %v1930, %v1980
    %v1983 = vmul.f32 %v1931, %v1981
    %v1984 = vstv %s1510
    %v1985 = vmul.f32 %v1984, %v1982
    %v1986 = vmul.f32 %v1984, %v1983
    %1989 = vrot.lane.b32.xlu0 %v1928, 8
    %v1990 = vpop.permute.xlu0 %1989
    %1991 = vrot.lane.b32.xlu0 %v1929, 8
    %v1992 = vpop.permute.xlu0 %1991
    %1997 = vrot.lane.b32.xlu0 %v1985, 16
    %v1998 = vpop.permute.xlu0 %1997
    %1999 = vrot.lane.b32.xlu0 %v1986, 16
    %v2000 = vpop.permute.xlu0 %1999
    %v2003 = vsel %vm871, %v1718, %v1990
    %v2004 = vsel %vm871, %v1719, %v1992
    %v2005 = vsel %vm1419, %v2003, %v1998
    %v2006 = vsel %vm1419, %v2004, %v2000
    %v2007 = vpack.c.bf16 %v1371, %v1370
    %v2008 = vld [vmem:[%s6] sm:$0xff]
    %v2009 = vld [vmem:[%s6 + $0x8] sm:$0xff]
    %v2010 = vld [vmem:[%s6 + $0x10] sm:$0xff]
    %v2011 = vld [vmem:[%s6 + $0x18] sm:$0xff]
    %v2012 = vld [vmem:[#allocation11] sm:$0xf]
    %v2014 = vlaneseq
    %v2015 = vshrl.u32 %v2014, 7
    %v2016 = vsub.s32 0, %v2015
    %v2017 = vrot.slane %v2012, %v2016
    %v2018 = vlaneseq
    %v2019 = vshrl.u32 %v2018, 7
    %v2020 = vsub.s32 1, %v2019
    %v2021 = vrot.slane %v2012, %v2020
    %v2022 = vlaneseq
    %v2023 = vshrl.u32 %v2022, 7
    %v2024 = vsub.s32 2, %v2023
    %v2025 = vrot.slane %v2012, %v2024
    %v2026 = vlaneseq
    %v2027 = vshrl.u32 %v2026, 7
    %v2028 = vsub.s32 3, %v2027
    %v2029 = vrot.slane %v2012, %v2028
    %v2038 = vunpack.c.l.b16 %v2008
    %v2039 = vunpack.c.h.b16 %v2008
    %v2040 = vunpack.c.l.b16 %v2009
    %v2041 = vunpack.c.h.b16 %v2009
    %v2042 = vunpack.c.l.b16 %v2010
    %v2043 = vunpack.c.h.b16 %v2010
    %v2044 = vunpack.c.l.b16 %v2011
    %v2045 = vunpack.c.h.b16 %v2011
    %v2046 = vpack.c.b16 %v2042, %v2038
    %v2047 = vpack.c.b16 %v2043, %v2039
    %v2048 = vpack.c.b16 %v2044, %v2040
    %v2049 = vpack.c.b16 %v2045, %v2041
    %v2055 = vsel %vm1419, %v2007, 0
    %2057 = vmatprep.subr.bf16.mxu0 %v2047
    %2058 = vmatpush1.bf16.msra.mxu0 %v2046
    %2059 = vmatprep.subr.bf16.mxu0 0
    %2060 = vmatpush1.bf16.msra.mxu0 0
    %2061 = vmatprep.subr.bf16.mxu0 0
    %2062 = vmatpush1.bf16.msra.mxu0 0
    %2063 = vmatprep.subr.bf16.mxu0 0
    %2064 = vmatpush1.bf16.msra.mxu0 0
    %2065 = vmatprep.subr.bf16.mxu0 0
    %2066 = vmatpush1.bf16.msra.mxu0 0
    %2067 = vmatprep.subr.bf16.mxu0 0
    %2068 = vmatpush1.bf16.msra.mxu0 0
    %2069 = vmatprep.subr.bf16.mxu0 0
    %2070 = vmatpush1.bf16.msra.mxu0 0
    %2071 = vmatprep.subr.bf16.mxu0 0
    %2072 = vmatpush1.bf16.msra.mxu0 0
    %2073 = vmatprep.subr.bf16.mxu0 0
    %2074 = vmatpush1.bf16.msra.mxu0 0
    %2075 = vmatprep.subr.bf16.mxu0 0
    %2076 = vmatpush1.bf16.msra.mxu0 0
    %2077 = vmatprep.subr.bf16.mxu0 0
    %2078 = vmatpush1.bf16.msra.mxu0 0
    %2079 = vmatprep.subr.bf16.mxu0 0
    %2080 = vmatpush1.bf16.msra.mxu0 0
    %2081 = vmatprep.subr.bf16.mxu0 0
    %2082 = vmatpush1.bf16.msra.mxu0 0
    %2083 = vmatprep.subr.bf16.mxu0 0
    %2084 = vmatpush1.bf16.msra.mxu0 0
    %2085 = vmatprep.subr.bf16.mxu0 0
    %2086 = vmatpush1.bf16.msra.mxu0 0
    %2087 = vmatprep.subr.bf16.mxu0 0
    %2088 = vmatpush1.bf16.msra.mxu0 0
    %2089 = vmatprep.mubr.bf16.mxu0 0
    %2090 = vmatmul.mubr.bf16.gmra.mrb[0].mxu0 %v2055
    %v2091 = vpop.f32.mrb[0].mxu0
    %v2092 = vadd.f32 %v2017, %v2091
    %v2093 = vpop.f32.mrb[0].mxu0
    %v2094 = vadd.f32 %v2021, %v2093
    %v2095 = vpop.f32.mrb[0].mxu0
    %v2096 = vadd.f32 %v2017, %v2095
    %v2097 = vpop.f32.mrb[0].mxu0
    %v2098 = vadd.f32 %v2021, %v2097
    %2099 = vdwg.mxu0
    %2100 = vmatprep.subr.bf16.mxu0 %v2049
    %2101 = vmatpush1.bf16.msra.mxu0 %v2048
    %2102 = vmatprep.subr.bf16.mxu0 0
    %2103 = vmatpush1.bf16.msra.mxu0 0
    %2104 = vmatprep.subr.bf16.mxu0 0
    %2105 = vmatpush1.bf16.msra.mxu0 0
    %2106 = vmatprep.subr.bf16.mxu0 0
    %2107 = vmatpush1.bf16.msra.mxu0 0
    %2108 = vmatprep.subr.bf16.mxu0 0
    %2109 = vmatpush1.bf16.msra.mxu0 0
    %2110 = vmatprep.subr.bf16.mxu0 0
    %2111 = vmatpush1.bf16.msra.mxu0 0
    %2112 = vmatprep.subr.bf16.mxu0 0
    %2113 = vmatpush1.bf16.msra.mxu0 0
    %2114 = vmatprep.subr.bf16.mxu0 0
    %2115 = vmatpush1.bf16.msra.mxu0 0
    %2116 = vmatprep.subr.bf16.mxu0 0
    %2117 = vmatpush1.bf16.msra.mxu0 0
    %2118 = vmatprep.subr.bf16.mxu0 0
    %2119 = vmatpush1.bf16.msra.mxu0 0
    %2120 = vmatprep.subr.bf16.mxu0 0
    %2121 = vmatpush1.bf16.msra.mxu0 0
    %2122 = vmatprep.subr.bf16.mxu0 0
    %2123 = vmatpush1.bf16.msra.mxu0 0
    %2124 = vmatprep.subr.bf16.mxu0 0
    %2125 = vmatpush1.bf16.msra.mxu0 0
    %2126 = vmatprep.subr.bf16.mxu0 0
    %2127 = vmatpush1.bf16.msra.mxu0 0
    %2128 = vmatprep.subr.bf16.mxu0 0
    %2129 = vmatpush1.bf16.msra.mxu0 0
    %2130 = vmatprep.subr.bf16.mxu0 0
    %2131 = vmatpush1.bf16.msra.mxu0 0
    %2132 = vmatprep.mubr.bf16.mxu0 0
    %2133 = vmatmul.mubr.bf16.gmra.mrb[0].mxu0 %v2055
    %v2134 = vpop.f32.mrb[0].mxu0
    %v2135 = vadd.f32 %v2025, %v2134
    %v2136 = vpop.f32.mrb[0].mxu0
    %v2137 = vadd.f32 %v2029, %v2136
    %v2138 = vpop.f32.mrb[0].mxu0
    %v2139 = vadd.f32 %v2025, %v2138
    %v2140 = vpop.f32.mrb[0].mxu0
    %v2141 = vadd.f32 %v2029, %v2140
    %2142 = vdwg.mxu0
    %s2143 = sld [smem:[#allocation3 + $0x6]]
    %s2144 = sld [smem:[#allocation3 + $0x7]]
    %v2145 = vand.u32 2147483647, %v2092
    %vm2146 = vcmp.le.f32.partialorder %v2145, 0.7853982
    %vm2147 = vcmp.lt.s32.totalorder %v2092, 0
    %v2148 = vand.u32 %v2092, 2139095040
    %v2149 = vshrl.u32 %v2148, 23
    %v2150 = vsub.s32 %v2149, 127
    %v2151 = vand.u32 2147483647, %v2092
    %v2152 = vand.u32 %v2151, 8388607
    %v2153 = vor.u32 %v2152, 8388608
    %v2154 = vsub.s32 0, %v2153
    %v2155 = vadd.s32 %v2150, 1
    %vm2156 = vcmp.gt.s32.totalorder %v2155, 0
    %v2157 = vsel %vm2156, %v2155, 0
    %v2158 = vshrl.u32 %v2157, 5
    %v2159 = vand.u32 %v2157, 31
    %v2160 = vsub.s32 32, %v2159
    %v2161 = vshrl.u32 683565275, %v2160
    %v2162 = vshll.u32 683565275, %v2159
    %v2163 = vshrl.u32 2475754826, %v2160
    %v2164 = vor.u32 %v2162, %v2163
    %v2165 = vshll.u32 2475754826, %v2159
    %v2166 = vshrl.u32 2131351028, %v2160
    %v2167 = vor.u32 %v2165, %v2166
    %v2168 = vshll.u32 2131351028, %v2159
    %v2169 = vshrl.u32 2102212464, %v2160
    %v2170 = vor.u32 %v2168, %v2169
    %v2171 = vshll.u32 2102212464, %v2159
    %v2172 = vshrl.u32 920167782, %v2160
    %v2173 = vor.u32 %v2171, %v2172
    %v2174 = vshll.u32 920167782, %v2159
    %v2175 = vshrl.u32 1326507024, %v2160
    %v2176 = vor.u32 %v2174, %v2175
    %vm2177 = vcmp.lt.s32.totalorder %v2158, 1
    %vm2178 = vcmp.lt.s32.totalorder %v2158, 2
    %vm2179 = vcmp.lt.s32.totalorder %v2158, 3
    %vm2180 = vcmp.lt.s32.totalorder %v2158, 4
    %v2181 = vsel %vm2177, %v2161, %v2164
    %v2182 = vsel %vm2180, %v2170, 2102212464
    %v2183 = vsel %vm2179, %v2167, %v2182
    %v2184 = vsel %vm2178, %v2181, %v2183
    %v2185 = vsel %vm2177, %v2164, %v2167
    %v2186 = vsel %vm2180, %v2173, 920167782
    %v2187 = vsel %vm2179, %v2170, %v2186
    %v2188 = vsel %vm2178, %v2185, %v2187
    %v2189 = vsel %vm2177, %v2167, %v2170
    %v2190 = vsel %vm2180, %v2176, 1326507024
    %v2191 = vsel %vm2179, %v2173, %v2190
    %v2192 = vsel %vm2178, %v2189, %v2191
    %v2193 = vshll.u32 %v2153, 8
    %v2194 = vmul.u32.u64.compose %v2193, %v2192
    %v2195 = vextract.low.u32 %v2194
    %v2196 = vextract.high.u32 %v2194
    %v2197 = vmul.u32.u64.compose %v2193, %v2188
    %v2198 = vextract.low.u32 %v2197
    %v2199 = vextract.high.u32 %v2197
    %v2200 = vmul.u32 %v2193, %v2184
    %v2201 = vadd.s32 %v2196, %v2198
    %vm2202 = vc.u32 %v2196, %v2198
    %v2203 = vadd.s32 %v2199, 1
    %v2204 = vsel %vm2202, %v2203, %v2199
    %v2205 = vadd.s32 %v2200, %v2204
    %v2206 = vadd.s32 %v2205, 536870912
    %v2207 = vshrl.u32 %v2206, 30
    %v2208 = vshll.u32 %v2207, 30
    %v2209 = vsub.s32 %v2205, %v2208
    %vm2210 = vcmp.lt.s32.totalorder %v2209, 0
    %v2211 = vsub.s32 0, %v2209
    %v2212 = vsel %vm2210, %v2211, %v2209
    %v2213 = vclz %v2212
    %v2214 = vsub.s32 %v2213, 2
    %vm2215 = vcmp.gt.s32.totalorder 0, %v2214
    %v2216 = vsel %vm2215, 0, %v2214
    %v2217 = vsub.s32 32, %v2216
    %v2218 = vshll.u32 %v2209, %v2216
    %v2219 = vshrl.u32 %v2201, %v2217
    %v2220 = vor.u32 %v2218, %v2219
    %v2221 = vsub.s32 4294967266, %v2216
    %v2222 = vadd.s32 %v2221, 127
    %v2223 = vshll.u32 %v2222, 23
    %v2224 = vor.u32 4788187, %v2223
    %v2225 = vand.u32 2147483647, %v2224
    %v2227 = vcvt.s32.f32 %v2220
    %v2228 = vmul.f32 %v2227, %v2225
    %v2229 = vxor.u32 %v2228, 2147483648
    %v2230 = vsel %vm2147, %v2229, %v2228
    %v2231 = vsub.s32 4, %v2207
    %v2232 = vsel %vm2147, %v2231, %v2207
    %v2233 = vsel %vm2146, %v2092, %v2230
    %v2234 = vsel %vm2146, 0, %v2232
    %v2235 = vcosq.f32.pop %v2233
    %v2236 = vsinq.f32.pop %v2233
    %vm2237 = vweird.f32 %v2092
    %v2238 = vand.u32 %v2234, 3
    %vm2239 = vcmp.lt.s32.totalorder %v2238, 2
    %vm2240 = vcmp.eq.s32.totalorder %v2238, 0
    %v2241 = vxor.u32 %v2236, 2147483648
    %v2242 = vsel %vm2240, %v2235, %v2241
    %vm2243 = vcmp.eq.s32.totalorder %v2238, 2
    %v2244 = vxor.u32 %v2235, 2147483648
    %v2245 = vsel %vm2243, %v2244, %v2236
    %v2246 = vsel %vm2239, %v2242, %v2245
    %v2247 = vsel %vm2237, nan, %v2246
    %v2248 = vand.u32 2147483647, %v2096
    %vm2249 = vcmp.le.f32.partialorder %v2248, 0.7853982
    %vm2250 = vcmp.lt.s32.totalorder %v2096, 0
    %v2251 = vand.u32 %v2096, 2139095040
    %v2252 = vshrl.u32 %v2251, 23
    %v2253 = vsub.s32 %v2252, 127
    %v2254 = vand.u32 2147483647, %v2096
    %v2255 = vand.u32 %v2254, 8388607
    %v2256 = vor.u32 %v2255, 8388608
    %v2257 = vsub.s32 0, %v2256
    %v2258 = vadd.s32 %v2253, 1
    %vm2259 = vcmp.gt.s32.totalorder %v2258, 0
    %v2260 = vsel %vm2259, %v2258, 0
    %v2261 = vshrl.u32 %v2260, 5
    %v2262 = vand.u32 %v2260, 31
    %v2263 = vsub.s32 32, %v2262
    %v2264 = vshrl.u32 683565275, %v2263
    %v2265 = vshll.u32 683565275, %v2262
    %v2266 = vshrl.u32 2475754826, %v2263
    %v2267 = vor.u32 %v2265, %v2266
    %v2268 = vshll.u32 2475754826, %v2262
    %v2269 = vshrl.u32 2131351028, %v2263
    %v2270 = vor.u32 %v2268, %v2269
    %v2271 = vshll.u32 2131351028, %v2262
    %v2272 = vshrl.u32 2102212464, %v2263
    %v2273 = vor.u32 %v2271, %v2272
    %v2274 = vshll.u32 2102212464, %v2262
    %v2275 = vshrl.u32 920167782, %v2263
    %v2276 = vor.u32 %v2274, %v2275
    %v2277 = vshll.u32 920167782, %v2262
    %v2278 = vshrl.u32 1326507024, %v2263
    %v2279 = vor.u32 %v2277, %v2278
    %vm2280 = vcmp.lt.s32.totalorder %v2261, 1
    %vm2281 = vcmp.lt.s32.totalorder %v2261, 2
    %vm2282 = vcmp.lt.s32.totalorder %v2261, 3
    %vm2283 = vcmp.lt.s32.totalorder %v2261, 4
    %v2284 = vsel %vm2280, %v2264, %v2267
    %v2285 = vsel %vm2283, %v2273, 2102212464
    %v2286 = vsel %vm2282, %v2270, %v2285
    %v2287 = vsel %vm2281, %v2284, %v2286
    %v2288 = vsel %vm2280, %v2267, %v2270
    %v2289 = vsel %vm2283, %v2276, 920167782
    %v2290 = vsel %vm2282, %v2273, %v2289
    %v2291 = vsel %vm2281, %v2288, %v2290
    %v2292 = vsel %vm2280, %v2270, %v2273
    %v2293 = vsel %vm2283, %v2279, 1326507024
    %v2294 = vsel %vm2282, %v2276, %v2293
    %v2295 = vsel %vm2281, %v2292, %v2294
    %v2296 = vshll.u32 %v2256, 8
    %v2297 = vmul.u32.u64.compose %v2296, %v2295
    %v2298 = vextract.low.u32 %v2297
    %v2299 = vextract.high.u32 %v2297
    %v2300 = vmul.u32.u64.compose %v2296, %v2291
    %v2301 = vextract.low.u32 %v2300
    %v2302 = vextract.high.u32 %v2300
    %v2303 = vmul.u32 %v2296, %v2287
    %v2304 = vadd.s32 %v2299, %v2301
    %vm2305 = vc.u32 %v2299, %v2301
    %v2306 = vadd.s32 %v2302, 1
    %v2307 = vsel %vm2305, %v2306, %v2302
    %v2308 = vadd.s32 %v2303, %v2307
    %v2309 = vadd.s32 %v2308, 536870912
    %v2310 = vshrl.u32 %v2309, 30
    %v2311 = vshll.u32 %v2310, 30
    %v2312 = vsub.s32 %v2308, %v2311
    %vm2313 = vcmp.lt.s32.totalorder %v2312, 0
    %v2314 = vsub.s32 0, %v2312
    %v2315 = vsel %vm2313, %v2314, %v2312
    %v2316 = vclz %v2315
    %v2317 = vsub.s32 %v2316, 2
    %vm2318 = vcmp.gt.s32.totalorder 0, %v2317
    %v2319 = vsel %vm2318, 0, %v2317
    %v2320 = vsub.s32 32, %v2319
    %v2321 = vshll.u32 %v2312, %v2319
    %v2322 = vshrl.u32 %v2304, %v2320
    %v2323 = vor.u32 %v2321, %v2322
    %v2324 = vsub.s32 4294967266, %v2319
    %v2325 = vadd.s32 %v2324, 127
    %v2326 = vshll.u32 %v2325, 23
    %v2327 = vor.u32 4788187, %v2326
    %v2328 = vand.u32 2147483647, %v2327
    %v2330 = vcvt.s32.f32 %v2323
    %v2331 = vmul.f32 %v2330, %v2328
    %v2332 = vxor.u32 %v2331, 2147483648
    %v2333 = vsel %vm2250, %v2332, %v2331
    %v2334 = vsub.s32 4, %v2310
    %v2335 = vsel %vm2250, %v2334, %v2310
    %v2336 = vsel %vm2249, %v2096, %v2333
    %v2337 = vsel %vm2249, 0, %v2335
    %v2338 = vcosq.f32.pop %v2336
    %v2339 = vsinq.f32.pop %v2336
    %vm2340 = vweird.f32 %v2096
    %v2341 = vand.u32 %v2337, 3
    %vm2342 = vcmp.lt.s32.totalorder %v2341, 2
    %vm2343 = vcmp.eq.s32.totalorder %v2341, 0
    %v2344 = vxor.u32 %v2339, 2147483648
    %v2345 = vsel %vm2343, %v2338, %v2344
    %vm2346 = vcmp.eq.s32.totalorder %v2341, 2
    %v2347 = vxor.u32 %v2338, 2147483648
    %v2348 = vsel %vm2346, %v2347, %v2339
    %v2349 = vsel %vm2342, %v2345, %v2348
    %v2350 = vsel %vm2340, nan, %v2349
    %v2351 = vstv %s2143
    %v2352 = vmul.f32 %v2351, %v2247
    %v2353 = vmul.f32 %v2351, %v2350
    %v2354 = vand.u32 2147483647, %v2092
    %vm2355 = vcmp.le.f32.partialorder %v2354, 0.7853982
    %vm2356 = vcmp.lt.s32.totalorder %v2092, 0
    %v2357 = vand.u32 %v2092, 2139095040
    %v2358 = vshrl.u32 %v2357, 23
    %v2359 = vsub.s32 %v2358, 127
    %v2360 = vand.u32 2147483647, %v2092
    %v2361 = vand.u32 %v2360, 8388607
    %v2362 = vor.u32 %v2361, 8388608
    %v2363 = vsub.s32 0, %v2362
    %v2364 = vadd.s32 %v2359, 1
    %vm2365 = vcmp.gt.s32.totalorder %v2364, 0
    %v2366 = vsel %vm2365, %v2364, 0
    %v2367 = vshrl.u32 %v2366, 5
    %v2368 = vand.u32 %v2366, 31
    %v2369 = vsub.s32 32, %v2368
    %v2370 = vshrl.u32 683565275, %v2369
    %v2371 = vshll.u32 683565275, %v2368
    %v2372 = vshrl.u32 2475754826, %v2369
    %v2373 = vor.u32 %v2371, %v2372
    %v2374 = vshll.u32 2475754826, %v2368
    %v2375 = vshrl.u32 2131351028, %v2369
    %v2376 = vor.u32 %v2374, %v2375
    %v2377 = vshll.u32 2131351028, %v2368
    %v2378 = vshrl.u32 2102212464, %v2369
    %v2379 = vor.u32 %v2377, %v2378
    %v2380 = vshll.u32 2102212464, %v2368
    %v2381 = vshrl.u32 920167782, %v2369
    %v2382 = vor.u32 %v2380, %v2381
    %v2383 = vshll.u32 920167782, %v2368
    %v2384 = vshrl.u32 1326507024, %v2369
    %v2385 = vor.u32 %v2383, %v2384
    %vm2386 = vcmp.lt.s32.totalorder %v2367, 1
    %vm2387 = vcmp.lt.s32.totalorder %v2367, 2
    %vm2388 = vcmp.lt.s32.totalorder %v2367, 3
    %vm2389 = vcmp.lt.s32.totalorder %v2367, 4
    %v2390 = vsel %vm2386, %v2370, %v2373
    %v2391 = vsel %vm2389, %v2379, 2102212464
    %v2392 = vsel %vm2388, %v2376, %v2391
    %v2393 = vsel %vm2387, %v2390, %v2392
    %v2394 = vsel %vm2386, %v2373, %v2376
    %v2395 = vsel %vm2389, %v2382, 920167782
    %v2396 = vsel %vm2388, %v2379, %v2395
    %v2397 = vsel %vm2387, %v2394, %v2396
    %v2398 = vsel %vm2386, %v2376, %v2379
    %v2399 = vsel %vm2389, %v2385, 1326507024
    %v2400 = vsel %vm2388, %v2382, %v2399
    %v2401 = vsel %vm2387, %v2398, %v2400
    %v2402 = vshll.u32 %v2362, 8
    %v2403 = vmul.u32.u64.compose %v2402, %v2401
    %v2404 = vextract.low.u32 %v2403
    %v2405 = vextract.high.u32 %v2403
    %v2406 = vmul.u32.u64.compose %v2402, %v2397
    %v2407 = vextract.low.u32 %v2406
    %v2408 = vextract.high.u32 %v2406
    %v2409 = vmul.u32 %v2402, %v2393
    %v2410 = vadd.s32 %v2405, %v2407
    %vm2411 = vc.u32 %v2405, %v2407
    %v2412 = vadd.s32 %v2408, 1
    %v2413 = vsel %vm2411, %v2412, %v2408
    %v2414 = vadd.s32 %v2409, %v2413
    %v2415 = vadd.s32 %v2414, 536870912
    %v2416 = vshrl.u32 %v2415, 30
    %v2417 = vshll.u32 %v2416, 30
    %v2418 = vsub.s32 %v2414, %v2417
    %vm2419 = vcmp.lt.s32.totalorder %v2418, 0
    %v2420 = vsub.s32 0, %v2418
    %v2421 = vsel %vm2419, %v2420, %v2418
    %v2422 = vclz %v2421
    %v2423 = vsub.s32 %v2422, 2
    %vm2424 = vcmp.gt.s32.totalorder 0, %v2423
    %v2425 = vsel %vm2424, 0, %v2423
    %v2426 = vsub.s32 32, %v2425
    %v2427 = vshll.u32 %v2418, %v2425
    %v2428 = vshrl.u32 %v2410, %v2426
    %v2429 = vor.u32 %v2427, %v2428
    %v2430 = vsub.s32 4294967266, %v2425
    %v2431 = vadd.s32 %v2430, 127
    %v2432 = vshll.u32 %v2431, 23
    %v2433 = vor.u32 4788187, %v2432
    %v2434 = vand.u32 2147483647, %v2433
    %v2436 = vcvt.s32.f32 %v2429
    %v2437 = vmul.f32 %v2436, %v2434
    %v2438 = vxor.u32 %v2437, 2147483648
    %v2439 = vsel %vm2356, %v2438, %v2437
    %v2440 = vsub.s32 4, %v2416
    %v2441 = vsel %vm2356, %v2440, %v2416
    %v2442 = vsel %vm2355, %v2092, %v2439
    %v2443 = vsel %vm2355, 0, %v2441
    %v2444 = vcosq.f32.pop %v2442
    %v2445 = vsinq.f32.pop %v2442
    %vm2446 = vweird.f32 %v2092
    %v2447 = vadd.s32 %v2443, 3
    %v2448 = vand.u32 %v2447, 3
    %vm2449 = vcmp.lt.s32.totalorder %v2448, 2
    %vm2450 = vcmp.eq.s32.totalorder %v2448, 0
    %v2451 = vxor.u32 %v2445, 2147483648
    %v2452 = vsel %vm2450, %v2444, %v2451
    %vm2453 = vcmp.eq.s32.totalorder %v2448, 2
    %v2454 = vxor.u32 %v2444, 2147483648
    %v2455 = vsel %vm2453, %v2454, %v2445
    %v2456 = vsel %vm2449, %v2452, %v2455
    %v2457 = vsel %vm2446, nan, %v2456
    %v2458 = vand.u32 2147483647, %v2096
    %vm2459 = vcmp.le.f32.partialorder %v2458, 0.7853982
    %vm2460 = vcmp.lt.s32.totalorder %v2096, 0
    %v2461 = vand.u32 %v2096, 2139095040
    %v2462 = vshrl.u32 %v2461, 23
    %v2463 = vsub.s32 %v2462, 127
    %v2464 = vand.u32 2147483647, %v2096
    %v2465 = vand.u32 %v2464, 8388607
    %v2466 = vor.u32 %v2465, 8388608
    %v2467 = vsub.s32 0, %v2466
    %v2468 = vadd.s32 %v2463, 1
    %vm2469 = vcmp.gt.s32.totalorder %v2468, 0
    %v2470 = vsel %vm2469, %v2468, 0
    %v2471 = vshrl.u32 %v2470, 5
    %v2472 = vand.u32 %v2470, 31
    %v2473 = vsub.s32 32, %v2472
    %v2474 = vshrl.u32 683565275, %v2473
    %v2475 = vshll.u32 683565275, %v2472
    %v2476 = vshrl.u32 2475754826, %v2473
    %v2477 = vor.u32 %v2475, %v2476
    %v2478 = vshll.u32 2475754826, %v2472
    %v2479 = vshrl.u32 2131351028, %v2473
    %v2480 = vor.u32 %v2478, %v2479
    %v2481 = vshll.u32 2131351028, %v2472
    %v2482 = vshrl.u32 2102212464, %v2473
    %v2483 = vor.u32 %v2481, %v2482
    %v2484 = vshll.u32 2102212464, %v2472
    %v2485 = vshrl.u32 920167782, %v2473
    %v2486 = vor.u32 %v2484, %v2485
    %v2487 = vshll.u32 920167782, %v2472
    %v2488 = vshrl.u32 1326507024, %v2473
    %v2489 = vor.u32 %v2487, %v2488
    %vm2490 = vcmp.lt.s32.totalorder %v2471, 1
    %vm2491 = vcmp.lt.s32.totalorder %v2471, 2
    %vm2492 = vcmp.lt.s32.totalorder %v2471, 3
    %vm2493 = vcmp.lt.s32.totalorder %v2471, 4
    %v2494 = vsel %vm2490, %v2474, %v2477
    %v2495 = vsel %vm2493, %v2483, 2102212464
    %v2496 = vsel %vm2492, %v2480, %v2495
    %v2497 = vsel %vm2491, %v2494, %v2496
    %v2498 = vsel %vm2490, %v2477, %v2480
    %v2499 = vsel %vm2493, %v2486, 920167782
    %v2500 = vsel %vm2492, %v2483, %v2499
    %v2501 = vsel %vm2491, %v2498, %v2500
    %v2502 = vsel %vm2490, %v2480, %v2483
    %v2503 = vsel %vm2493, %v2489, 1326507024
    %v2504 = vsel %vm2492, %v2486, %v2503
    %v2505 = vsel %vm2491, %v2502, %v2504
    %v2506 = vshll.u32 %v2466, 8
    %v2507 = vmul.u32.u64.compose %v2506, %v2505
    %v2508 = vextract.low.u32 %v2507
    %v2509 = vextract.high.u32 %v2507
    %v2510 = vmul.u32.u64.compose %v2506, %v2501
    %v2511 = vextract.low.u32 %v2510
    %v2512 = vextract.high.u32 %v2510
    %v2513 = vmul.u32 %v2506, %v2497
    %v2514 = vadd.s32 %v2509, %v2511
    %vm2515 = vc.u32 %v2509, %v2511
    %v2516 = vadd.s32 %v2512, 1
    %v2517 = vsel %vm2515, %v2516, %v2512
    %v2518 = vadd.s32 %v2513, %v2517
    %v2519 = vadd.s32 %v2518, 536870912
    %v2520 = vshrl.u32 %v2519, 30
    %v2521 = vshll.u32 %v2520, 30
    %v2522 = vsub.s32 %v2518, %v2521
    %vm2523 = vcmp.lt.s32.totalorder %v2522, 0
    %v2524 = vsub.s32 0, %v2522
    %v2525 = vsel %vm2523, %v2524, %v2522
    %v2526 = vclz %v2525
    %v2527 = vsub.s32 %v2526, 2
    %vm2528 = vcmp.gt.s32.totalorder 0, %v2527
    %v2529 = vsel %vm2528, 0, %v2527
    %v2530 = vsub.s32 32, %v2529
    %v2531 = vshll.u32 %v2522, %v2529
    %v2532 = vshrl.u32 %v2514, %v2530
    %v2533 = vor.u32 %v2531, %v2532
    %v2534 = vsub.s32 4294967266, %v2529
    %v2535 = vadd.s32 %v2534, 127
    %v2536 = vshll.u32 %v2535, 23
    %v2537 = vor.u32 4788187, %v2536
    %v2538 = vand.u32 2147483647, %v2537
    %v2540 = vcvt.s32.f32 %v2533
    %v2541 = vmul.f32 %v2540, %v2538
    %v2542 = vxor.u32 %v2541, 2147483648
    %v2543 = vsel %vm2460, %v2542, %v2541
    %v2544 = vsub.s32 4, %v2520
    %v2545 = vsel %vm2460, %v2544, %v2520
    %v2546 = vsel %vm2459, %v2096, %v2543
    %v2547 = vsel %vm2459, 0, %v2545
    %v2548 = vcosq.f32.pop %v2546
    %v2549 = vsinq.f32.pop %v2546
    %vm2550 = vweird.f32 %v2096
    %v2551 = vadd.s32 %v2547, 3
    %v2552 = vand.u32 %v2551, 3
    %vm2553 = vcmp.lt.s32.totalorder %v2552, 2
    %vm2554 = vcmp.eq.s32.totalorder %v2552, 0
    %v2555 = vxor.u32 %v2549, 2147483648
    %v2556 = vsel %vm2554, %v2548, %v2555
    %vm2557 = vcmp.eq.s32.totalorder %v2552, 2
    %v2558 = vxor.u32 %v2548, 2147483648
    %v2559 = vsel %vm2557, %v2558, %v2549
    %v2560 = vsel %vm2553, %v2556, %v2559
    %v2561 = vsel %vm2550, nan, %v2560
    %v2562 = vmul.f32 %v2351, %v2457
    %v2563 = vmul.f32 %v2351, %v2561
    %v2564 = vmul.f32 %v2094, 0.5
    %v2565 = vmul.f32 %v2098, 0.5
    %v2566 = vmul.f32 %v2094, 0.70710677
    %v2567 = vmul.f32 %v2098, 0.70710677
    %vm2568 = vcmp.ge.f32.partialorder %v2566, 0.0
    %vm2569 = vcmp.ge.f32.partialorder %v2567, 0.0
    %v2570 = vsel %vm2568, 1.0, -1.0
    %v2571 = vsel %vm2569, 1.0, -1.0
    %v2572 = vand.u32 2147483647, %v2566
    %v2573 = vand.u32 2147483647, %v2567
    %v2574 = vmul.f32 %v2572, 0.3275911
    %v2575 = vmul.f32 %v2573, 0.3275911
    %v2576 = vadd.f32 %v2574, 1.0
    %v2577 = vadd.f32 %v2575, 1.0
    %v2578 = vrcp.pop %v2576
    %v2579 = vmul.f32 1.0, %v2578
    %v2580 = vrcp.pop %v2577
    %v2581 = vmul.f32 1.0, %v2580
    %v2582 = vmul.f32 %v2579, 1.0614054
    %v2583 = vmul.f32 %v2581, 1.0614054
    %v2584 = vadd.f32 %v2582, -1.4531521
    %v2585 = vadd.f32 %v2583, -1.4531521
    %v2586 = vmul.f32 %v2584, %v2579
    %v2587 = vmul.f32 %v2585, %v2581
    %v2588 = vadd.f32 %v2586, 1.4214138
    %v2589 = vadd.f32 %v2587, 1.4214138
    %v2590 = vmul.f32 %v2588, %v2579
    %v2591 = vmul.f32 %v2589, %v2581
    %v2592 = vadd.f32 %v2590, -0.28449672
    %v2593 = vadd.f32 %v2591, -0.28449672
    %v2594 = vmul.f32 %v2592, %v2579
    %v2595 = vmul.f32 %v2593, %v2581
    %v2596 = vadd.f32 %v2594, 0.2548296
    %v2597 = vadd.f32 %v2595, 0.2548296
    %v2598 = vmul.f32 %v2596, %v2579
    %v2599 = vmul.f32 %v2597, %v2581
    %v2600 = vsub.f32 0.0, %v2572
    %v2601 = vsub.f32 0.0, %v2573
    %v2602 = vmul.f32 %v2600, %v2572
    %v2603 = vmul.f32 %v2601, %v2573
    %v2604 = vmul.f32 %v2602, 1.442695
    %v2605 = vpow.pop %v2604
    %v2606 = vmul.f32 %v2603, 1.442695
    %v2607 = vpow.pop %v2606
    %v2608 = vmul.f32 %v2598, %v2605
    %v2609 = vmul.f32 %v2599, %v2607
    %v2610 = vsub.f32 1.0, %v2608
    %v2611 = vsub.f32 1.0, %v2609
    %v2612 = vmul.f32 %v2570, %v2610
    %v2613 = vmul.f32 %v2571, %v2611
    %v2614 = vadd.f32 %v2612, 1.0
    %v2615 = vadd.f32 %v2613, 1.0
    %v2616 = vmul.f32 %v2564, %v2614
    %v2617 = vmul.f32 %v2565, %v2615
    %v2618 = vstv %s2144
    %v2619 = vmul.f32 %v2618, %v2616
    %v2620 = vmul.f32 %v2618, %v2617
    %2623 = vrot.lane.b32.xlu0 %v2562, 8
    %v2624 = vpop.permute.xlu0 %2623
    %2625 = vrot.lane.b32.xlu0 %v2563, 8
    %v2626 = vpop.permute.xlu0 %2625
    %2631 = vrot.lane.b32.xlu0 %v2619, 16
    %v2632 = vpop.permute.xlu0 %2631
    %2633 = vrot.lane.b32.xlu0 %v2620, 16
    %v2634 = vpop.permute.xlu0 %2633
    %v2637 = vsel %vm871, %v2352, %v2624
    %v2638 = vsel %vm871, %v2353, %v2626
    %v2639 = vsel %vm1419, %v2637, %v2632
    %v2640 = vsel %vm1419, %v2638, %v2634
    %s2641 = sld [smem:[#allocation3 + $0x8]]
    %s2642 = sld [smem:[#allocation3 + $0x9]]
    %v2643 = vand.u32 2147483647, %v2135
    %vm2644 = vcmp.le.f32.partialorder %v2643, 0.7853982
    %vm2645 = vcmp.lt.s32.totalorder %v2135, 0
    %v2646 = vand.u32 %v2135, 2139095040
    %v2647 = vshrl.u32 %v2646, 23
    %v2648 = vsub.s32 %v2647, 127
    %v2649 = vand.u32 2147483647, %v2135
    %v2650 = vand.u32 %v2649, 8388607
    %v2651 = vor.u32 %v2650, 8388608
    %v2652 = vsub.s32 0, %v2651
    %v2653 = vadd.s32 %v2648, 1
    %vm2654 = vcmp.gt.s32.totalorder %v2653, 0
    %v2655 = vsel %vm2654, %v2653, 0
    %v2656 = vshrl.u32 %v2655, 5
    %v2657 = vand.u32 %v2655, 31
    %v2658 = vsub.s32 32, %v2657
    %v2659 = vshrl.u32 683565275, %v2658
    %v2660 = vshll.u32 683565275, %v2657
    %v2661 = vshrl.u32 2475754826, %v2658
    %v2662 = vor.u32 %v2660, %v2661
    %v2663 = vshll.u32 2475754826, %v2657
    %v2664 = vshrl.u32 2131351028, %v2658
    %v2665 = vor.u32 %v2663, %v2664
    %v2666 = vshll.u32 2131351028, %v2657
    %v2667 = vshrl.u32 2102212464, %v2658
    %v2668 = vor.u32 %v2666, %v2667
    %v2669 = vshll.u32 2102212464, %v2657
    %v2670 = vshrl.u32 920167782, %v2658
    %v2671 = vor.u32 %v2669, %v2670
    %v2672 = vshll.u32 920167782, %v2657
    %v2673 = vshrl.u32 1326507024, %v2658
    %v2674 = vor.u32 %v2672, %v2673
    %vm2675 = vcmp.lt.s32.totalorder %v2656, 1
    %vm2676 = vcmp.lt.s32.totalorder %v2656, 2
    %vm2677 = vcmp.lt.s32.totalorder %v2656, 3
    %vm2678 = vcmp.lt.s32.totalorder %v2656, 4
    %v2679 = vsel %vm2675, %v2659, %v2662
    %v2680 = vsel %vm2678, %v2668, 2102212464
    %v2681 = vsel %vm2677, %v2665, %v2680
    %v2682 = vsel %vm2676, %v2679, %v2681
    %v2683 = vsel %vm2675, %v2662, %v2665
    %v2684 = vsel %vm2678, %v2671, 920167782
    %v2685 = vsel %vm2677, %v2668, %v2684
    %v2686 = vsel %vm2676, %v2683, %v2685
    %v2687 = vsel %vm2675, %v2665, %v2668
    %v2688 = vsel %vm2678, %v2674, 1326507024
    %v2689 = vsel %vm2677, %v2671, %v2688
    %v2690 = vsel %vm2676, %v2687, %v2689
    %v2691 = vshll.u32 %v2651, 8
    %v2692 = vmul.u32.u64.compose %v2691, %v2690
    %v2693 = vextract.low.u32 %v2692
    %v2694 = vextract.high.u32 %v2692
    %v2695 = vmul.u32.u64.compose %v2691, %v2686
    %v2696 = vextract.low.u32 %v2695
    %v2697 = vextract.high.u32 %v2695
    %v2698 = vmul.u32 %v2691, %v2682
    %v2699 = vadd.s32 %v2694, %v2696
    %vm2700 = vc.u32 %v2694, %v2696
    %v2701 = vadd.s32 %v2697, 1
    %v2702 = vsel %vm2700, %v2701, %v2697
    %v2703 = vadd.s32 %v2698, %v2702
    %v2704 = vadd.s32 %v2703, 536870912
    %v2705 = vshrl.u32 %v2704, 30
    %v2706 = vshll.u32 %v2705, 30
    %v2707 = vsub.s32 %v2703, %v2706
    %vm2708 = vcmp.lt.s32.totalorder %v2707, 0
    %v2709 = vsub.s32 0, %v2707
    %v2710 = vsel %vm2708, %v2709, %v2707
    %v2711 = vclz %v2710
    %v2712 = vsub.s32 %v2711, 2
    %vm2713 = vcmp.gt.s32.totalorder 0, %v2712
    %v2714 = vsel %vm2713, 0, %v2712
    %v2715 = vsub.s32 32, %v2714
    %v2716 = vshll.u32 %v2707, %v2714
    %v2717 = vshrl.u32 %v2699, %v2715
    %v2718 = vor.u32 %v2716, %v2717
    %v2719 = vsub.s32 4294967266, %v2714
    %v2720 = vadd.s32 %v2719, 127
    %v2721 = vshll.u32 %v2720, 23
    %v2722 = vor.u32 4788187, %v2721
    %v2723 = vand.u32 2147483647, %v2722
    %v2725 = vcvt.s32.f32 %v2718
    %v2726 = vmul.f32 %v2725, %v2723
    %v2727 = vxor.u32 %v2726, 2147483648
    %v2728 = vsel %vm2645, %v2727, %v2726
    %v2729 = vsub.s32 4, %v2705
    %v2730 = vsel %vm2645, %v2729, %v2705
    %v2731 = vsel %vm2644, %v2135, %v2728
    %v2732 = vsel %vm2644, 0, %v2730
    %v2733 = vcosq.f32.pop %v2731
    %v2734 = vsinq.f32.pop %v2731
    %vm2735 = vweird.f32 %v2135
    %v2736 = vand.u32 %v2732, 3
    %vm2737 = vcmp.lt.s32.totalorder %v2736, 2
    %vm2738 = vcmp.eq.s32.totalorder %v2736, 0
    %v2739 = vxor.u32 %v2734, 2147483648
    %v2740 = vsel %vm2738, %v2733, %v2739
    %vm2741 = vcmp.eq.s32.totalorder %v2736, 2
    %v2742 = vxor.u32 %v2733, 2147483648
    %v2743 = vsel %vm2741, %v2742, %v2734
    %v2744 = vsel %vm2737, %v2740, %v2743
    %v2745 = vsel %vm2735, nan, %v2744
    %v2746 = vand.u32 2147483647, %v2139
    %vm2747 = vcmp.le.f32.partialorder %v2746, 0.7853982
    %vm2748 = vcmp.lt.s32.totalorder %v2139, 0
    %v2749 = vand.u32 %v2139, 2139095040
    %v2750 = vshrl.u32 %v2749, 23
    %v2751 = vsub.s32 %v2750, 127
    %v2752 = vand.u32 2147483647, %v2139
    %v2753 = vand.u32 %v2752, 8388607
    %v2754 = vor.u32 %v2753, 8388608
    %v2755 = vsub.s32 0, %v2754
    %v2756 = vadd.s32 %v2751, 1
    %vm2757 = vcmp.gt.s32.totalorder %v2756, 0
    %v2758 = vsel %vm2757, %v2756, 0
    %v2759 = vshrl.u32 %v2758, 5
    %v2760 = vand.u32 %v2758, 31
    %v2761 = vsub.s32 32, %v2760
    %v2762 = vshrl.u32 683565275, %v2761
    %v2763 = vshll.u32 683565275, %v2760
    %v2764 = vshrl.u32 2475754826, %v2761
    %v2765 = vor.u32 %v2763, %v2764
    %v2766 = vshll.u32 2475754826, %v2760
    %v2767 = vshrl.u32 2131351028, %v2761
    %v2768 = vor.u32 %v2766, %v2767
    %v2769 = vshll.u32 2131351028, %v2760
    %v2770 = vshrl.u32 2102212464, %v2761
    %v2771 = vor.u32 %v2769, %v2770
    %v2772 = vshll.u32 2102212464, %v2760
    %v2773 = vshrl.u32 920167782, %v2761
    %v2774 = vor.u32 %v2772, %v2773
    %v2775 = vshll.u32 920167782, %v2760
    %v2776 = vshrl.u32 1326507024, %v2761
    %v2777 = vor.u32 %v2775, %v2776
    %vm2778 = vcmp.lt.s32.totalorder %v2759, 1
    %vm2779 = vcmp.lt.s32.totalorder %v2759, 2
    %vm2780 = vcmp.lt.s32.totalorder %v2759, 3
    %vm2781 = vcmp.lt.s32.totalorder %v2759, 4
    %v2782 = vsel %vm2778, %v2762, %v2765
    %v2783 = vsel %vm2781, %v2771, 2102212464
    %v2784 = vsel %vm2780, %v2768, %v2783
    %v2785 = vsel %vm2779, %v2782, %v2784
    %v2786 = vsel %vm2778, %v2765, %v2768
    %v2787 = vsel %vm2781, %v2774, 920167782
    %v2788 = vsel %vm2780, %v2771, %v2787
    %v2789 = vsel %vm2779, %v2786, %v2788
    %v2790 = vsel %vm2778, %v2768, %v2771
    %v2791 = vsel %vm2781, %v2777, 1326507024
    %v2792 = vsel %vm2780, %v2774, %v2791
    %v2793 = vsel %vm2779, %v2790, %v2792
    %v2794 = vshll.u32 %v2754, 8
    %v2795 = vmul.u32.u64.compose %v2794, %v2793
    %v2796 = vextract.low.u32 %v2795
    %v2797 = vextract.high.u32 %v2795
    %v2798 = vmul.u32.u64.compose %v2794, %v2789
    %v2799 = vextract.low.u32 %v2798
    %v2800 = vextract.high.u32 %v2798
    %v2801 = vmul.u32 %v2794, %v2785
    %v2802 = vadd.s32 %v2797, %v2799
    %vm2803 = vc.u32 %v2797, %v2799
    %v2804 = vadd.s32 %v2800, 1
    %v2805 = vsel %vm2803, %v2804, %v2800
    %v2806 = vadd.s32 %v2801, %v2805
    %v2807 = vadd.s32 %v2806, 536870912
    %v2808 = vshrl.u32 %v2807, 30
    %v2809 = vshll.u32 %v2808, 30
    %v2810 = vsub.s32 %v2806, %v2809
    %vm2811 = vcmp.lt.s32.totalorder %v2810, 0
    %v2812 = vsub.s32 0, %v2810
    %v2813 = vsel %vm2811, %v2812, %v2810
    %v2814 = vclz %v2813
    %v2815 = vsub.s32 %v2814, 2
    %vm2816 = vcmp.gt.s32.totalorder 0, %v2815
    %v2817 = vsel %vm2816, 0, %v2815
    %v2818 = vsub.s32 32, %v2817
    %v2819 = vshll.u32 %v2810, %v2817
    %v2820 = vshrl.u32 %v2802, %v2818
    %v2821 = vor.u32 %v2819, %v2820
    %v2822 = vsub.s32 4294967266, %v2817
    %v2823 = vadd.s32 %v2822, 127
    %v2824 = vshll.u32 %v2823, 23
    %v2825 = vor.u32 4788187, %v2824
    %v2826 = vand.u32 2147483647, %v2825
    %v2828 = vcvt.s32.f32 %v2821
    %v2829 = vmul.f32 %v2828, %v2826
    %v2830 = vxor.u32 %v2829, 2147483648
    %v2831 = vsel %vm2748, %v2830, %v2829
    %v2832 = vsub.s32 4, %v2808
    %v2833 = vsel %vm2748, %v2832, %v2808
    %v2834 = vsel %vm2747, %v2139, %v2831
    %v2835 = vsel %vm2747, 0, %v2833
    %v2836 = vcosq.f32.pop %v2834
    %v2837 = vsinq.f32.pop %v2834
    %vm2838 = vweird.f32 %v2139
    %v2839 = vand.u32 %v2835, 3
    %vm2840 = vcmp.lt.s32.totalorder %v2839, 2
    %vm2841 = vcmp.eq.s32.totalorder %v2839, 0
    %v2842 = vxor.u32 %v2837, 2147483648
    %v2843 = vsel %vm2841, %v2836, %v2842
    %vm2844 = vcmp.eq.s32.totalorder %v2839, 2
    %v2845 = vxor.u32 %v2836, 2147483648
    %v2846 = vsel %vm2844, %v2845, %v2837
    %v2847 = vsel %vm2840, %v2843, %v2846
    %v2848 = vsel %vm2838, nan, %v2847
    %v2849 = vstv %s2641
    %v2850 = vmul.f32 %v2849, %v2745
    %v2851 = vmul.f32 %v2849, %v2848
    %v2852 = vand.u32 2147483647, %v2135
    %vm2853 = vcmp.le.f32.partialorder %v2852, 0.7853982
    %vm2854 = vcmp.lt.s32.totalorder %v2135, 0
    %v2855 = vand.u32 %v2135, 2139095040
    %v2856 = vshrl.u32 %v2855, 23
    %v2857 = vsub.s32 %v2856, 127
    %v2858 = vand.u32 2147483647, %v2135
    %v2859 = vand.u32 %v2858, 8388607
    %v2860 = vor.u32 %v2859, 8388608
    %v2861 = vsub.s32 0, %v2860
    %v2862 = vadd.s32 %v2857, 1
    %vm2863 = vcmp.gt.s32.totalorder %v2862, 0
    %v2864 = vsel %vm2863, %v2862, 0
    %v2865 = vshrl.u32 %v2864, 5
    %v2866 = vand.u32 %v2864, 31
    %v2867 = vsub.s32 32, %v2866
    %v2868 = vshrl.u32 683565275, %v2867
    %v2869 = vshll.u32 683565275, %v2866
    %v2870 = vshrl.u32 2475754826, %v2867
    %v2871 = vor.u32 %v2869, %v2870
    %v2872 = vshll.u32 2475754826, %v2866
    %v2873 = vshrl.u32 2131351028, %v2867
    %v2874 = vor.u32 %v2872, %v2873
    %v2875 = vshll.u32 2131351028, %v2866
    %v2876 = vshrl.u32 2102212464, %v2867
    %v2877 = vor.u32 %v2875, %v2876
    %v2878 = vshll.u32 2102212464, %v2866
    %v2879 = vshrl.u32 920167782, %v2867
    %v2880 = vor.u32 %v2878, %v2879
    %v2881 = vshll.u32 920167782, %v2866
    %v2882 = vshrl.u32 1326507024, %v2867
    %v2883 = vor.u32 %v2881, %v2882
    %vm2884 = vcmp.lt.s32.totalorder %v2865, 1
    %vm2885 = vcmp.lt.s32.totalorder %v2865, 2
    %vm2886 = vcmp.lt.s32.totalorder %v2865, 3
    %vm2887 = vcmp.lt.s32.totalorder %v2865, 4
    %v2888 = vsel %vm2884, %v2868, %v2871
    %v2889 = vsel %vm2887, %v2877, 2102212464
    %v2890 = vsel %vm2886, %v2874, %v2889
    %v2891 = vsel %vm2885, %v2888, %v2890
    %v2892 = vsel %vm2884, %v2871, %v2874
    %v2893 = vsel %vm2887, %v2880, 920167782
    %v2894 = vsel %vm2886, %v2877, %v2893
    %v2895 = vsel %vm2885, %v2892, %v2894
    %v2896 = vsel %vm2884, %v2874, %v2877
    %v2897 = vsel %vm2887, %v2883, 1326507024
    %v2898 = vsel %vm2886, %v2880, %v2897
    %v2899 = vsel %vm2885, %v2896, %v2898
    %v2900 = vshll.u32 %v2860, 8
    %v2901 = vmul.u32.u64.compose %v2900, %v2899
    %v2902 = vextract.low.u32 %v2901
    %v2903 = vextract.high.u32 %v2901
    %v2904 = vmul.u32.u64.compose %v2900, %v2895
    %v2905 = vextract.low.u32 %v2904
    %v2906 = vextract.high.u32 %v2904
    %v2907 = vmul.u32 %v2900, %v2891
    %v2908 = vadd.s32 %v2903, %v2905
    %vm2909 = vc.u32 %v2903, %v2905
    %v2910 = vadd.s32 %v2906, 1
    %v2911 = vsel %vm2909, %v2910, %v2906
    %v2912 = vadd.s32 %v2907, %v2911
    %v2913 = vadd.s32 %v2912, 536870912
    %v2914 = vshrl.u32 %v2913, 30
    %v2915 = vshll.u32 %v2914, 30
    %v2916 = vsub.s32 %v2912, %v2915
    %vm2917 = vcmp.lt.s32.totalorder %v2916, 0
    %v2918 = vsub.s32 0, %v2916
    %v2919 = vsel %vm2917, %v2918, %v2916
    %v2920 = vclz %v2919
    %v2921 = vsub.s32 %v2920, 2
    %vm2922 = vcmp.gt.s32.totalorder 0, %v2921
    %v2923 = vsel %vm2922, 0, %v2921
    %v2924 = vsub.s32 32, %v2923
    %v2925 = vshll.u32 %v2916, %v2923
    %v2926 = vshrl.u32 %v2908, %v2924
    %v2927 = vor.u32 %v2925, %v2926
    %v2928 = vsub.s32 4294967266, %v2923
    %v2929 = vadd.s32 %v2928, 127
    %v2930 = vshll.u32 %v2929, 23
    %v2931 = vor.u32 4788187, %v2930
    %v2932 = vand.u32 2147483647, %v2931
    %v2934 = vcvt.s32.f32 %v2927
    %v2935 = vmul.f32 %v2934, %v2932
    %v2936 = vxor.u32 %v2935, 2147483648
    %v2937 = vsel %vm2854, %v2936, %v2935
    %v2938 = vsub.s32 4, %v2914
    %v2939 = vsel %vm2854, %v2938, %v2914
    %v2940 = vsel %vm2853, %v2135, %v2937
    %v2941 = vsel %vm2853, 0, %v2939
    %v2942 = vcosq.f32.pop %v2940
    %v2943 = vsinq.f32.pop %v2940
    %vm2944 = vweird.f32 %v2135
    %v2945 = vadd.s32 %v2941, 3
    %v2946 = vand.u32 %v2945, 3
    %vm2947 = vcmp.lt.s32.totalorder %v2946, 2
    %vm2948 = vcmp.eq.s32.totalorder %v2946, 0
    %v2949 = vxor.u32 %v2943, 2147483648
    %v2950 = vsel %vm2948, %v2942, %v2949
    %vm2951 = vcmp.eq.s32.totalorder %v2946, 2
    %v2952 = vxor.u32 %v2942, 2147483648
    %v2953 = vsel %vm2951, %v2952, %v2943
    %v2954 = vsel %vm2947, %v2950, %v2953
    %v2955 = vsel %vm2944, nan, %v2954
    %v2956 = vand.u32 2147483647, %v2139
    %vm2957 = vcmp.le.f32.partialorder %v2956, 0.7853982
    %vm2958 = vcmp.lt.s32.totalorder %v2139, 0
    %v2959 = vand.u32 %v2139, 2139095040
    %v2960 = vshrl.u32 %v2959, 23
    %v2961 = vsub.s32 %v2960, 127
    %v2962 = vand.u32 2147483647, %v2139
    %v2963 = vand.u32 %v2962, 8388607
    %v2964 = vor.u32 %v2963, 8388608
    %v2965 = vsub.s32 0, %v2964
    %v2966 = vadd.s32 %v2961, 1
    %vm2967 = vcmp.gt.s32.totalorder %v2966, 0
    %v2968 = vsel %vm2967, %v2966, 0
    %v2969 = vshrl.u32 %v2968, 5
    %v2970 = vand.u32 %v2968, 31
    %v2971 = vsub.s32 32, %v2970
    %v2972 = vshrl.u32 683565275, %v2971
    %v2973 = vshll.u32 683565275, %v2970
    %v2974 = vshrl.u32 2475754826, %v2971
    %v2975 = vor.u32 %v2973, %v2974
    %v2976 = vshll.u32 2475754826, %v2970
    %v2977 = vshrl.u32 2131351028, %v2971
    %v2978 = vor.u32 %v2976, %v2977
    %v2979 = vshll.u32 2131351028, %v2970
    %v2980 = vshrl.u32 2102212464, %v2971
    %v2981 = vor.u32 %v2979, %v2980
    %v2982 = vshll.u32 2102212464, %v2970
    %v2983 = vshrl.u32 920167782, %v2971
    %v2984 = vor.u32 %v2982, %v2983
    %v2985 = vshll.u32 920167782, %v2970
    %v2986 = vshrl.u32 1326507024, %v2971
    %v2987 = vor.u32 %v2985, %v2986
    %vm2988 = vcmp.lt.s32.totalorder %v2969, 1
    %vm2989 = vcmp.lt.s32.totalorder %v2969, 2
    %vm2990 = vcmp.lt.s32.totalorder %v2969, 3
    %vm2991 = vcmp.lt.s32.totalorder %v2969, 4
    %v2992 = vsel %vm2988, %v2972, %v2975
    %v2993 = vsel %vm2991, %v2981, 2102212464
    %v2994 = vsel %vm2990, %v2978, %v2993
    %v2995 = vsel %vm2989, %v2992, %v2994
    %v2996 = vsel %vm2988, %v2975, %v2978
    %v2997 = vsel %vm2991, %v2984, 920167782
    %v2998 = vsel %vm2990, %v2981, %v2997
    %v2999 = vsel %vm2989, %v2996, %v2998
    %v3000 = vsel %vm2988, %v2978, %v2981
    %v3001 = vsel %vm2991, %v2987, 1326507024
    %v3002 = vsel %vm2990, %v2984, %v3001
    %v3003 = vsel %vm2989, %v3000, %v3002
    %v3004 = vshll.u32 %v2964, 8
    %v3005 = vmul.u32.u64.compose %v3004, %v3003
    %v3006 = vextract.low.u32 %v3005
    %v3007 = vextract.high.u32 %v3005
    %v3008 = vmul.u32.u64.compose %v3004, %v2999
    %v3009 = vextract.low.u32 %v3008
    %v3010 = vextract.high.u32 %v3008
    %v3011 = vmul.u32 %v3004, %v2995
    %v3012 = vadd.s32 %v3007, %v3009
    %vm3013 = vc.u32 %v3007, %v3009
    %v3014 = vadd.s32 %v3010, 1
    %v3015 = vsel %vm3013, %v3014, %v3010
    %v3016 = vadd.s32 %v3011, %v3015
    %v3017 = vadd.s32 %v3016, 536870912
    %v3018 = vshrl.u32 %v3017, 30
    %v3019 = vshll.u32 %v3018, 30
    %v3020 = vsub.s32 %v3016, %v3019
    %vm3021 = vcmp.lt.s32.totalorder %v3020, 0
    %v3022 = vsub.s32 0, %v3020
    %v3023 = vsel %vm3021, %v3022, %v3020
    %v3024 = vclz %v3023
    %v3025 = vsub.s32 %v3024, 2
    %vm3026 = vcmp.gt.s32.totalorder 0, %v3025
    %v3027 = vsel %vm3026, 0, %v3025
    %v3028 = vsub.s32 32, %v3027
    %v3029 = vshll.u32 %v3020, %v3027
    %v3030 = vshrl.u32 %v3012, %v3028
    %v3031 = vor.u32 %v3029, %v3030
    %v3032 = vsub.s32 4294967266, %v3027
    %v3033 = vadd.s32 %v3032, 127
    %v3034 = vshll.u32 %v3033, 23
    %v3035 = vor.u32 4788187, %v3034
    %v3036 = vand.u32 2147483647, %v3035
    %v3038 = vcvt.s32.f32 %v3031
    %v3039 = vmul.f32 %v3038, %v3036
    %v3040 = vxor.u32 %v3039, 2147483648
    %v3041 = vsel %vm2958, %v3040, %v3039
    %v3042 = vsub.s32 4, %v3018
    %v3043 = vsel %vm2958, %v3042, %v3018
    %v3044 = vsel %vm2957, %v2139, %v3041
    %v3045 = vsel %vm2957, 0, %v3043
    %v3046 = vcosq.f32.pop %v3044
    %v3047 = vsinq.f32.pop %v3044
    %vm3048 = vweird.f32 %v2139
    %v3049 = vadd.s32 %v3045, 3
    %v3050 = vand.u32 %v3049, 3
    %vm3051 = vcmp.lt.s32.totalorder %v3050, 2
    %vm3052 = vcmp.eq.s32.totalorder %v3050, 0
    %v3053 = vxor.u32 %v3047, 2147483648
    %v3054 = vsel %vm3052, %v3046, %v3053
    %vm3055 = vcmp.eq.s32.totalorder %v3050, 2
    %v3056 = vxor.u32 %v3046, 2147483648
    %v3057 = vsel %vm3055, %v3056, %v3047
    %v3058 = vsel %vm3051, %v3054, %v3057
    %v3059 = vsel %vm3048, nan, %v3058
    %v3060 = vmul.f32 %v2849, %v2955
    %v3061 = vmul.f32 %v2849, %v3059
    %v3062 = vmul.f32 %v2137, 0.5
    %v3063 = vmul.f32 %v2141, 0.5
    %v3064 = vmul.f32 %v2137, 0.70710677
    %v3065 = vmul.f32 %v2141, 0.70710677
    %vm3066 = vcmp.ge.f32.partialorder %v3064, 0.0
    %vm3067 = vcmp.ge.f32.partialorder %v3065, 0.0
    %v3068 = vsel %vm3066, 1.0, -1.0
    %v3069 = vsel %vm3067, 1.0, -1.0
    %v3070 = vand.u32 2147483647, %v3064
    %v3071 = vand.u32 2147483647, %v3065
    %v3072 = vmul.f32 %v3070, 0.3275911
    %v3073 = vmul.f32 %v3071, 0.3275911
    %v3074 = vadd.f32 %v3072, 1.0
    %v3075 = vadd.f32 %v3073, 1.0
    %v3076 = vrcp.pop %v3074
    %v3077 = vmul.f32 1.0, %v3076
    %v3078 = vrcp.pop %v3075
    %v3079 = vmul.f32 1.0, %v3078
    %v3080 = vmul.f32 %v3077, 1.0614054
    %v3081 = vmul.f32 %v3079, 1.0614054
    %v3082 = vadd.f32 %v3080, -1.4531521
    %v3083 = vadd.f32 %v3081, -1.4531521
    %v3084 = vmul.f32 %v3082, %v3077
    %v3085 = vmul.f32 %v3083, %v3079
    %v3086 = vadd.f32 %v3084, 1.4214138
    %v3087 = vadd.f32 %v3085, 1.4214138
    %v3088 = vmul.f32 %v3086, %v3077
    %v3089 = vmul.f32 %v3087, %v3079
    %v3090 = vadd.f32 %v3088, -0.28449672
    %v3091 = vadd.f32 %v3089, -0.28449672
    %v3092 = vmul.f32 %v3090, %v3077
    %v3093 = vmul.f32 %v3091, %v3079
    %v3094 = vadd.f32 %v3092, 0.2548296
    %v3095 = vadd.f32 %v3093, 0.2548296
    %v3096 = vmul.f32 %v3094, %v3077
    %v3097 = vmul.f32 %v3095, %v3079
    %v3098 = vsub.f32 0.0, %v3070
    %v3099 = vsub.f32 0.0, %v3071
    %v3100 = vmul.f32 %v3098, %v3070
    %v3101 = vmul.f32 %v3099, %v3071
    %v3102 = vmul.f32 %v3100, 1.442695
    %v3103 = vpow.pop %v3102
    %v3104 = vmul.f32 %v3101, 1.442695
    %v3105 = vpow.pop %v3104
    %v3106 = vmul.f32 %v3096, %v3103
    %v3107 = vmul.f32 %v3097, %v3105
    %v3108 = vsub.f32 1.0, %v3106
    %v3109 = vsub.f32 1.0, %v3107
    %v3110 = vmul.f32 %v3068, %v3108
    %v3111 = vmul.f32 %v3069, %v3109
    %v3112 = vadd.f32 %v3110, 1.0
    %v3113 = vadd.f32 %v3111, 1.0
    %v3114 = vmul.f32 %v3062, %v3112
    %v3115 = vmul.f32 %v3063, %v3113
    %v3116 = vstv %s2642
    %v3117 = vmul.f32 %v3116, %v3114
    %v3118 = vmul.f32 %v3116, %v3115
    %3121 = vrot.lane.b32.xlu0 %v3060, 8
    %v3122 = vpop.permute.xlu0 %3121
    %3123 = vrot.lane.b32.xlu0 %v3061, 8
    %v3124 = vpop.permute.xlu0 %3123
    %3129 = vrot.lane.b32.xlu0 %v3117, 16
    %v3130 = vpop.permute.xlu0 %3129
    %3131 = vrot.lane.b32.xlu0 %v3118, 16
    %v3132 = vpop.permute.xlu0 %3131
    %v3135 = vsel %vm871, %v2850, %v3122
    %v3136 = vsel %vm871, %v2851, %v3124
    %v3137 = vsel %vm1419, %v3135, %v3130
    %v3138 = vsel %vm1419, %v3136, %v3132
    %v3139 = vld [vmem:[%s10] sm:$0xff]
    %v3140 = vld [vmem:[%s11] sm:$0xff]
    %v3141 = vmul.f32 %v366, %v3139
    %v3142 = vmul.f32 %v368, %v3140
    %v3143 = vsub.f32 %v3141, %v3142
    %v3144 = vmul.f32 %v366, %v3140
    %v3145 = vmul.f32 %v368, %v3139
    %v3146 = vadd.f32 %v3144, %v3145
    %3148 = vrot.lane.b32.xlu0 %v3146, 4
    %v3149 = vpop.permute.xlu0 %3148
    %v3151 = vsel %vm868, %v3143, %v3149
    %v3152 = vmul.f32 %v1501, %v3139
    %v3153 = vmul.f32 %v1503, %v3140
    %v3154 = vsub.f32 %v3152, %v3153
    %v3155 = vmul.f32 %v1501, %v3140
    %v3156 = vmul.f32 %v1503, %v3139
    %v3157 = vadd.f32 %v3155, %v3156
    %3159 = vrot.lane.b32.xlu0 %v3157, 4
    %v3160 = vpop.permute.xlu0 %3159
    %v3162 = vsel %vm868, %v3154, %v3160
    %3164 = vrot.lane.b32.xlu0 %v3162, 8
    %v3165 = vpop.permute.xlu0 %3164
    %v3167 = vsel %vm871, %v2005, %v3165
    %v3168 = vpack.c.bf16 %v3167, %v3167
    %3170 = vrot.lane.b32.xlu0 %v3151, 8
    %v3171 = vpop.permute.xlu0 %3170
    %v3173 = vsel %vm871, %v2639, %v3171
    %v3174 = vpack.c.bf16 %v3173, %v3173
    %v3176 = vsel %vm1419, %v3168, 0
    %v3179 = vsel %vm1419, %v3174, 0
    %3181 = vmatprep.subr.bf16.mxu0 0
    %3182 = vmatpush1.bf16.xpose.msra.mxu0 %v3179
    %3183 = vmatprep.subr.bf16.mxu0 0
    %3184 = vmatpush1.bf16.xpose.msra.mxu0 0
    %3185 = vmatprep.subr.bf16.mxu0 0
    %3186 = vmatpush1.bf16.xpose.msra.mxu0 0
    %3187 = vmatprep.subr.bf16.mxu0 0
    %3188 = vmatpush1.bf16.xpose.msra.mxu0 0
    %3189 = vmatprep.subr.bf16.mxu0 0
    %3190 = vmatpush1.bf16.xpose.msra.mxu0 0
    %3191 = vmatprep.subr.bf16.mxu0 0
    %3192 = vmatpush1.bf16.xpose.msra.mxu0 0
    %3193 = vmatprep.subr.bf16.mxu0 0
    %3194 = vmatpush1.bf16.xpose.msra.mxu0 0
    %3195 = vmatprep.subr.bf16.mxu0 0
    %3196 = vmatpush1.bf16.xpose.msra.mxu0 0
    %3197 = vmatprep.subr.bf16.mxu0 0
    %3198 = vmatpush1.bf16.xpose.msra.mxu0 0
    %3199 = vmatprep.subr.bf16.mxu0 0
    %3200 = vmatpush1.bf16.xpose.msra.mxu0 0
    %3201 = vmatprep.subr.bf16.mxu0 0
    %3202 = vmatpush1.bf16.xpose.msra.mxu0 0
    %3203 = vmatprep.subr.bf16.mxu0 0
    %3204 = vmatpush1.bf16.xpose.msra.mxu0 0
    %3205 = vmatprep.subr.bf16.mxu0 0
    %3206 = vmatpush1.bf16.xpose.msra.mxu0 0
    %3207 = vmatprep.subr.bf16.mxu0 0
    %3208 = vmatpush1.bf16.xpose.msra.mxu0 0
    %3209 = vmatprep.subr.bf16.mxu0 0
    %3210 = vmatpush1.bf16.xpose.msra.mxu0 0
    %3211 = vmatprep.subr.bf16.mxu0 0
    %3212 = vmatpush1.bf16.xpose.msra.mxu0 0
    %3213 = vmatprep.mubr.bf16.mxu0 0
    %3214 = vmatmul.mubr.bf16.gmra.mrb[0].mxu0 %v3176
    %v3215 = vpop.f32.mrb[0].mxu0
    %v3216 = vadd.f32 0.0, %v3215
    %v3217 = vpop.f32.mrb[0].mxu0
    %v3218 = vpop.f32.mrb[0].mxu0
    %v3219 = vpop.f32.mrb[0].mxu0
    %3220 = vdwg.mxu0
    %v3221 = vsel %vm871, %v3216, -inf
    %3222 = vmax.xlane.f32.xlu0 %v3221
    %v3223 = vpop.xlane.xlu0 %3222
    %v3224 = vsub.f32 %v3216, %v3223
    %v3225 = vmul.f32 %v3224, 1.442695
    %v3226 = vpow.pop %v3225
    %v3227 = vsel %vm871, %v3226, 0.0
    %3228 = vadd.xlane.f32.xlu0 %v3227
    %v3229 = vpop.xlane.xlu0 %3228
    %v3230 = vrcp.pop %v3229
    %v3231 = vmul.f32 %v3226, %v3230
    %v3232 = vpack.c.bf16 %v3231, %v3231
    %v3233 = vpack.c.bf16 %v3137, %v3137
    %v3235 = vsel %vm871, %v3232, 0
    %vm3237 = vcmask 1043456
    %v3239 = vsel %vm3237, %v3233, 0
    %3241 = vmatprep.subr.bf16.mxu0 0
    %3242 = vmatpush1.bf16.msra.mxu0 %v3239
    %3243 = vmatprep.subr.bf16.mxu0 0
    %3244 = vmatpush1.bf16.msra.mxu0 0
    %3245 = vmatprep.subr.bf16.mxu0 0
    %3246 = vmatpush1.bf16.msra.mxu0 0
    %3247 = vmatprep.subr.bf16.mxu0 0
    %3248 = vmatpush1.bf16.msra.mxu0 0
    %3249 = vmatprep.subr.bf16.mxu0 0
    %3250 = vmatpush1.bf16.msra.mxu0 0
    %3251 = vmatprep.subr.bf16.mxu0 0
    %3252 = vmatpush1.bf16.msra.mxu0 0
    %3253 = vmatprep.subr.bf16.mxu0 0
    %3254 = vmatpush1.bf16.msra.mxu0 0
    %3255 = vmatprep.subr.bf16.mxu0 0
    %3256 = vmatpush1.bf16.msra.mxu0 0
    %3257 = vmatprep.subr.bf16.mxu0 0
    %3258 = vmatpush1.bf16.msra.mxu0 0
    %3259 = vmatprep.subr.bf16.mxu0 0
    %3260 = vmatpush1.bf16.msra.mxu0 0
    %3261 = vmatprep.subr.bf16.mxu0 0
    %3262 = vmatpush1.bf16.msra.mxu0 0
    %3263 = vmatprep.subr.bf16.mxu0 0
    %3264 = vmatpush1.bf16.msra.mxu0 0
    %3265 = vmatprep.subr.bf16.mxu0 0
    %3266 = vmatpush1.bf16.msra.mxu0 0
    %3267 = vmatprep.subr.bf16.mxu0 0
    %3268 = vmatpush1.bf16.msra.mxu0 0
    %3269 = vmatprep.subr.bf16.mxu0 0
    %3270 = vmatpush1.bf16.msra.mxu0 0
    %3271 = vmatprep.subr.bf16.mxu0 0
    %3272 = vmatpush1.bf16.msra.mxu0 0
    %3273 = vmatprep.mubr.bf16.mxu0 0
    %3274 = vmatmul.mubr.bf16.gmra.mrb[0].mxu0 %v3235
    %v3275 = vpop.f32.mrb[0].mxu0
    %v3276 = vadd.f32 0.0, %v3275
    %v3277 = vpop.f32.mrb[0].mxu0
    %v3278 = vpop.f32.mrb[0].mxu0
    %v3279 = vpop.f32.mrb[0].mxu0
    %3280 = vdwg.mxu0
    %3281 = vst.msk [vmem:[#allocation2] sm:$0xff] %vm871, %v3276
    %3283 = vrot.lane.b32.xlu0 %v3139, 4
    %v3284 = vpop.permute.xlu0 %3283
    %v3286 = vmul.f32 %v1501, %v3284
    %3288 = vrot.lane.b32.xlu0 %v3140, 4
    %v3289 = vpop.permute.xlu0 %3288
    %v3291 = vmul.f32 %v1503, %v3289
    %v3292 = vsub.f32 %v3286, %v3291
    %v3293 = vmul.f32 %v1501, %v3289
    %v3294 = vmul.f32 %v1503, %v3284
    %v3295 = vadd.f32 %v3293, %v3294
    %3297 = vrot.lane.b32.xlu0 %v3292, 124
    %v3298 = vpop.permute.xlu0 %3297
    %v3300 = vsel %vm868, %v3298, %v3295
    %3302 = vrot.lane.b32.xlu0 %v2005, 120
    %v3303 = vpop.permute.xlu0 %3302
    %3306 = vrot.lane.b32.xlu0 %v3300, 8
    %v3307 = vpop.permute.xlu0 %3306
    %v3309 = vsel %vm871, %v3303, %v3307
    %v3310 = vpack.c.bf16 %v3309, %v3309
    %3312 = vrot.lane.b32.xlu0 %v2639, 120
    %v3313 = vpop.permute.xlu0 %3312
    %v3315 = vsel %vm871, %v3313, %v3171
    %v3316 = vpack.c.bf16 %v3315, %v3315
    %v3318 = vsel %vm1419, %v3310, 0
    %v3321 = vsel %vm1419, %v3316, 0
    %3323 = vmatprep.subr.bf16.mxu0 0
    %3324 = vmatpush1.bf16.xpose.msra.mxu0 %v3321
    %3325 = vmatprep.subr.bf16.mxu0 0
    %3326 = vmatpush1.bf16.xpose.msra.mxu0 0
    %3327 = vmatprep.subr.bf16.mxu0 0
    %3328 = vmatpush1.bf16.xpose.msra.mxu0 0
    %3329 = vmatprep.subr.bf16.mxu0 0
    %3330 = vmatpush1.bf16.xpose.msra.mxu0 0
    %3331 = vmatprep.subr.bf16.mxu0 0
    %3332 = vmatpush1.bf16.xpose.msra.mxu0 0
    %3333 = vmatprep.subr.bf16.mxu0 0
    %3334 = vmatpush1.bf16.xpose.msra.mxu0 0
    %3335 = vmatprep.subr.bf16.mxu0 0
    %3336 = vmatpush1.bf16.xpose.msra.mxu0 0
    %3337 = vmatprep.subr.bf16.mxu0 0
    %3338 = vmatpush1.bf16.xpose.msra.mxu0 0
    %3339 = vmatprep.subr.bf16.mxu0 0
    %3340 = vmatpush1.bf16.xpose.msra.mxu0 0
    %3341 = vmatprep.subr.bf16.mxu0 0
    %3342 = vmatpush1.bf16.xpose.msra.mxu0 0
    %3343 = vmatprep.subr.bf16.mxu0 0
    %3344 = vmatpush1.bf16.xpose.msra.mxu0 0
    %3345 = vmatprep.subr.bf16.mxu0 0
    %3346 = vmatpush1.bf16.xpose.msra.mxu0 0
    %3347 = vmatprep.subr.bf16.mxu0 0
    %3348 = vmatpush1.bf16.xpose.msra.mxu0 0
    %3349 = vmatprep.subr.bf16.mxu0 0
    %3350 = vmatpush1.bf16.xpose.msra.mxu0 0
    %3351 = vmatprep.subr.bf16.mxu0 0
    %3352 = vmatpush1.bf16.xpose.msra.mxu0 0
    %3353 = vmatprep.subr.bf16.mxu0 0
    %3354 = vmatpush1.bf16.xpose.msra.mxu0 0
    %3355 = vmatprep.mubr.bf16.mxu0 0
    %3356 = vmatmul.mubr.bf16.gmra.mrb[0].mxu0 %v3318
    %v3357 = vpop.f32.mrb[0].mxu0
    %v3358 = vadd.f32 0.0, %v3357
    %v3359 = vpop.f32.mrb[0].mxu0
    %v3360 = vpop.f32.mrb[0].mxu0
    %v3361 = vpop.f32.mrb[0].mxu0
    %3362 = vdwg.mxu0
    %v3363 = vsel %vm871, %v3358, -inf
    %3364 = vmax.xlane.f32.xlu0 %v3363
    %v3365 = vpop.xlane.xlu0 %3364
    %v3366 = vsub.f32 %v3358, %v3365
    %v3367 = vmul.f32 %v3366, 1.442695
    %v3368 = vpow.pop %v3367
    %v3369 = vsel %vm871, %v3368, 0.0
    %3370 = vadd.xlane.f32.xlu0 %v3369
    %v3371 = vpop.xlane.xlu0 %3370
    %v3372 = vrcp.pop %v3371
    %v3373 = vmul.f32 %v3368, %v3372
    %v3374 = vpack.c.bf16 %v3373, %v3373
    %3376 = vrot.lane.b32.xlu0 %v3233, 120
    %v3377 = vpop.permute.xlu0 %3376
    %v3379 = vsel %vm871, %v3374, 0
    %v3382 = vsel %vm3237, %v3377, 0
    %3384 = vmatprep.subr.bf16.mxu0 0
    %3385 = vmatpush1.bf16.msra.mxu0 %v3382
    %3386 = vmatprep.subr.bf16.mxu0 0
    %3387 = vmatpush1.bf16.msra.mxu0 0
    %3388 = vmatprep.subr.bf16.mxu0 0
    %3389 = vmatpush1.bf16.msra.mxu0 0
    %3390 = vmatprep.subr.bf16.mxu0 0
    %3391 = vmatpush1.bf16.msra.mxu0 0
    %3392 = vmatprep.subr.bf16.mxu0 0
    %3393 = vmatpush1.bf16.msra.mxu0 0
    %3394 = vmatprep.subr.bf16.mxu0 0
    %3395 = vmatpush1.bf16.msra.mxu0 0
    %3396 = vmatprep.subr.bf16.mxu0 0
    %3397 = vmatpush1.bf16.msra.mxu0 0
    %3398 = vmatprep.subr.bf16.mxu0 0
    %3399 = vmatpush1.bf16.msra.mxu0 0
    %3400 = vmatprep.subr.bf16.mxu0 0
    %3401 = vmatpush1.bf16.msra.mxu0 0
    %3402 = vmatprep.subr.bf16.mxu0 0
    %3403 = vmatpush1.bf16.msra.mxu0 0
    %3404 = vmatprep.subr.bf16.mxu0 0
    %3405 = vmatpush1.bf16.msra.mxu0 0
    %3406 = vmatprep.subr.bf16.mxu0 0
    %3407 = vmatpush1.bf16.msra.mxu0 0
    %3408 = vmatprep.subr.bf16.mxu0 0
    %3409 = vmatpush1.bf16.msra.mxu0 0
    %3410 = vmatprep.subr.bf16.mxu0 0
    %3411 = vmatpush1.bf16.msra.mxu0 0
    %3412 = vmatprep.subr.bf16.mxu0 0
    %3413 = vmatpush1.bf16.msra.mxu0 0
    %3414 = vmatprep.subr.bf16.mxu0 0
    %3415 = vmatpush1.bf16.msra.mxu0 0
    %3416 = vmatprep.mubr.bf16.mxu0 0
    %3417 = vmatmul.mubr.bf16.gmra.mrb[0].mxu0 %v3379
    %v3418 = vpop.f32.mrb[0].mxu0
    %v3419 = vadd.f32 0.0, %v3418
    %v3420 = vpop.f32.mrb[0].mxu0
    %v3421 = vpop.f32.mrb[0].mxu0
    %v3422 = vpop.f32.mrb[0].mxu0
    %3423 = vdwg.mxu0
    %3425 = vrot.lane.b32.xlu0 %v3419, 8
    %v3426 = vpop.permute.xlu0 %3425
    %vm3428 = vcmask 130112
    %3429 = vst.msk [vmem:[#allocation2] sm:$0xff] %vm3428, %v3426
    %3430 = vrot.lane.b32.xlu0 %v3139, 8
    %v3431 = vpop.permute.xlu0 %3430
    %v3433 = vmul.f32 %v1501, %v3431
    %3434 = vrot.lane.b32.xlu0 %v3140, 8
    %v3435 = vpop.permute.xlu0 %3434
    %v3437 = vmul.f32 %v1503, %v3435
    %v3438 = vsub.f32 %v3433, %v3437
    %v3439 = vmul.f32 %v1501, %v3435
    %v3440 = vmul.f32 %v1503, %v3431
    %v3441 = vadd.f32 %v3439, %v3440
    %3443 = vrot.lane.b32.xlu0 %v3438, 120
    %v3444 = vpop.permute.xlu0 %3443
    %3447 = vrot.lane.b32.xlu0 %v3441, 124
    %v3448 = vpop.permute.xlu0 %3447
    %v3450 = vsel %vm868, %v3444, %v3448
    %3451 = vrot.lane.b32.xlu0 %v2005, 112
    %v3452 = vpop.permute.xlu0 %3451
    %3455 = vrot.lane.b32.xlu0 %v3450, 8
    %v3456 = vpop.permute.xlu0 %3455
    %v3458 = vsel %vm871, %v3452, %v3456
    %v3459 = vpack.c.bf16 %v3458, %v3458
    %3460 = vrot.lane.b32.xlu0 %v2639, 112
    %v3461 = vpop.permute.xlu0 %3460
    %v3463 = vsel %vm871, %v3461, %v3171
    %v3464 = vpack.c.bf16 %v3463, %v3463
    %v3466 = vsel %vm1419, %v3459, 0
    %v3469 = vsel %vm1419, %v3464, 0
    %3471 = vmatprep.subr.bf16.mxu0 0
    %3472 = vmatpush1.bf16.xpose.msra.mxu0 %v3469
    %3473 = vmatprep.subr.bf16.mxu0 0
    %3474 = vmatpush1.bf16.xpose.msra.mxu0 0
    %3475 = vmatprep.subr.bf16.mxu0 0
    %3476 = vmatpush1.bf16.xpose.msra.mxu0 0
    %3477 = vmatprep.subr.bf16.mxu0 0
    %3478 = vmatpush1.bf16.xpose.msra.mxu0 0
    %3479 = vmatprep.subr.bf16.mxu0 0
    %3480 = vmatpush1.bf16.xpose.msra.mxu0 0
    %3481 = vmatprep.subr.bf16.mxu0 0
    %3482 = vmatpush1.bf16.xpose.msra.mxu0 0
    %3483 = vmatprep.subr.bf16.mxu0 0
    %3484 = vmatpush1.bf16.xpose.msra.mxu0 0
    %3485 = vmatprep.subr.bf16.mxu0 0
    %3486 = vmatpush1.bf16.xpose.msra.mxu0 0
    %3487 = vmatprep.subr.bf16.mxu0 0
    %3488 = vmatpush1.bf16.xpose.msra.mxu0 0
    %3489 = vmatprep.subr.bf16.mxu0 0
    %3490 = vmatpush1.bf16.xpose.msra.mxu0 0
    %3491 = vmatprep.subr.bf16.mxu0 0
    %3492 = vmatpush1.bf16.xpose.msra.mxu0 0
    %3493 = vmatprep.subr.bf16.mxu0 0
    %3494 = vmatpush1.bf16.xpose.msra.mxu0 0
    %3495 = vmatprep.subr.bf16.mxu0 0
    %3496 = vmatpush1.bf16.xpose.msra.mxu0 0
    %3497 = vmatprep.subr.bf16.mxu0 0
    %3498 = vmatpush1.bf16.xpose.msra.mxu0 0
    %3499 = vmatprep.subr.bf16.mxu0 0
    %3500 = vmatpush1.bf16.xpose.msra.mxu0 0
    %3501 = vmatprep.subr.bf16.mxu0 0
    %3502 = vmatpush1.bf16.xpose.msra.mxu0 0
    %3503 = vmatprep.mubr.bf16.mxu0 0
    %3504 = vmatmul.mubr.bf16.gmra.mrb[0].mxu0 %v3466
    %v3505 = vpop.f32.mrb[0].mxu0
    %v3506 = vadd.f32 0.0, %v3505
    %v3507 = vpop.f32.mrb[0].mxu0
    %v3508 = vpop.f32.mrb[0].mxu0
    %v3509 = vpop.f32.mrb[0].mxu0
    %3510 = vdwg.mxu0
    %v3511 = vsel %vm871, %v3506, -inf
    %3512 = vmax.xlane.f32.xlu0 %v3511
    %v3513 = vpop.xlane.xlu0 %3512
    %v3514 = vsub.f32 %v3506, %v3513
    %v3515 = vmul.f32 %v3514, 1.442695
    %v3516 = vpow.pop %v3515
    %v3517 = vsel %vm871, %v3516, 0.0
    %3518 = vadd.xlane.f32.xlu0 %v3517
    %v3519 = vpop.xlane.xlu0 %3518
    %v3520 = vrcp.pop %v3519
    %v3521 = vmul.f32 %v3516, %v3520
    %v3522 = vpack.c.bf16 %v3521, %v3521
    %3523 = vrot.lane.b32.xlu0 %v3233, 112
    %v3524 = vpop.permute.xlu0 %3523
    %v3526 = vsel %vm871, %v3522, 0
    %v3529 = vsel %vm3237, %v3524, 0
    %3531 = vmatprep.subr.bf16.mxu0 0
    %3532 = vmatpush1.bf16.msra.mxu0 %v3529
    %3533 = vmatprep.subr.bf16.mxu0 0
    %3534 = vmatpush1.bf16.msra.mxu0 0
    %3535 = vmatprep.subr.bf16.mxu0 0
    %3536 = vmatpush1.bf16.msra.mxu0 0
    %3537 = vmatprep.subr.bf16.mxu0 0
    %3538 = vmatpush1.bf16.msra.mxu0 0
    %3539 = vmatprep.subr.bf16.mxu0 0
    %3540 = vmatpush1.bf16.msra.mxu0 0
    %3541 = vmatprep.subr.bf16.mxu0 0
    %3542 = vmatpush1.bf16.msra.mxu0 0
    %3543 = vmatprep.subr.bf16.mxu0 0
    %3544 = vmatpush1.bf16.msra.mxu0 0
    %3545 = vmatprep.subr.bf16.mxu0 0
    %3546 = vmatpush1.bf16.msra.mxu0 0
    %3547 = vmatprep.subr.bf16.mxu0 0
    %3548 = vmatpush1.bf16.msra.mxu0 0
    %3549 = vmatprep.subr.bf16.mxu0 0
    %3550 = vmatpush1.bf16.msra.mxu0 0
    %3551 = vmatprep.subr.bf16.mxu0 0
    %3552 = vmatpush1.bf16.msra.mxu0 0
    %3553 = vmatprep.subr.bf16.mxu0 0
    %3554 = vmatpush1.bf16.msra.mxu0 0
    %3555 = vmatprep.subr.bf16.mxu0 0
    %3556 = vmatpush1.bf16.msra.mxu0 0
    %3557 = vmatprep.subr.bf16.mxu0 0
    %3558 = vmatpush1.bf16.msra.mxu0 0
    %3559 = vmatprep.subr.bf16.mxu0 0
    %3560 = vmatpush1.bf16.msra.mxu0 0
    %3561 = vmatprep.subr.bf16.mxu0 0
    %3562 = vmatpush1.bf16.msra.mxu0 0
    %3563 = vmatprep.mubr.bf16.mxu0 0
    %3564 = vmatmul.mubr.bf16.gmra.mrb[0].mxu0 %v3526
    %v3565 = vpop.f32.mrb[0].mxu0
    %v3566 = vadd.f32 0.0, %v3565
    %v3567 = vpop.f32.mrb[0].mxu0
    %v3568 = vpop.f32.mrb[0].mxu0
    %v3569 = vpop.f32.mrb[0].mxu0
    %3570 = vdwg.mxu0
    %3572 = vrot.lane.b32.xlu0 %v3566, 16
    %v3573 = vpop.permute.xlu0 %3572
    %vm3575 = vcmask 195712
    %3576 = vst.msk [vmem:[#allocation2] sm:$0xff] %vm3575, %v3573
    %3577 = vrot.lane.b32.xlu0 %v3139, 12
    %v3578 = vpop.permute.xlu0 %3577
    %v3580 = vmul.f32 %v1501, %v3578
    %3581 = vrot.lane.b32.xlu0 %v3140, 12
    %v3582 = vpop.permute.xlu0 %3581
    %v3584 = vmul.f32 %v1503, %v3582
    %v3585 = vsub.f32 %v3580, %v3584
    %v3586 = vmul.f32 %v1501, %v3582
    %v3587 = vmul.f32 %v1503, %v3578
    %v3588 = vadd.f32 %v3586, %v3587
    %3590 = vrot.lane.b32.xlu0 %v3585, 116
    %v3591 = vpop.permute.xlu0 %3590
    %3594 = vrot.lane.b32.xlu0 %v3588, 120
    %v3595 = vpop.permute.xlu0 %3594
    %v3597 = vsel %vm868, %v3591, %v3595
    %3598 = vrot.lane.b32.xlu0 %v2005, 104
    %v3599 = vpop.permute.xlu0 %3598
    %3602 = vrot.lane.b32.xlu0 %v3597, 8
    %v3603 = vpop.permute.xlu0 %3602
    %v3605 = vsel %vm871, %v3599, %v3603
    %v3606 = vpack.c.bf16 %v3605, %v3605
    %3607 = vrot.lane.b32.xlu0 %v2639, 104
    %v3608 = vpop.permute.xlu0 %3607
    %v3610 = vsel %vm871, %v3608, %v3171
    %v3611 = vpack.c.bf16 %v3610, %v3610
    %v3613 = vsel %vm1419, %v3606, 0
    %v3616 = vsel %vm1419, %v3611, 0
    %3618 = vmatprep.subr.bf16.mxu0 0
    %3619 = vmatpush1.bf16.xpose.msra.mxu0 %v3616
    %3620 = vmatprep.subr.bf16.mxu0 0
    %3621 = vmatpush1.bf16.xpose.msra.mxu0 0
    %3622 = vmatprep.subr.bf16.mxu0 0
    %3623 = vmatpush1.bf16.xpose.msra.mxu0 0
    %3624 = vmatprep.subr.bf16.mxu0 0
    %3625 = vmatpush1.bf16.xpose.msra.mxu0 0
    %3626 = vmatprep.subr.bf16.mxu0 0
    %3627 = vmatpush1.bf16.xpose.msra.mxu0 0
    %3628 = vmatprep.subr.bf16.mxu0 0
    %3629 = vmatpush1.bf16.xpose.msra.mxu0 0
    %3630 = vmatprep.subr.bf16.mxu0 0
    %3631 = vmatpush1.bf16.xpose.msra.mxu0 0
    %3632 = vmatprep.subr.bf16.mxu0 0
    %3633 = vmatpush1.bf16.xpose.msra.mxu0 0
    %3634 = vmatprep.subr.bf16.mxu0 0
    %3635 = vmatpush1.bf16.xpose.msra.mxu0 0
    %3636 = vmatprep.subr.bf16.mxu0 0
    %3637 = vmatpush1.bf16.xpose.msra.mxu0 0
    %3638 = vmatprep.subr.bf16.mxu0 0
    %3639 = vmatpush1.bf16.xpose.msra.mxu0 0
    %3640 = vmatprep.subr.bf16.mxu0 0
    %3641 = vmatpush1.bf16.xpose.msra.mxu0 0
    %3642 = vmatprep.subr.bf16.mxu0 0
    %3643 = vmatpush1.bf16.xpose.msra.mxu0 0
    %3644 = vmatprep.subr.bf16.mxu0 0
    %3645 = vmatpush1.bf16.xpose.msra.mxu0 0
    %3646 = vmatprep.subr.bf16.mxu0 0
    %3647 = vmatpush1.bf16.xpose.msra.mxu0 0
    %3648 = vmatprep.subr.bf16.mxu0 0
    %3649 = vmatpush1.bf16.xpose.msra.mxu0 0
    %3650 = vmatprep.mubr.bf16.mxu0 0
    %3651 = vmatmul.mubr.bf16.gmra.mrb[0].mxu0 %v3613
    %v3652 = vpop.f32.mrb[0].mxu0
    %v3653 = vadd.f32 0.0, %v3652
    %v3654 = vpop.f32.mrb[0].mxu0
    %v3655 = vpop.f32.mrb[0].mxu0
    %v3656 = vpop.f32.mrb[0].mxu0
    %3657 = vdwg.mxu0
    %v3658 = vsel %vm871, %v3653, -inf
    %3659 = vmax.xlane.f32.xlu0 %v3658
    %v3660 = vpop.xlane.xlu0 %3659
    %v3661 = vsub.f32 %v3653, %v3660
    %v3662 = vmul.f32 %v3661, 1.442695
    %v3663 = vpow.pop %v3662
    %v3664 = vsel %vm871, %v3663, 0.0
    %3665 = vadd.xlane.f32.xlu0 %v3664
    %v3666 = vpop.xlane.xlu0 %3665
    %v3667 = vrcp.pop %v3666
    %v3668 = vmul.f32 %v3663, %v3667
    %v3669 = vpack.c.bf16 %v3668, %v3668
    %3670 = vrot.lane.b32.xlu0 %v3233, 104
    %v3671 = vpop.permute.xlu0 %3670
    %v3673 = vsel %vm871, %v3669, 0
    %v3676 = vsel %vm3237, %v3671, 0
    %3678 = vmatprep.subr.bf16.mxu0 0
    %3679 = vmatpush1.bf16.msra.mxu0 %v3676
    %3680 = vmatprep.subr.bf16.mxu0 0
    %3681 = vmatpush1.bf16.msra.mxu0 0
    %3682 = vmatprep.subr.bf16.mxu0 0
    %3683 = vmatpush1.bf16.msra.mxu0 0
    %3684 = vmatprep.subr.bf16.mxu0 0
    %3685 = vmatpush1.bf16.msra.mxu0 0
    %3686 = vmatprep.subr.bf16.mxu0 0
    %3687 = vmatpush1.bf16.msra.mxu0 0
    %3688 = vmatprep.subr.bf16.mxu0 0
    %3689 = vmatpush1.bf16.msra.mxu0 0
    %3690 = vmatprep.subr.bf16.mxu0 0
    %3691 = vmatpush1.bf16.msra.mxu0 0
    %3692 = vmatprep.subr.bf16.mxu0 0
    %3693 = vmatpush1.bf16.msra.mxu0 0
    %3694 = vmatprep.subr.bf16.mxu0 0
    %3695 = vmatpush1.bf16.msra.mxu0 0
    %3696 = vmatprep.subr.bf16.mxu0 0
    %3697 = vmatpush1.bf16.msra.mxu0 0
    %3698 = vmatprep.subr.bf16.mxu0 0
    %3699 = vmatpush1.bf16.msra.mxu0 0
    %3700 = vmatprep.subr.bf16.mxu0 0
    %3701 = vmatpush1.bf16.msra.mxu0 0
    %3702 = vmatprep.subr.bf16.mxu0 0
    %3703 = vmatpush1.bf16.msra.mxu0 0
    %3704 = vmatprep.subr.bf16.mxu0 0
    %3705 = vmatpush1.bf16.msra.mxu0 0
    %3706 = vmatprep.subr.bf16.mxu0 0
    %3707 = vmatpush1.bf16.msra.mxu0 0
    %3708 = vmatprep.subr.bf16.mxu0 0
    %3709 = vmatpush1.bf16.msra.mxu0 0
    %3710 = vmatprep.mubr.bf16.mxu0 0
    %3711 = vmatmul.mubr.bf16.gmra.mrb[0].mxu0 %v3673
    %v3712 = vpop.f32.mrb[0].mxu0
    %v3713 = vadd.f32 0.0, %v3712
    %v3714 = vpop.f32.mrb[0].mxu0
    %v3715 = vpop.f32.mrb[0].mxu0
    %v3716 = vpop.f32.mrb[0].mxu0
    %3717 = vdwg.mxu0
    %3719 = vrot.lane.b32.xlu0 %v3713, 24
    %v3720 = vpop.permute.xlu0 %3719
    %vm3722 = vcmask 261312
    %3723 = vst.msk [vmem:[#allocation2] sm:$0xff] %vm3722, %v3720
    %v3724 = vmul.f32 %v370, %v3139
    %v3725 = vmul.f32 %v372, %v3140
    %v3726 = vsub.f32 %v3724, %v3725
    %v3727 = vmul.f32 %v370, %v3140
    %v3728 = vmul.f32 %v372, %v3139
    %v3729 = vadd.f32 %v3727, %v3728
    %3731 = vrot.lane.b32.xlu0 %v3729, 4
    %v3732 = vpop.permute.xlu0 %3731
    %v3734 = vsel %vm868, %v3726, %v3732
    %v3735 = vmul.f32 %v1505, %v3139
    %v3736 = vmul.f32 %v1507, %v3140
    %v3737 = vsub.f32 %v3735, %v3736
    %v3738 = vmul.f32 %v1505, %v3140
    %v3739 = vmul.f32 %v1507, %v3139
    %v3740 = vadd.f32 %v3738, %v3739
    %3742 = vrot.lane.b32.xlu0 %v3740, 4
    %v3743 = vpop.permute.xlu0 %3742
    %v3745 = vsel %vm868, %v3737, %v3743
    %3747 = vrot.lane.b32.xlu0 %v3745, 8
    %v3748 = vpop.permute.xlu0 %3747
    %v3750 = vsel %vm871, %v2006, %v3748
    %v3751 = vpack.c.bf16 %v3750, %v3750
    %3753 = vrot.lane.b32.xlu0 %v3734, 8
    %v3754 = vpop.permute.xlu0 %3753
    %v3756 = vsel %vm871, %v2640, %v3754
    %v3757 = vpack.c.bf16 %v3756, %v3756
    %v3759 = vsel %vm1419, %v3751, 0
    %v3762 = vsel %vm1419, %v3757, 0
    %3764 = vmatprep.subr.bf16.mxu0 0
    %3765 = vmatpush1.bf16.xpose.msra.mxu0 %v3762
    %3766 = vmatprep.subr.bf16.mxu0 0
    %3767 = vmatpush1.bf16.xpose.msra.mxu0 0
    %3768 = vmatprep.subr.bf16.mxu0 0
    %3769 = vmatpush1.bf16.xpose.msra.mxu0 0
    %3770 = vmatprep.subr.bf16.mxu0 0
    %3771 = vmatpush1.bf16.xpose.msra.mxu0 0
    %3772 = vmatprep.subr.bf16.mxu0 0
    %3773 = vmatpush1.bf16.xpose.msra.mxu0 0
    %3774 = vmatprep.subr.bf16.mxu0 0
    %3775 = vmatpush1.bf16.xpose.msra.mxu0 0
    %3776 = vmatprep.subr.bf16.mxu0 0
    %3777 = vmatpush1.bf16.xpose.msra.mxu0 0
    %3778 = vmatprep.subr.bf16.mxu0 0
    %3779 = vmatpush1.bf16.xpose.msra.mxu0 0
    %3780 = vmatprep.subr.bf16.mxu0 0
    %3781 = vmatpush1.bf16.xpose.msra.mxu0 0
    %3782 = vmatprep.subr.bf16.mxu0 0
    %3783 = vmatpush1.bf16.xpose.msra.mxu0 0
    %3784 = vmatprep.subr.bf16.mxu0 0
    %3785 = vmatpush1.bf16.xpose.msra.mxu0 0
    %3786 = vmatprep.subr.bf16.mxu0 0
    %3787 = vmatpush1.bf16.xpose.msra.mxu0 0
    %3788 = vmatprep.subr.bf16.mxu0 0
    %3789 = vmatpush1.bf16.xpose.msra.mxu0 0
    %3790 = vmatprep.subr.bf16.mxu0 0
    %3791 = vmatpush1.bf16.xpose.msra.mxu0 0
    %3792 = vmatprep.subr.bf16.mxu0 0
    %3793 = vmatpush1.bf16.xpose.msra.mxu0 0
    %3794 = vmatprep.subr.bf16.mxu0 0
    %3795 = vmatpush1.bf16.xpose.msra.mxu0 0
    %3796 = vmatprep.mubr.bf16.mxu0 0
    %3797 = vmatmul.mubr.bf16.gmra.mrb[0].mxu0 %v3759
    %v3798 = vpop.f32.mrb[0].mxu0
    %v3799 = vadd.f32 0.0, %v3798
    %v3800 = vpop.f32.mrb[0].mxu0
    %v3801 = vpop.f32.mrb[0].mxu0
    %v3802 = vpop.f32.mrb[0].mxu0
    %3803 = vdwg.mxu0
    %v3804 = vsel %vm871, %v3799, -inf
    %3805 = vmax.xlane.f32.xlu0 %v3804
    %v3806 = vpop.xlane.xlu0 %3805
    %v3807 = vsub.f32 %v3799, %v3806
    %v3808 = vmul.f32 %v3807, 1.442695
    %v3809 = vpow.pop %v3808
    %v3810 = vsel %vm871, %v3809, 0.0
    %3811 = vadd.xlane.f32.xlu0 %v3810
    %v3812 = vpop.xlane.xlu0 %3811
    %v3813 = vrcp.pop %v3812
    %v3814 = vmul.f32 %v3809, %v3813
    %v3815 = vpack.c.bf16 %v3814, %v3814
    %v3816 = vpack.c.bf16 %v3138, %v3138
    %v3818 = vsel %vm871, %v3815, 0
    %v3821 = vsel %vm3237, %v3816, 0
    %3823 = vmatprep.subr.bf16.mxu0 0
    %3824 = vmatpush1.bf16.msra.mxu0 %v3821
    %3825 = vmatprep.subr.bf16.mxu0 0
    %3826 = vmatpush1.bf16.msra.mxu0 0
    %3827 = vmatprep.subr.bf16.mxu0 0
    %3828 = vmatpush1.bf16.msra.mxu0 0
    %3829 = vmatprep.subr.bf16.mxu0 0
    %3830 = vmatpush1.bf16.msra.mxu0 0
    %3831 = vmatprep.subr.bf16.mxu0 0
    %3832 = vmatpush1.bf16.msra.mxu0 0
    %3833 = vmatprep.subr.bf16.mxu0 0
    %3834 = vmatpush1.bf16.msra.mxu0 0
    %3835 = vmatprep.subr.bf16.mxu0 0
    %3836 = vmatpush1.bf16.msra.mxu0 0
    %3837 = vmatprep.subr.bf16.mxu0 0
    %3838 = vmatpush1.bf16.msra.mxu0 0
    %3839 = vmatprep.subr.bf16.mxu0 0
    %3840 = vmatpush1.bf16.msra.mxu0 0
    %3841 = vmatprep.subr.bf16.mxu0 0
    %3842 = vmatpush1.bf16.msra.mxu0 0
    %3843 = vmatprep.subr.bf16.mxu0 0
    %3844 = vmatpush1.bf16.msra.mxu0 0
    %3845 = vmatprep.subr.bf16.mxu0 0
    %3846 = vmatpush1.bf16.msra.mxu0 0
    %3847 = vmatprep.subr.bf16.mxu0 0
    %3848 = vmatpush1.bf16.msra.mxu0 0
    %3849 = vmatprep.subr.bf16.mxu0 0
    %3850 = vmatpush1.bf16.msra.mxu0 0
    %3851 = vmatprep.subr.bf16.mxu0 0
    %3852 = vmatpush1.bf16.msra.mxu0 0
    %3853 = vmatprep.subr.bf16.mxu0 0
    %3854 = vmatpush1.bf16.msra.mxu0 0
    %3855 = vmatprep.mubr.bf16.mxu0 0
    %3856 = vmatmul.mubr.bf16.gmra.mrb[0].mxu0 %v3818
    %v3857 = vpop.f32.mrb[0].mxu0
    %v3858 = vadd.f32 0.0, %v3857
    %v3859 = vpop.f32.mrb[0].mxu0
    %v3860 = vpop.f32.mrb[0].mxu0
    %v3861 = vpop.f32.mrb[0].mxu0
    %3862 = vdwg.mxu0
    %3863 = vst.msk [vmem:[#allocation2 + $0x8] sm:$0xff] %vm871, %v3858
    %v3864 = vmul.f32 %v1505, %v3284
    %v3865 = vmul.f32 %v1507, %v3289
    %v3866 = vsub.f32 %v3864, %v3865
    %v3867 = vmul.f32 %v1505, %v3289
    %v3868 = vmul.f32 %v1507, %v3284
    %v3869 = vadd.f32 %v3867, %v3868
    %3871 = vrot.lane.b32.xlu0 %v3866, 124
    %v3872 = vpop.permute.xlu0 %3871
    %v3874 = vsel %vm868, %v3872, %v3869
    %3876 = vrot.lane.b32.xlu0 %v2006, 120
    %v3877 = vpop.permute.xlu0 %3876
    %3880 = vrot.lane.b32.xlu0 %v3874, 8
    %v3881 = vpop.permute.xlu0 %3880
    %v3883 = vsel %vm871, %v3877, %v3881
    %v3884 = vpack.c.bf16 %v3883, %v3883
    %3886 = vrot.lane.b32.xlu0 %v2640, 120
    %v3887 = vpop.permute.xlu0 %3886
    %v3889 = vsel %vm871, %v3887, %v3754
    %v3890 = vpack.c.bf16 %v3889, %v3889
    %v3892 = vsel %vm1419, %v3884, 0
    %v3895 = vsel %vm1419, %v3890, 0
    %3897 = vmatprep.subr.bf16.mxu0 0
    %3898 = vmatpush1.bf16.xpose.msra.mxu0 %v3895
    %3899 = vmatprep.subr.bf16.mxu0 0
    %3900 = vmatpush1.bf16.xpose.msra.mxu0 0
    %3901 = vmatprep.subr.bf16.mxu0 0
    %3902 = vmatpush1.bf16.xpose.msra.mxu0 0
    %3903 = vmatprep.subr.bf16.mxu0 0
    %3904 = vmatpush1.bf16.xpose.msra.mxu0 0
    %3905 = vmatprep.subr.bf16.mxu0 0
    %3906 = vmatpush1.bf16.xpose.msra.mxu0 0
    %3907 = vmatprep.subr.bf16.mxu0 0
    %3908 = vmatpush1.bf16.xpose.msra.mxu0 0
    %3909 = vmatprep.subr.bf16.mxu0 0
    %3910 = vmatpush1.bf16.xpose.msra.mxu0 0
    %3911 = vmatprep.subr.bf16.mxu0 0
    %3912 = vmatpush1.bf16.xpose.msra.mxu0 0
    %3913 = vmatprep.subr.bf16.mxu0 0
    %3914 = vmatpush1.bf16.xpose.msra.mxu0 0
    %3915 = vmatprep.subr.bf16.mxu0 0
    %3916 = vmatpush1.bf16.xpose.msra.mxu0 0
    %3917 = vmatprep.subr.bf16.mxu0 0
    %3918 = vmatpush1.bf16.xpose.msra.mxu0 0
    %3919 = vmatprep.subr.bf16.mxu0 0
    %3920 = vmatpush1.bf16.xpose.msra.mxu0 0
    %3921 = vmatprep.subr.bf16.mxu0 0
    %3922 = vmatpush1.bf16.xpose.msra.mxu0 0
    %3923 = vmatprep.subr.bf16.mxu0 0
    %3924 = vmatpush1.bf16.xpose.msra.mxu0 0
    %3925 = vmatprep.subr.bf16.mxu0 0
    %3926 = vmatpush1.bf16.xpose.msra.mxu0 0
    %3927 = vmatprep.subr.bf16.mxu0 0
    %3928 = vmatpush1.bf16.xpose.msra.mxu0 0
    %3929 = vmatprep.mubr.bf16.mxu0 0
    %3930 = vmatmul.mubr.bf16.gmra.mrb[0].mxu0 %v3892
    %v3931 = vpop.f32.mrb[0].mxu0
    %v3932 = vadd.f32 0.0, %v3931
    %v3933 = vpop.f32.mrb[0].mxu0
    %v3934 = vpop.f32.mrb[0].mxu0
    %v3935 = vpop.f32.mrb[0].mxu0
    %3936 = vdwg.mxu0
    %v3937 = vsel %vm871, %v3932, -inf
    %3938 = vmax.xlane.f32.xlu0 %v3937
    %v3939 = vpop.xlane.xlu0 %3938
    %v3940 = vsub.f32 %v3932, %v3939
    %v3941 = vmul.f32 %v3940, 1.442695
    %v3942 = vpow.pop %v3941
    %v3943 = vsel %vm871, %v3942, 0.0
    %3944 = vadd.xlane.f32.xlu0 %v3943
    %v3945 = vpop.xlane.xlu0 %3944
    %v3946 = vrcp.pop %v3945
    %v3947 = vmul.f32 %v3942, %v3946
    %v3948 = vpack.c.bf16 %v3947, %v3947
    %3950 = vrot.lane.b32.xlu0 %v3816, 120
    %v3951 = vpop.permute.xlu0 %3950
    %v3953 = vsel %vm871, %v3948, 0
    %v3956 = vsel %vm3237, %v3951, 0
    %3958 = vmatprep.subr.bf16.mxu0 0
    %3959 = vmatpush1.bf16.msra.mxu0 %v3956
    %3960 = vmatprep.subr.bf16.mxu0 0
    %3961 = vmatpush1.bf16.msra.mxu0 0
    %3962 = vmatprep.subr.bf16.mxu0 0
    %3963 = vmatpush1.bf16.msra.mxu0 0
    %3964 = vmatprep.subr.bf16.mxu0 0
    %3965 = vmatpush1.bf16.msra.mxu0 0
    %3966 = vmatprep.subr.bf16.mxu0 0
    %3967 = vmatpush1.bf16.msra.mxu0 0
    %3968 = vmatprep.subr.bf16.mxu0 0
    %3969 = vmatpush1.bf16.msra.mxu0 0
    %3970 = vmatprep.subr.bf16.mxu0 0
    %3971 = vmatpush1.bf16.msra.mxu0 0
    %3972 = vmatprep.subr.bf16.mxu0 0
    %3973 = vmatpush1.bf16.msra.mxu0 0
    %3974 = vmatprep.subr.bf16.mxu0 0
    %3975 = vmatpush1.bf16.msra.mxu0 0
    %3976 = vmatprep.subr.bf16.mxu0 0
    %3977 = vmatpush1.bf16.msra.mxu0 0
    %3978 = vmatprep.subr.bf16.mxu0 0
    %3979 = vmatpush1.bf16.msra.mxu0 0
    %3980 = vmatprep.subr.bf16.mxu0 0
    %3981 = vmatpush1.bf16.msra.mxu0 0
    %3982 = vmatprep.subr.bf16.mxu0 0
    %3983 = vmatpush1.bf16.msra.mxu0 0
    %3984 = vmatprep.subr.bf16.mxu0 0
    %3985 = vmatpush1.bf16.msra.mxu0 0
    %3986 = vmatprep.subr.bf16.mxu0 0
    %3987 = vmatpush1.bf16.msra.mxu0 0
    %3988 = vmatprep.subr.bf16.mxu0 0
    %3989 = vmatpush1.bf16.msra.mxu0 0
    %3990 = vmatprep.mubr.bf16.mxu0 0
    %3991 = vmatmul.mubr.bf16.gmra.mrb[0].mxu0 %v3953
    %v3992 = vpop.f32.mrb[0].mxu0
    %v3993 = vadd.f32 0.0, %v3992
    %v3994 = vpop.f32.mrb[0].mxu0
    %v3995 = vpop.f32.mrb[0].mxu0
    %v3996 = vpop.f32.mrb[0].mxu0
    %3997 = vdwg.mxu0
    %3999 = vrot.lane.b32.xlu0 %v3993, 8
    %v4000 = vpop.permute.xlu0 %3999
    %4002 = vst.msk [vmem:[#allocation2 + $0x8] sm:$0xff] %vm3428, %v4000
    %v4003 = vmul.f32 %v1505, %v3431
    %v4004 = vmul.f32 %v1507, %v3435
    %v4005 = vsub.f32 %v4003, %v4004
    %v4006 = vmul.f32 %v1505, %v3435
    %v4007 = vmul.f32 %v1507, %v3431
    %v4008 = vadd.f32 %v4006, %v4007
    %4010 = vrot.lane.b32.xlu0 %v4005, 120
    %v4011 = vpop.permute.xlu0 %4010
    %4014 = vrot.lane.b32.xlu0 %v4008, 124
    %v4015 = vpop.permute.xlu0 %4014
    %v4017 = vsel %vm868, %v4011, %v4015
    %4018 = vrot.lane.b32.xlu0 %v2006, 112
    %v4019 = vpop.permute.xlu0 %4018
    %4022 = vrot.lane.b32.xlu0 %v4017, 8
    %v4023 = vpop.permute.xlu0 %4022
    %v4025 = vsel %vm871, %v4019, %v4023
    %v4026 = vpack.c.bf16 %v4025, %v4025
    %4027 = vrot.lane.b32.xlu0 %v2640, 112
    %v4028 = vpop.permute.xlu0 %4027
    %v4030 = vsel %vm871, %v4028, %v3754
    %v4031 = vpack.c.bf16 %v4030, %v4030
    %v4033 = vsel %vm1419, %v4026, 0
    %v4036 = vsel %vm1419, %v4031, 0
    %4038 = vmatprep.subr.bf16.mxu0 0
    %4039 = vmatpush1.bf16.xpose.msra.mxu0 %v4036
    %4040 = vmatprep.subr.bf16.mxu0 0
    %4041 = vmatpush1.bf16.xpose.msra.mxu0 0
    %4042 = vmatprep.subr.bf16.mxu0 0
    %4043 = vmatpush1.bf16.xpose.msra.mxu0 0
    %4044 = vmatprep.subr.bf16.mxu0 0
    %4045 = vmatpush1.bf16.xpose.msra.mxu0 0
    %4046 = vmatprep.subr.bf16.mxu0 0
    %4047 = vmatpush1.bf16.xpose.msra.mxu0 0
    %4048 = vmatprep.subr.bf16.mxu0 0
    %4049 = vmatpush1.bf16.xpose.msra.mxu0 0
    %4050 = vmatprep.subr.bf16.mxu0 0
    %4051 = vmatpush1.bf16.xpose.msra.mxu0 0
    %4052 = vmatprep.subr.bf16.mxu0 0
    %4053 = vmatpush1.bf16.xpose.msra.mxu0 0
    %4054 = vmatprep.subr.bf16.mxu0 0
    %4055 = vmatpush1.bf16.xpose.msra.mxu0 0
    %4056 = vmatprep.subr.bf16.mxu0 0
    %4057 = vmatpush1.bf16.xpose.msra.mxu0 0
    %4058 = vmatprep.subr.bf16.mxu0 0
    %4059 = vmatpush1.bf16.xpose.msra.mxu0 0
    %4060 = vmatprep.subr.bf16.mxu0 0
    %4061 = vmatpush1.bf16.xpose.msra.mxu0 0
    %4062 = vmatprep.subr.bf16.mxu0 0
    %4063 = vmatpush1.bf16.xpose.msra.mxu0 0
    %4064 = vmatprep.subr.bf16.mxu0 0
    %4065 = vmatpush1.bf16.xpose.msra.mxu0 0
    %4066 = vmatprep.subr.bf16.mxu0 0
    %4067 = vmatpush1.bf16.xpose.msra.mxu0 0
    %4068 = vmatprep.subr.bf16.mxu0 0
    %4069 = vmatpush1.bf16.xpose.msra.mxu0 0
    %4070 = vmatprep.mubr.bf16.mxu0 0
    %4071 = vmatmul.mubr.bf16.gmra.mrb[0].mxu0 %v4033
    %v4072 = vpop.f32.mrb[0].mxu0
    %v4073 = vadd.f32 0.0, %v4072
    %v4074 = vpop.f32.mrb[0].mxu0
    %v4075 = vpop.f32.mrb[0].mxu0
    %v4076 = vpop.f32.mrb[0].mxu0
    %4077 = vdwg.mxu0
    %v4078 = vsel %vm871, %v4073, -inf
    %4079 = vmax.xlane.f32.xlu0 %v4078
    %v4080 = vpop.xlane.xlu0 %4079
    %v4081 = vsub.f32 %v4073, %v4080
    %v4082 = vmul.f32 %v4081, 1.442695
    %v4083 = vpow.pop %v4082
    %v4084 = vsel %vm871, %v4083, 0.0
    %4085 = vadd.xlane.f32.xlu0 %v4084
    %v4086 = vpop.xlane.xlu0 %4085
    %v4087 = vrcp.pop %v4086
    %v4088 = vmul.f32 %v4083, %v4087
    %v4089 = vpack.c.bf16 %v4088, %v4088
    %4090 = vrot.lane.b32.xlu0 %v3816, 112
    %v4091 = vpop.permute.xlu0 %4090
    %v4093 = vsel %vm871, %v4089, 0
    %v4096 = vsel %vm3237, %v4091, 0
    %4098 = vmatprep.subr.bf16.mxu0 0
    %4099 = vmatpush1.bf16.msra.mxu0 %v4096
    %4100 = vmatprep.subr.bf16.mxu0 0
    %4101 = vmatpush1.bf16.msra.mxu0 0
    %4102 = vmatprep.subr.bf16.mxu0 0
    %4103 = vmatpush1.bf16.msra.mxu0 0
    %4104 = vmatprep.subr.bf16.mxu0 0
    %4105 = vmatpush1.bf16.msra.mxu0 0
    %4106 = vmatprep.subr.bf16.mxu0 0
    %4107 = vmatpush1.bf16.msra.mxu0 0
    %4108 = vmatprep.subr.bf16.mxu0 0
    %4109 = vmatpush1.bf16.msra.mxu0 0
    %4110 = vmatprep.subr.bf16.mxu0 0
    %4111 = vmatpush1.bf16.msra.mxu0 0
    %4112 = vmatprep.subr.bf16.mxu0 0
    %4113 = vmatpush1.bf16.msra.mxu0 0
    %4114 = vmatprep.subr.bf16.mxu0 0
    %4115 = vmatpush1.bf16.msra.mxu0 0
    %4116 = vmatprep.subr.bf16.mxu0 0
    %4117 = vmatpush1.bf16.msra.mxu0 0
    %4118 = vmatprep.subr.bf16.mxu0 0
    %4119 = vmatpush1.bf16.msra.mxu0 0
    %4120 = vmatprep.subr.bf16.mxu0 0
    %4121 = vmatpush1.bf16.msra.mxu0 0
    %4122 = vmatprep.subr.bf16.mxu0 0
    %4123 = vmatpush1.bf16.msra.mxu0 0
    %4124 = vmatprep.subr.bf16.mxu0 0
    %4125 = vmatpush1.bf16.msra.mxu0 0
    %4126 = vmatprep.subr.bf16.mxu0 0
    %4127 = vmatpush1.bf16.msra.mxu0 0
    %4128 = vmatprep.subr.bf16.mxu0 0
    %4129 = vmatpush1.bf16.msra.mxu0 0
    %4130 = vmatprep.mubr.bf16.mxu0 0
    %4131 = vmatmul.mubr.bf16.gmra.mrb[0].mxu0 %v4093
    %v4132 = vpop.f32.mrb[0].mxu0
    %v4133 = vadd.f32 0.0, %v4132
    %v4134 = vpop.f32.mrb[0].mxu0
    %v4135 = vpop.f32.mrb[0].mxu0
    %v4136 = vpop.f32.mrb[0].mxu0
    %4137 = vdwg.mxu0
    %4139 = vrot.lane.b32.xlu0 %v4133, 16
    %v4140 = vpop.permute.xlu0 %4139
    %4142 = vst.msk [vmem:[#allocation2 + $0x8] sm:$0xff] %vm3575, %v4140
    %v4143 = vmul.f32 %v1505, %v3578
    %v4144 = vmul.f32 %v1507, %v3582
    %v4145 = vsub.f32 %v4143, %v4144
    %v4146 = vmul.f32 %v1505, %v3582
    %v4147 = vmul.f32 %v1507, %v3578
    %v4148 = vadd.f32 %v4146, %v4147
    %4150 = vrot.lane.b32.xlu0 %v4145, 116
    %v4151 = vpop.permute.xlu0 %4150
    %4154 = vrot.lane.b32.xlu0 %v4148, 120
    %v4155 = vpop.permute.xlu0 %4154
    %v4157 = vsel %vm868, %v4151, %v4155
    %4158 = vrot.lane.b32.xlu0 %v2006, 104
    %v4159 = vpop.permute.xlu0 %4158
    %4162 = vrot.lane.b32.xlu0 %v4157, 8
    %v4163 = vpop.permute.xlu0 %4162
    %v4165 = vsel %vm871, %v4159, %v4163
    %v4166 = vpack.c.bf16 %v4165, %v4165
    %4167 = vrot.lane.b32.xlu0 %v2640, 104
    %v4168 = vpop.permute.xlu0 %4167
    %v4170 = vsel %vm871, %v4168, %v3754
    %v4171 = vpack.c.bf16 %v4170, %v4170
    %v4173 = vsel %vm1419, %v4166, 0
    %v4176 = vsel %vm1419, %v4171, 0
    %4178 = vmatprep.subr.bf16.mxu0 0
    %4179 = vmatpush1.bf16.xpose.msra.mxu0 %v4176
    %4180 = vmatprep.subr.bf16.mxu0 0
    %4181 = vmatpush1.bf16.xpose.msra.mxu0 0
    %4182 = vmatprep.subr.bf16.mxu0 0
    %4183 = vmatpush1.bf16.xpose.msra.mxu0 0
    %4184 = vmatprep.subr.bf16.mxu0 0
    %4185 = vmatpush1.bf16.xpose.msra.mxu0 0
    %4186 = vmatprep.subr.bf16.mxu0 0
    %4187 = vmatpush1.bf16.xpose.msra.mxu0 0
    %4188 = vmatprep.subr.bf16.mxu0 0
    %4189 = vmatpush1.bf16.xpose.msra.mxu0 0
    %4190 = vmatprep.subr.bf16.mxu0 0
    %4191 = vmatpush1.bf16.xpose.msra.mxu0 0
    %4192 = vmatprep.subr.bf16.mxu0 0
    %4193 = vmatpush1.bf16.xpose.msra.mxu0 0
    %4194 = vmatprep.subr.bf16.mxu0 0
    %4195 = vmatpush1.bf16.xpose.msra.mxu0 0
    %4196 = vmatprep.subr.bf16.mxu0 0
    %4197 = vmatpush1.bf16.xpose.msra.mxu0 0
    %4198 = vmatprep.subr.bf16.mxu0 0
    %4199 = vmatpush1.bf16.xpose.msra.mxu0 0
    %4200 = vmatprep.subr.bf16.mxu0 0
    %4201 = vmatpush1.bf16.xpose.msra.mxu0 0
    %4202 = vmatprep.subr.bf16.mxu0 0
    %4203 = vmatpush1.bf16.xpose.msra.mxu0 0
    %4204 = vmatprep.subr.bf16.mxu0 0
    %4205 = vmatpush1.bf16.xpose.msra.mxu0 0
    %4206 = vmatprep.subr.bf16.mxu0 0
    %4207 = vmatpush1.bf16.xpose.msra.mxu0 0
    %4208 = vmatprep.subr.bf16.mxu0 0
    %4209 = vmatpush1.bf16.xpose.msra.mxu0 0
    %4210 = vmatprep.mubr.bf16.mxu0 0
    %4211 = vmatmul.mubr.bf16.gmra.mrb[0].mxu0 %v4173
    %v4212 = vpop.f32.mrb[0].mxu0
    %v4213 = vadd.f32 0.0, %v4212
    %v4214 = vpop.f32.mrb[0].mxu0
    %v4215 = vpop.f32.mrb[0].mxu0
    %v4216 = vpop.f32.mrb[0].mxu0
    %4217 = vdwg.mxu0
    %v4218 = vsel %vm871, %v4213, -inf
    %4219 = vmax.xlane.f32.xlu0 %v4218
    %v4220 = vpop.xlane.xlu0 %4219
    %v4221 = vsub.f32 %v4213, %v4220
    %v4222 = vmul.f32 %v4221, 1.442695
    %v4223 = vpow.pop %v4222
    %v4224 = vsel %vm871, %v4223, 0.0
    %4225 = vadd.xlane.f32.xlu0 %v4224
    %v4226 = vpop.xlane.xlu0 %4225
    %v4227 = vrcp.pop %v4226
    %v4228 = vmul.f32 %v4223, %v4227
    %v4229 = vpack.c.bf16 %v4228, %v4228
    %4230 = vrot.lane.b32.xlu0 %v3816, 104
    %v4231 = vpop.permute.xlu0 %4230
    %v4233 = vsel %vm871, %v4229, 0
    %v4236 = vsel %vm3237, %v4231, 0
    %4238 = vmatprep.subr.bf16.mxu0 0
    %4239 = vmatpush1.bf16.msra.mxu0 %v4236
    %4240 = vmatprep.subr.bf16.mxu0 0
    %4241 = vmatpush1.bf16.msra.mxu0 0
    %4242 = vmatprep.subr.bf16.mxu0 0
    %4243 = vmatpush1.bf16.msra.mxu0 0
    %4244 = vmatprep.subr.bf16.mxu0 0
    %4245 = vmatpush1.bf16.msra.mxu0 0
    %4246 = vmatprep.subr.bf16.mxu0 0
    %4247 = vmatpush1.bf16.msra.mxu0 0
    %4248 = vmatprep.subr.bf16.mxu0 0
    %4249 = vmatpush1.bf16.msra.mxu0 0
    %4250 = vmatprep.subr.bf16.mxu0 0
    %4251 = vmatpush1.bf16.msra.mxu0 0
    %4252 = vmatprep.subr.bf16.mxu0 0
    %4253 = vmatpush1.bf16.msra.mxu0 0
    %4254 = vmatprep.subr.bf16.mxu0 0
    %4255 = vmatpush1.bf16.msra.mxu0 0
    %4256 = vmatprep.subr.bf16.mxu0 0
    %4257 = vmatpush1.bf16.msra.mxu0 0
    %4258 = vmatprep.subr.bf16.mxu0 0
    %4259 = vmatpush1.bf16.msra.mxu0 0
    %4260 = vmatprep.subr.bf16.mxu0 0
    %4261 = vmatpush1.bf16.msra.mxu0 0
    %4262 = vmatprep.subr.bf16.mxu0 0
    %4263 = vmatpush1.bf16.msra.mxu0 0
    %4264 = vmatprep.subr.bf16.mxu0 0
    %4265 = vmatpush1.bf16.msra.mxu0 0
    %4266 = vmatprep.subr.bf16.mxu0 0
    %4267 = vmatpush1.bf16.msra.mxu0 0
    %4268 = vmatprep.subr.bf16.mxu0 0
    %4269 = vmatpush1.bf16.msra.mxu0 0
    %4270 = vmatprep.mubr.bf16.mxu0 0
    %4271 = vmatmul.mubr.bf16.gmra.mrb[0].mxu0 %v4233
    %v4272 = vpop.f32.mrb[0].mxu0
    %v4273 = vadd.f32 0.0, %v4272
    %v4274 = vpop.f32.mrb[0].mxu0
    %v4275 = vpop.f32.mrb[0].mxu0
    %v4276 = vpop.f32.mrb[0].mxu0
    %4277 = vdwg.mxu0
    %4279 = vrot.lane.b32.xlu0 %v4273, 24
    %v4280 = vpop.permute.xlu0 %4279
    %4282 = vst.msk [vmem:[#allocation2 + $0x8] sm:$0xff] %vm3722, %v4280
    %v4283 = vld [vmem:[#allocation2] sm:$0xff]
    %v4284 = vld [vmem:[#allocation2 + $0x8] sm:$0xff]
    %v4285 = vpack.c.bf16 %v4284, %v4283
    %v4286 = vld [vmem:[#allocation13] sm:$0xff]
    %v4287 = vld [vmem:[#allocation13 + $0x8] sm:$0xff]
    %v4288 = vld [vmem:[#allocation13 + $0x10] sm:$0xff]
    %v4289 = vld [vmem:[#allocation13 + $0x18] sm:$0xff]
    %v4290 = vld [vmem:[#allocation14] sm:$0x3]
    %v4292 = vlaneseq
    %v4293 = vshrl.u32 %v4292, 7
    %v4294 = vsub.s32 0, %v4293
    %v4295 = vrot.slane %v4290, %v4294
    %v4296 = vlaneseq
    %v4297 = vshrl.u32 %v4296, 7
    %v4298 = vsub.s32 1, %v4297
    %v4299 = vrot.slane %v4290, %v4298
    %v4306 = vunpack.c.l.b16 %v4286
    %v4307 = vunpack.c.h.b16 %v4286
    %v4308 = vunpack.c.l.b16 %v4287
    %v4309 = vunpack.c.h.b16 %v4287
    %v4310 = vunpack.c.l.b16 %v4288
    %v4311 = vunpack.c.h.b16 %v4288
    %v4312 = vunpack.c.l.b16 %v4289
    %v4313 = vunpack.c.h.b16 %v4289
    %v4314 = vpack.c.b16 %v4308, %v4306
    %v4315 = vpack.c.b16 %v4309, %v4307
    %v4316 = vpack.c.b16 %v4312, %v4310
    %v4317 = vpack.c.b16 %v4313, %v4311
    %v4323 = vsel %vm241, %v4285, 0
    %4325 = vmatprep.subr.bf16.mxu0 %v4315
    %4326 = vmatpush1.bf16.msra.mxu0 %v4314
    %4327 = vmatprep.subr.bf16.mxu0 %v4317
    %4328 = vmatpush1.bf16.msra.mxu0 %v4316
    %4329 = vmatprep.subr.bf16.mxu0 0
    %4330 = vmatpush1.bf16.msra.mxu0 0
    %4331 = vmatprep.subr.bf16.mxu0 0
    %4332 = vmatpush1.bf16.msra.mxu0 0
    %4333 = vmatprep.subr.bf16.mxu0 0
    %4334 = vmatpush1.bf16.msra.mxu0 0
    %4335 = vmatprep.subr.bf16.mxu0 0
    %4336 = vmatpush1.bf16.msra.mxu0 0
    %4337 = vmatprep.subr.bf16.mxu0 0
    %4338 = vmatpush1.bf16.msra.mxu0 0
    %4339 = vmatprep.subr.bf16.mxu0 0
    %4340 = vmatpush1.bf16.msra.mxu0 0
    %4341 = vmatprep.subr.bf16.mxu0 0
    %4342 = vmatpush1.bf16.msra.mxu0 0
    %4343 = vmatprep.subr.bf16.mxu0 0
    %4344 = vmatpush1.bf16.msra.mxu0 0
    %4345 = vmatprep.subr.bf16.mxu0 0
    %4346 = vmatpush1.bf16.msra.mxu0 0
    %4347 = vmatprep.subr.bf16.mxu0 0
    %4348 = vmatpush1.bf16.msra.mxu0 0
    %4349 = vmatprep.subr.bf16.mxu0 0
    %4350 = vmatpush1.bf16.msra.mxu0 0
    %4351 = vmatprep.subr.bf16.mxu0 0
    %4352 = vmatpush1.bf16.msra.mxu0 0
    %4353 = vmatprep.subr.bf16.mxu0 0
    %4354 = vmatpush1.bf16.msra.mxu0 0
    %4355 = vmatprep.subr.bf16.mxu0 0
    %4356 = vmatpush1.bf16.msra.mxu0 0
    %4357 = vmatprep.mubr.bf16.mxu0 0
    %4358 = vmatmul.mubr.bf16.gmra.mrb[0].mxu0 %v4323
    %v4359 = vpop.f32.mrb[0].mxu0
    %v4360 = vadd.f32 %v4295, %v4359
    %v4361 = vpop.f32.mrb[0].mxu0
    %v4362 = vadd.f32 %v4299, %v4361
    %v4363 = vpop.f32.mrb[0].mxu0
    %v4364 = vadd.f32 %v4295, %v4363
    %v4365 = vpop.f32.mrb[0].mxu0
    %v4366 = vadd.f32 %v4299, %v4365
    %4367 = vdwg.mxu0
    %s4368 = sld [smem:[#allocation3 + $0xa]]
    %s4369 = sld [smem:[#allocation3 + $0xb]]
    %v4370 = vand.u32 2147483647, %v4360
    %vm4371 = vcmp.le.f32.partialorder %v4370, 0.7853982
    %vm4372 = vcmp.lt.s32.totalorder %v4360, 0
    %v4373 = vand.u32 %v4360, 2139095040
    %v4374 = vshrl.u32 %v4373, 23
    %v4375 = vsub.s32 %v4374, 127
    %v4376 = vand.u32 2147483647, %v4360
    %v4377 = vand.u32 %v4376, 8388607
    %v4378 = vor.u32 %v4377, 8388608
    %v4379 = vsub.s32 0, %v4378
    %v4380 = vadd.s32 %v4375, 1
    %vm4381 = vcmp.gt.s32.totalorder %v4380, 0
    %v4382 = vsel %vm4381, %v4380, 0
    %v4383 = vshrl.u32 %v4382, 5
    %v4384 = vand.u32 %v4382, 31
    %v4385 = vsub.s32 32, %v4384
    %v4386 = vshrl.u32 683565275, %v4385
    %v4387 = vshll.u32 683565275, %v4384
    %v4388 = vshrl.u32 2475754826, %v4385
    %v4389 = vor.u32 %v4387, %v4388
    %v4390 = vshll.u32 2475754826, %v4384
    %v4391 = vshrl.u32 2131351028, %v4385
    %v4392 = vor.u32 %v4390, %v4391
    %v4393 = vshll.u32 2131351028, %v4384
    %v4394 = vshrl.u32 2102212464, %v4385
    %v4395 = vor.u32 %v4393, %v4394
    %v4396 = vshll.u32 2102212464, %v4384
    %v4397 = vshrl.u32 920167782, %v4385
    %v4398 = vor.u32 %v4396, %v4397
    %v4399 = vshll.u32 920167782, %v4384
    %v4400 = vshrl.u32 1326507024, %v4385
    %v4401 = vor.u32 %v4399, %v4400
    %vm4402 = vcmp.lt.s32.totalorder %v4383, 1
    %vm4403 = vcmp.lt.s32.totalorder %v4383, 2
    %vm4404 = vcmp.lt.s32.totalorder %v4383, 3
    %vm4405 = vcmp.lt.s32.totalorder %v4383, 4
    %v4406 = vsel %vm4402, %v4386, %v4389
    %v4407 = vsel %vm4405, %v4395, 2102212464
    %v4408 = vsel %vm4404, %v4392, %v4407
    %v4409 = vsel %vm4403, %v4406, %v4408
    %v4410 = vsel %vm4402, %v4389, %v4392
    %v4411 = vsel %vm4405, %v4398, 920167782
    %v4412 = vsel %vm4404, %v4395, %v4411
    %v4413 = vsel %vm4403, %v4410, %v4412
    %v4414 = vsel %vm4402, %v4392, %v4395
    %v4415 = vsel %vm4405, %v4401, 1326507024
    %v4416 = vsel %vm4404, %v4398, %v4415
    %v4417 = vsel %vm4403, %v4414, %v4416
    %v4418 = vshll.u32 %v4378, 8
    %v4419 = vmul.u32.u64.compose %v4418, %v4417
    %v4420 = vextract.low.u32 %v4419
    %v4421 = vextract.high.u32 %v4419
    %v4422 = vmul.u32.u64.compose %v4418, %v4413
    %v4423 = vextract.low.u32 %v4422
    %v4424 = vextract.high.u32 %v4422
    %v4425 = vmul.u32 %v4418, %v4409
    %v4426 = vadd.s32 %v4421, %v4423
    %vm4427 = vc.u32 %v4421, %v4423
    %v4428 = vadd.s32 %v4424, 1
    %v4429 = vsel %vm4427, %v4428, %v4424
    %v4430 = vadd.s32 %v4425, %v4429
    %v4431 = vadd.s32 %v4430, 536870912
    %v4432 = vshrl.u32 %v4431, 30
    %v4433 = vshll.u32 %v4432, 30
    %v4434 = vsub.s32 %v4430, %v4433
    %vm4435 = vcmp.lt.s32.totalorder %v4434, 0
    %v4436 = vsub.s32 0, %v4434
    %v4437 = vsel %vm4435, %v4436, %v4434
    %v4438 = vclz %v4437
    %v4439 = vsub.s32 %v4438, 2
    %vm4440 = vcmp.gt.s32.totalorder 0, %v4439
    %v4441 = vsel %vm4440, 0, %v4439
    %v4442 = vsub.s32 32, %v4441
    %v4443 = vshll.u32 %v4434, %v4441
    %v4444 = vshrl.u32 %v4426, %v4442
    %v4445 = vor.u32 %v4443, %v4444
    %v4446 = vsub.s32 4294967266, %v4441
    %v4447 = vadd.s32 %v4446, 127
    %v4448 = vshll.u32 %v4447, 23
    %v4449 = vor.u32 4788187, %v4448
    %v4450 = vand.u32 2147483647, %v4449
    %v4452 = vcvt.s32.f32 %v4445
    %v4453 = vmul.f32 %v4452, %v4450
    %v4454 = vxor.u32 %v4453, 2147483648
    %v4455 = vsel %vm4372, %v4454, %v4453
    %v4456 = vsub.s32 4, %v4432
    %v4457 = vsel %vm4372, %v4456, %v4432
    %v4458 = vsel %vm4371, %v4360, %v4455
    %v4459 = vsel %vm4371, 0, %v4457
    %v4460 = vcosq.f32.pop %v4458
    %v4461 = vsinq.f32.pop %v4458
    %vm4462 = vweird.f32 %v4360
    %v4463 = vand.u32 %v4459, 3
    %vm4464 = vcmp.lt.s32.totalorder %v4463, 2
    %vm4465 = vcmp.eq.s32.totalorder %v4463, 0
    %v4466 = vxor.u32 %v4461, 2147483648
    %v4467 = vsel %vm4465, %v4460, %v4466
    %vm4468 = vcmp.eq.s32.totalorder %v4463, 2
    %v4469 = vxor.u32 %v4460, 2147483648
    %v4470 = vsel %vm4468, %v4469, %v4461
    %v4471 = vsel %vm4464, %v4467, %v4470
    %v4472 = vsel %vm4462, nan, %v4471
    %v4473 = vand.u32 2147483647, %v4364
    %vm4474 = vcmp.le.f32.partialorder %v4473, 0.7853982
    %vm4475 = vcmp.lt.s32.totalorder %v4364, 0
    %v4476 = vand.u32 %v4364, 2139095040
    %v4477 = vshrl.u32 %v4476, 23
    %v4478 = vsub.s32 %v4477, 127
    %v4479 = vand.u32 2147483647, %v4364
    %v4480 = vand.u32 %v4479, 8388607
    %v4481 = vor.u32 %v4480, 8388608
    %v4482 = vsub.s32 0, %v4481
    %v4483 = vadd.s32 %v4478, 1
    %vm4484 = vcmp.gt.s32.totalorder %v4483, 0
    %v4485 = vsel %vm4484, %v4483, 0
    %v4486 = vshrl.u32 %v4485, 5
    %v4487 = vand.u32 %v4485, 31
    %v4488 = vsub.s32 32, %v4487
    %v4489 = vshrl.u32 683565275, %v4488
    %v4490 = vshll.u32 683565275, %v4487
    %v4491 = vshrl.u32 2475754826, %v4488
    %v4492 = vor.u32 %v4490, %v4491
    %v4493 = vshll.u32 2475754826, %v4487
    %v4494 = vshrl.u32 2131351028, %v4488
    %v4495 = vor.u32 %v4493, %v4494
    %v4496 = vshll.u32 2131351028, %v4487
    %v4497 = vshrl.u32 2102212464, %v4488
    %v4498 = vor.u32 %v4496, %v4497
    %v4499 = vshll.u32 2102212464, %v4487
    %v4500 = vshrl.u32 920167782, %v4488
    %v4501 = vor.u32 %v4499, %v4500
    %v4502 = vshll.u32 920167782, %v4487
    %v4503 = vshrl.u32 1326507024, %v4488
    %v4504 = vor.u32 %v4502, %v4503
    %vm4505 = vcmp.lt.s32.totalorder %v4486, 1
    %vm4506 = vcmp.lt.s32.totalorder %v4486, 2
    %vm4507 = vcmp.lt.s32.totalorder %v4486, 3
    %vm4508 = vcmp.lt.s32.totalorder %v4486, 4
    %v4509 = vsel %vm4505, %v4489, %v4492
    %v4510 = vsel %vm4508, %v4498, 2102212464
    %v4511 = vsel %vm4507, %v4495, %v4510
    %v4512 = vsel %vm4506, %v4509, %v4511
    %v4513 = vsel %vm4505, %v4492, %v4495
    %v4514 = vsel %vm4508, %v4501, 920167782
    %v4515 = vsel %vm4507, %v4498, %v4514
    %v4516 = vsel %vm4506, %v4513, %v4515
    %v4517 = vsel %vm4505, %v4495, %v4498
    %v4518 = vsel %vm4508, %v4504, 1326507024
    %v4519 = vsel %vm4507, %v4501, %v4518
    %v4520 = vsel %vm4506, %v4517, %v4519
    %v4521 = vshll.u32 %v4481, 8
    %v4522 = vmul.u32.u64.compose %v4521, %v4520
    %v4523 = vextract.low.u32 %v4522
    %v4524 = vextract.high.u32 %v4522
    %v4525 = vmul.u32.u64.compose %v4521, %v4516
    %v4526 = vextract.low.u32 %v4525
    %v4527 = vextract.high.u32 %v4525
    %v4528 = vmul.u32 %v4521, %v4512
    %v4529 = vadd.s32 %v4524, %v4526
    %vm4530 = vc.u32 %v4524, %v4526
    %v4531 = vadd.s32 %v4527, 1
    %v4532 = vsel %vm4530, %v4531, %v4527
    %v4533 = vadd.s32 %v4528, %v4532
    %v4534 = vadd.s32 %v4533, 536870912
    %v4535 = vshrl.u32 %v4534, 30
    %v4536 = vshll.u32 %v4535, 30
    %v4537 = vsub.s32 %v4533, %v4536
    %vm4538 = vcmp.lt.s32.totalorder %v4537, 0
    %v4539 = vsub.s32 0, %v4537
    %v4540 = vsel %vm4538, %v4539, %v4537
    %v4541 = vclz %v4540
    %v4542 = vsub.s32 %v4541, 2
    %vm4543 = vcmp.gt.s32.totalorder 0, %v4542
    %v4544 = vsel %vm4543, 0, %v4542
    %v4545 = vsub.s32 32, %v4544
    %v4546 = vshll.u32 %v4537, %v4544
    %v4547 = vshrl.u32 %v4529, %v4545
    %v4548 = vor.u32 %v4546, %v4547
    %v4549 = vsub.s32 4294967266, %v4544
    %v4550 = vadd.s32 %v4549, 127
    %v4551 = vshll.u32 %v4550, 23
    %v4552 = vor.u32 4788187, %v4551
    %v4553 = vand.u32 2147483647, %v4552
    %v4555 = vcvt.s32.f32 %v4548
    %v4556 = vmul.f32 %v4555, %v4553
    %v4557 = vxor.u32 %v4556, 2147483648
    %v4558 = vsel %vm4475, %v4557, %v4556
    %v4559 = vsub.s32 4, %v4535
    %v4560 = vsel %vm4475, %v4559, %v4535
    %v4561 = vsel %vm4474, %v4364, %v4558
    %v4562 = vsel %vm4474, 0, %v4560
    %v4563 = vcosq.f32.pop %v4561
    %v4564 = vsinq.f32.pop %v4561
    %vm4565 = vweird.f32 %v4364
    %v4566 = vand.u32 %v4562, 3
    %vm4567 = vcmp.lt.s32.totalorder %v4566, 2
    %vm4568 = vcmp.eq.s32.totalorder %v4566, 0
    %v4569 = vxor.u32 %v4564, 2147483648
    %v4570 = vsel %vm4568, %v4563, %v4569
    %vm4571 = vcmp.eq.s32.totalorder %v4566, 2
    %v4572 = vxor.u32 %v4563, 2147483648
    %v4573 = vsel %vm4571, %v4572, %v4564
    %v4574 = vsel %vm4567, %v4570, %v4573
    %v4575 = vsel %vm4565, nan, %v4574
    %v4576 = vstv %s4368
    %v4577 = vmul.f32 %v4576, %v4472
    %v4578 = vmul.f32 %v4576, %v4575
    %v4579 = vand.u32 2147483647, %v4360
    %vm4580 = vcmp.le.f32.partialorder %v4579, 0.7853982
    %vm4581 = vcmp.lt.s32.totalorder %v4360, 0
    %v4582 = vand.u32 %v4360, 2139095040
    %v4583 = vshrl.u32 %v4582, 23
    %v4584 = vsub.s32 %v4583, 127
    %v4585 = vand.u32 2147483647, %v4360
    %v4586 = vand.u32 %v4585, 8388607
    %v4587 = vor.u32 %v4586, 8388608
    %v4588 = vsub.s32 0, %v4587
    %v4589 = vadd.s32 %v4584, 1
    %vm4590 = vcmp.gt.s32.totalorder %v4589, 0
    %v4591 = vsel %vm4590, %v4589, 0
    %v4592 = vshrl.u32 %v4591, 5
    %v4593 = vand.u32 %v4591, 31
    %v4594 = vsub.s32 32, %v4593
    %v4595 = vshrl.u32 683565275, %v4594
    %v4596 = vshll.u32 683565275, %v4593
    %v4597 = vshrl.u32 2475754826, %v4594
    %v4598 = vor.u32 %v4596, %v4597
    %v4599 = vshll.u32 2475754826, %v4593
    %v4600 = vshrl.u32 2131351028, %v4594
    %v4601 = vor.u32 %v4599, %v4600
    %v4602 = vshll.u32 2131351028, %v4593
    %v4603 = vshrl.u32 2102212464, %v4594
    %v4604 = vor.u32 %v4602, %v4603
    %v4605 = vshll.u32 2102212464, %v4593
    %v4606 = vshrl.u32 920167782, %v4594
    %v4607 = vor.u32 %v4605, %v4606
    %v4608 = vshll.u32 920167782, %v4593
    %v4609 = vshrl.u32 1326507024, %v4594
    %v4610 = vor.u32 %v4608, %v4609
    %vm4611 = vcmp.lt.s32.totalorder %v4592, 1
    %vm4612 = vcmp.lt.s32.totalorder %v4592, 2
    %vm4613 = vcmp.lt.s32.totalorder %v4592, 3
    %vm4614 = vcmp.lt.s32.totalorder %v4592, 4
    %v4615 = vsel %vm4611, %v4595, %v4598
    %v4616 = vsel %vm4614, %v4604, 2102212464
    %v4617 = vsel %vm4613, %v4601, %v4616
    %v4618 = vsel %vm4612, %v4615, %v4617
    %v4619 = vsel %vm4611, %v4598, %v4601
    %v4620 = vsel %vm4614, %v4607, 920167782
    %v4621 = vsel %vm4613, %v4604, %v4620
    %v4622 = vsel %vm4612, %v4619, %v4621
    %v4623 = vsel %vm4611, %v4601, %v4604
    %v4624 = vsel %vm4614, %v4610, 1326507024
    %v4625 = vsel %vm4613, %v4607, %v4624
    %v4626 = vsel %vm4612, %v4623, %v4625
    %v4627 = vshll.u32 %v4587, 8
    %v4628 = vmul.u32.u64.compose %v4627, %v4626
    %v4629 = vextract.low.u32 %v4628
    %v4630 = vextract.high.u32 %v4628
    %v4631 = vmul.u32.u64.compose %v4627, %v4622
    %v4632 = vextract.low.u32 %v4631
    %v4633 = vextract.high.u32 %v4631
    %v4634 = vmul.u32 %v4627, %v4618
    %v4635 = vadd.s32 %v4630, %v4632
    %vm4636 = vc.u32 %v4630, %v4632
    %v4637 = vadd.s32 %v4633, 1
    %v4638 = vsel %vm4636, %v4637, %v4633
    %v4639 = vadd.s32 %v4634, %v4638
    %v4640 = vadd.s32 %v4639, 536870912
    %v4641 = vshrl.u32 %v4640, 30
    %v4642 = vshll.u32 %v4641, 30
    %v4643 = vsub.s32 %v4639, %v4642
    %vm4644 = vcmp.lt.s32.totalorder %v4643, 0
    %v4645 = vsub.s32 0, %v4643
    %v4646 = vsel %vm4644, %v4645, %v4643
    %v4647 = vclz %v4646
    %v4648 = vsub.s32 %v4647, 2
    %vm4649 = vcmp.gt.s32.totalorder 0, %v4648
    %v4650 = vsel %vm4649, 0, %v4648
    %v4651 = vsub.s32 32, %v4650
    %v4652 = vshll.u32 %v4643, %v4650
    %v4653 = vshrl.u32 %v4635, %v4651
    %v4654 = vor.u32 %v4652, %v4653
    %v4655 = vsub.s32 4294967266, %v4650
    %v4656 = vadd.s32 %v4655, 127
    %v4657 = vshll.u32 %v4656, 23
    %v4658 = vor.u32 4788187, %v4657
    %v4659 = vand.u32 2147483647, %v4658
    %v4661 = vcvt.s32.f32 %v4654
    %v4662 = vmul.f32 %v4661, %v4659
    %v4663 = vxor.u32 %v4662, 2147483648
    %v4664 = vsel %vm4581, %v4663, %v4662
    %v4665 = vsub.s32 4, %v4641
    %v4666 = vsel %vm4581, %v4665, %v4641
    %v4667 = vsel %vm4580, %v4360, %v4664
    %v4668 = vsel %vm4580, 0, %v4666
    %v4669 = vcosq.f32.pop %v4667
    %v4670 = vsinq.f32.pop %v4667
    %vm4671 = vweird.f32 %v4360
    %v4672 = vadd.s32 %v4668, 3
    %v4673 = vand.u32 %v4672, 3
    %vm4674 = vcmp.lt.s32.totalorder %v4673, 2
    %vm4675 = vcmp.eq.s32.totalorder %v4673, 0
    %v4676 = vxor.u32 %v4670, 2147483648
    %v4677 = vsel %vm4675, %v4669, %v4676
    %vm4678 = vcmp.eq.s32.totalorder %v4673, 2
    %v4679 = vxor.u32 %v4669, 2147483648
    %v4680 = vsel %vm4678, %v4679, %v4670
    %v4681 = vsel %vm4674, %v4677, %v4680
    %v4682 = vsel %vm4671, nan, %v4681
    %v4683 = vand.u32 2147483647, %v4364
    %vm4684 = vcmp.le.f32.partialorder %v4683, 0.7853982
    %vm4685 = vcmp.lt.s32.totalorder %v4364, 0
    %v4686 = vand.u32 %v4364, 2139095040
    %v4687 = vshrl.u32 %v4686, 23
    %v4688 = vsub.s32 %v4687, 127
    %v4689 = vand.u32 2147483647, %v4364
    %v4690 = vand.u32 %v4689, 8388607
    %v4691 = vor.u32 %v4690, 8388608
    %v4692 = vsub.s32 0, %v4691
    %v4693 = vadd.s32 %v4688, 1
    %vm4694 = vcmp.gt.s32.totalorder %v4693, 0
    %v4695 = vsel %vm4694, %v4693, 0
    %v4696 = vshrl.u32 %v4695, 5
    %v4697 = vand.u32 %v4695, 31
    %v4698 = vsub.s32 32, %v4697
    %v4699 = vshrl.u32 683565275, %v4698
    %v4700 = vshll.u32 683565275, %v4697
    %v4701 = vshrl.u32 2475754826, %v4698
    %v4702 = vor.u32 %v4700, %v4701
    %v4703 = vshll.u32 2475754826, %v4697
    %v4704 = vshrl.u32 2131351028, %v4698
    %v4705 = vor.u32 %v4703, %v4704
    %v4706 = vshll.u32 2131351028, %v4697
    %v4707 = vshrl.u32 2102212464, %v4698
    %v4708 = vor.u32 %v4706, %v4707
    %v4709 = vshll.u32 2102212464, %v4697
    %v4710 = vshrl.u32 920167782, %v4698
    %v4711 = vor.u32 %v4709, %v4710
    %v4712 = vshll.u32 920167782, %v4697
    %v4713 = vshrl.u32 1326507024, %v4698
    %v4714 = vor.u32 %v4712, %v4713
    %vm4715 = vcmp.lt.s32.totalorder %v4696, 1
    %vm4716 = vcmp.lt.s32.totalorder %v4696, 2
    %vm4717 = vcmp.lt.s32.totalorder %v4696, 3
    %vm4718 = vcmp.lt.s32.totalorder %v4696, 4
    %v4719 = vsel %vm4715, %v4699, %v4702
    %v4720 = vsel %vm4718, %v4708, 2102212464
    %v4721 = vsel %vm4717, %v4705, %v4720
    %v4722 = vsel %vm4716, %v4719, %v4721
    %v4723 = vsel %vm4715, %v4702, %v4705
    %v4724 = vsel %vm4718, %v4711, 920167782
    %v4725 = vsel %vm4717, %v4708, %v4724
    %v4726 = vsel %vm4716, %v4723, %v4725
    %v4727 = vsel %vm4715, %v4705, %v4708
    %v4728 = vsel %vm4718, %v4714, 1326507024
    %v4729 = vsel %vm4717, %v4711, %v4728
    %v4730 = vsel %vm4716, %v4727, %v4729
    %v4731 = vshll.u32 %v4691, 8
    %v4732 = vmul.u32.u64.compose %v4731, %v4730
    %v4733 = vextract.low.u32 %v4732
    %v4734 = vextract.high.u32 %v4732
    %v4735 = vmul.u32.u64.compose %v4731, %v4726
    %v4736 = vextract.low.u32 %v4735
    %v4737 = vextract.high.u32 %v4735
    %v4738 = vmul.u32 %v4731, %v4722
    %v4739 = vadd.s32 %v4734, %v4736
    %vm4740 = vc.u32 %v4734, %v4736
    %v4741 = vadd.s32 %v4737, 1
    %v4742 = vsel %vm4740, %v4741, %v4737
    %v4743 = vadd.s32 %v4738, %v4742
    %v4744 = vadd.s32 %v4743, 536870912
    %v4745 = vshrl.u32 %v4744, 30
    %v4746 = vshll.u32 %v4745, 30
    %v4747 = vsub.s32 %v4743, %v4746
    %vm4748 = vcmp.lt.s32.totalorder %v4747, 0
    %v4749 = vsub.s32 0, %v4747
    %v4750 = vsel %vm4748, %v4749, %v4747
    %v4751 = vclz %v4750
    %v4752 = vsub.s32 %v4751, 2
    %vm4753 = vcmp.gt.s32.totalorder 0, %v4752
    %v4754 = vsel %vm4753, 0, %v4752
    %v4755 = vsub.s32 32, %v4754
    %v4756 = vshll.u32 %v4747, %v4754
    %v4757 = vshrl.u32 %v4739, %v4755
    %v4758 = vor.u32 %v4756, %v4757
    %v4759 = vsub.s32 4294967266, %v4754
    %v4760 = vadd.s32 %v4759, 127
    %v4761 = vshll.u32 %v4760, 23
    %v4762 = vor.u32 4788187, %v4761
    %v4763 = vand.u32 2147483647, %v4762
    %v4765 = vcvt.s32.f32 %v4758
    %v4766 = vmul.f32 %v4765, %v4763
    %v4767 = vxor.u32 %v4766, 2147483648
    %v4768 = vsel %vm4685, %v4767, %v4766
    %v4769 = vsub.s32 4, %v4745
    %v4770 = vsel %vm4685, %v4769, %v4745
    %v4771 = vsel %vm4684, %v4364, %v4768
    %v4772 = vsel %vm4684, 0, %v4770
    %v4773 = vcosq.f32.pop %v4771
    %v4774 = vsinq.f32.pop %v4771
    %vm4775 = vweird.f32 %v4364
    %v4776 = vadd.s32 %v4772, 3
    %v4777 = vand.u32 %v4776, 3
    %vm4778 = vcmp.lt.s32.totalorder %v4777, 2
    %vm4779 = vcmp.eq.s32.totalorder %v4777, 0
    %v4780 = vxor.u32 %v4774, 2147483648
    %v4781 = vsel %vm4779, %v4773, %v4780
    %vm4782 = vcmp.eq.s32.totalorder %v4777, 2
    %v4783 = vxor.u32 %v4773, 2147483648
    %v4784 = vsel %vm4782, %v4783, %v4774
    %v4785 = vsel %vm4778, %v4781, %v4784
    %v4786 = vsel %vm4775, nan, %v4785
    %v4787 = vmul.f32 %v4576, %v4682
    %v4788 = vmul.f32 %v4576, %v4786
    %v4789 = vmul.f32 %v4362, 0.5
    %v4790 = vmul.f32 %v4366, 0.5
    %v4791 = vmul.f32 %v4362, 0.70710677
    %v4792 = vmul.f32 %v4366, 0.70710677
    %vm4793 = vcmp.ge.f32.partialorder %v4791, 0.0
    %vm4794 = vcmp.ge.f32.partialorder %v4792, 0.0
    %v4795 = vsel %vm4793, 1.0, -1.0
    %v4796 = vsel %vm4794, 1.0, -1.0
    %v4797 = vand.u32 2147483647, %v4791
    %v4798 = vand.u32 2147483647, %v4792
    %v4799 = vmul.f32 %v4797, 0.3275911
    %v4800 = vmul.f32 %v4798, 0.3275911
    %v4801 = vadd.f32 %v4799, 1.0
    %v4802 = vadd.f32 %v4800, 1.0
    %v4803 = vrcp.pop %v4801
    %v4804 = vmul.f32 1.0, %v4803
    %v4805 = vrcp.pop %v4802
    %v4806 = vmul.f32 1.0, %v4805
    %v4807 = vmul.f32 %v4804, 1.0614054
    %v4808 = vmul.f32 %v4806, 1.0614054
    %v4809 = vadd.f32 %v4807, -1.4531521
    %v4810 = vadd.f32 %v4808, -1.4531521
    %v4811 = vmul.f32 %v4809, %v4804
    %v4812 = vmul.f32 %v4810, %v4806
    %v4813 = vadd.f32 %v4811, 1.4214138
    %v4814 = vadd.f32 %v4812, 1.4214138
    %v4815 = vmul.f32 %v4813, %v4804
    %v4816 = vmul.f32 %v4814, %v4806
    %v4817 = vadd.f32 %v4815, -0.28449672
    %v4818 = vadd.f32 %v4816, -0.28449672
    %v4819 = vmul.f32 %v4817, %v4804
    %v4820 = vmul.f32 %v4818, %v4806
    %v4821 = vadd.f32 %v4819, 0.2548296
    %v4822 = vadd.f32 %v4820, 0.2548296
    %v4823 = vmul.f32 %v4821, %v4804
    %v4824 = vmul.f32 %v4822, %v4806
    %v4825 = vsub.f32 0.0, %v4797
    %v4826 = vsub.f32 0.0, %v4798
    %v4827 = vmul.f32 %v4825, %v4797
    %v4828 = vmul.f32 %v4826, %v4798
    %v4829 = vmul.f32 %v4827, 1.442695
    %v4830 = vpow.pop %v4829
    %v4831 = vmul.f32 %v4828, 1.442695
    %v4832 = vpow.pop %v4831
    %v4833 = vmul.f32 %v4823, %v4830
    %v4834 = vmul.f32 %v4824, %v4832
    %v4835 = vsub.f32 1.0, %v4833
    %v4836 = vsub.f32 1.0, %v4834
    %v4837 = vmul.f32 %v4795, %v4835
    %v4838 = vmul.f32 %v4796, %v4836
    %v4839 = vadd.f32 %v4837, 1.0
    %v4840 = vadd.f32 %v4838, 1.0
    %v4841 = vmul.f32 %v4789, %v4839
    %v4842 = vmul.f32 %v4790, %v4840
    %v4843 = vstv %s4369
    %v4844 = vmul.f32 %v4843, %v4841
    %v4845 = vmul.f32 %v4843, %v4842
    %4848 = vrot.lane.b32.xlu0 %v4787, 8
    %v4849 = vpop.permute.xlu0 %4848
    %4850 = vrot.lane.b32.xlu0 %v4788, 8
    %v4851 = vpop.permute.xlu0 %4850
    %4856 = vrot.lane.b32.xlu0 %v4844, 16
    %v4857 = vpop.permute.xlu0 %4856
    %4858 = vrot.lane.b32.xlu0 %v4845, 16
    %v4859 = vpop.permute.xlu0 %4858
    %v4862 = vsel %vm871, %v4577, %v4849
    %v4863 = vsel %vm871, %v4578, %v4851
    %v4864 = vsel %vm1419, %v4862, %v4857
    %v4865 = vsel %vm1419, %v4863, %v4859
    %4866 = vst.msk [vmem:[#allocation16] sm:$0xff] %vm241, %v4864
    %4867 = vst.msk [vmem:[#allocation16 + $0x8] sm:$0xff] %vm241, %v4865
    // Predicated region
    $region78: #{mla_forward.1} parent=1 // pred_check
      _
    $region79: #{mla_forward.1} parent=1 // pred_check_branch
      %4869 = sbr.rel (0) target = $region81
    $region80: #{mla_forward.1} parent=1 // pred_region
      %s4871 = ssub.s32 256, 256
      %4872 = vsyncadd [#allocation5], %s4871
      %s4873 = sshll.u32 [#allocation16], 4
      %s4874 = int_to_ptr.vmem [resolvable:$true] %s4873
      %4879 = dma.vmem_to_hbm [thread:$0]  %s4874, 256, %s12, [#allocation5], 128, 128, 8
    $region81: #{mla_forward.1} parent=1 // pred_fallthru
      _
    // Predicated region
    $region82: #{mla_forward.1} parent=1 // pred_check
      _
    $region83: #{mla_forward.1} parent=1 // pred_check_branch
      %4881 = sbr.rel (0) target = $region85
    $region84: #{mla_forward.1} parent=1 // pred_region
      %4882 = dma.done [#allocation5], 256
    $region85: #{mla_forward.1} parent=1 // pred_fallthru
      _
    %4883 = vsyncpa [#allocation4], 1
    %4884 = vsyncpa [#allocation9], 1
    %4885 = vsyncpa [#allocation12], 1
    %4886 = vsyncpa [#allocation15], 1
    %4887 = vsyncpa [#allocation5], 1
    %4888 = vsyncpa [#allocation6], 1

</llo_original>
